<compile_context>
chip_gen: v6e
topology: v6e:2x2x1
jax: 0.10.0
libtpu: 0.0.40
codegen_flags: <defaults>
</compile_context>

<pallas_src>
import numpy as np
import jax
import jax.numpy as jnp
from jax import lax
from jax.experimental import pallas as pl
from jax.experimental.pallas import tpu as pltpu

# Logical sizes (from the PyTorch module)
H1 = 80     # lstm1 hidden
H2 = 100    # lstm2 hidden
D1 = 10     # linear1 out
D2 = 1      # linear2 out

# Lane-padded sizes used inside the kernel (128-lane vreg alignment)
H1P = 128
H2P = 128
G1 = 4 * H1P   # stacked gates for layer 1, order [i | f | g | o]
G2 = 4 * H2P   # stacked gates for layer 2


def lstm_kernel(x_ref,                        # (T, B, 1)  f32, time-major
                wih1_ref, whh1_ref, b1_ref,   # (1,G1) f32, (H1P,G1) bf16, (1,G1) f32
                wih2_hbm, whh2_hbm, b2_ref,   # (H1P,G2) bf16 HBM, (H2P,G2) bf16 HBM, (1,G2) f32
                wl1_ref, bl1_ref,             # (H2P, D1) f32, (1, D1) f32
                wl2_ref, bl2_ref,             # (D1, D2) f32, (1, D2) f32
                out_ref,                      # (B, D2) f32
                wih2_vmem, whh2_vmem,         # VMEM landing buffers for layer-2 weights
                dma_sem):                     # DMA semaphores (2,)
    T = x_ref.shape[0]
    B = x_ref.shape[1]

    # ---- Kick off the layer-2 weight DMAs immediately (hidden behind the ----
    # ---- preamble and step-0 layer-1 work; waited on just before use).   ----
    cp_wih2 = pltpu.make_async_copy(wih2_hbm, wih2_vmem, dma_sem.at[0])
    cp_whh2 = pltpu.make_async_copy(whh2_hbm, whh2_vmem, dma_sem.at[1])
    cp_wih2.start()
    cp_whh2.start()

    # Loop-invariant broadcasts, hoisted (JAX does not CSE broadcast_in_dim).
    wih1_b = jnp.broadcast_to(wih1_ref[...], (B, G1))
    b1_b = jnp.broadcast_to(b1_ref[...], (B, G1))
    b2_b = jnp.broadcast_to(b2_ref[...], (B, G2))
    whh1 = whh1_ref[...]                      # (H1P, G1) bf16, VMEM-resident

    def cell(gates, c, HP):
        # gates: (B, 4*HP), stacked [i | f | g | o] at 128-lane boundaries.
        # i, f, g feed the recurrent c_new / tanh(c_new) chain; o only gates
        # the final product, so it is activated separately (lets i|f|g drain
        # the MXU result FIFO first on v5e/v6e).
        i_f = jax.nn.sigmoid(gates[:, :2 * HP])       # one wide sigmoid (i|f)
        g = jnp.tanh(gates[:, 2 * HP:3 * HP])
        o = jax.nn.sigmoid(gates[:, 3 * HP:])
        c_new = i_f[:, HP:] * c + i_f[:, :HP] * g     # f*c + i*g
        h_new = o * jnp.tanh(c_new)
        return h_new, c_new

    h1 = jnp.zeros((B, H1P), jnp.float32)
    c1 = jnp.zeros((B, H1P), jnp.float32)
    h2 = jnp.zeros((B, H2P), jnp.float32)
    c2 = jnp.zeros((B, H2P), jnp.float32)
    h2p = b2_b    # h2 @ Whh2 + b2 with h2 == 0 (bias pre-folded, off-path)

    # Static trip-count recurrence.  A Python loop here is equivalent to
    # lax.fori_loop(..., unroll=True) (one fully unrolled block for the LLO
    # scheduler) and additionally gives static time indices and exact one-time
    # placement of the DMA waits.
    for t in range(T):
        # ---- Layer 1 ----
        # x_t is a scalar per row, so its projection is a VPU broadcast-mul
        # (independent of h1 => off the recurrent critical path); only the
        # K=128 recurrent matmul is serial.
        xproj = x_ref[t] * wih1_b + b1_b                        # (B, G1)
        g1 = xproj + jnp.dot(h1.astype(jnp.bfloat16), whh1,
                             preferred_element_type=jnp.float32)
        h1, c1 = cell(g1, c1, H1P)
        x2 = jnp.maximum(h1, 0.0)                               # F.relu between LSTMs

        if t == 0:
            # First (and only) use of the layer-2 weights: complete the DMAs
            # that have been in flight since the top of the kernel.
            cp_wih2.wait()
            cp_whh2.wait()

        # ---- Layer 2 ----
        # The recurrent projection h2 @ Whh2 + b2 was issued at the end of the
        # previous step (carried as h2p), so only relu(h1) @ Wih2 is on this
        # step's critical path.
        g2 = jnp.dot(x2.astype(jnp.bfloat16), wih2_vmem[...],
                     preferred_element_type=jnp.float32) + h2p
        h2, c2 = cell(g2, c2, H2P)

        if t + 1 < T:
            # Issue next step's recurrent projection as soon as h2 exists; it
            # overlaps with step t+1's layer-1 matmul + cell.
            h2p = jnp.dot(h2.astype(jnp.bfloat16), whh2_vmem[...],
                          preferred_element_type=jnp.float32) + b2_b

    # ---- Head: relu(lstm2 out)[:, -1, :] -> relu(linear1) -> linear2 ----
    # Padded lanes of h2 are exactly zero and padded rows of wl1 are zero, so
    # lane padding cannot leak into the head.
    h_last = jnp.maximum(h2, 0.0)
    z = jnp.dot(h_last, wl1_ref[...], preferred_element_type=jnp.float32) + bl1_ref[...]
    z = jnp.maximum(z, 0.0)
    out_ref[...] = (jnp.dot(z, wl2_ref[...], preferred_element_type=jnp.float32)
                    + bl2_ref[...])


def lstm_forward(x, kparams):
    """x: (B, T, 1) float32  ->  (B, 1) float32."""
    B, T, _ = x.shape
    x_tm = jnp.transpose(x, (1, 0, 2)).astype(jnp.float32)   # time-major (T, B, 1)
    vmem = pl.BlockSpec(memory_space=pltpu.MemorySpace.VMEM)
    hbm = pl.BlockSpec(memory_space=pl.ANY)   # layer-2 weights stay in HBM; DMA'd manually
    # kparams order: wih1, whh1, b1, wih2, whh2, b2, wl1, bl1, wl2, bl2
    in_specs = [vmem,                 # x
                vmem, vmem, vmem,     # wih1, whh1, b1
                hbm, hbm,             # wih2, whh2  (manual async copy in-kernel)
                vmem,                 # b2
                vmem, vmem, vmem, vmem]   # wl1, bl1, wl2, bl2
    # Grid-less by design at small B; only shard over batch (grid +
    # dimension_semantics=("parallel",)) when per-core batch is large enough
    # to justify duplicating the weight DMA on v7x's two TensorCores.
    return pl.pallas_call(
        lstm_kernel,
        out_shape=jax.ShapeDtypeStruct((B, D2), jnp.float32),
        in_specs=in_specs,
        out_specs=vmem,
        scratch_shapes=[
            pltpu.VMEM((H1P, G2), jnp.bfloat16),   # wih2 landing buffer
            pltpu.VMEM((H2P, G2), jnp.bfloat16),   # whh2 landing buffer
            pltpu.SemaphoreType.DMA((2,)),
        ],
    )(x_tm, *kparams)


def init_params(key):
    """Deterministic synthetic params in a reference-friendly layout:
    per-gate transposed weights stacked on a leading axis of 4, PyTorch gate
    order i, f, g, o, with b = b_ih + b_hh already combined."""
    ks = jax.random.split(key, 12)

    def u(k, shape, bound):
        return jax.random.uniform(k, shape, jnp.float32, -bound, bound)

    s1 = 1.0 / np.sqrt(H1)
    s2 = 1.0 / np.sqrt(H2)
    wih1 = u(ks[0], (4, 1, H1), s1)
    whh1 = u(ks[1], (4, H1, H1), s1)
    b1 = u(ks[2], (4, 1, H1), s1) + u(ks[3], (4, 1, H1), s1)   # b_ih + b_hh
    wih2 = u(ks[4], (4, H1, H2), s2)
    whh2 = u(ks[5], (4, H2, H2), s2)
    b2 = u(ks[6], (4, 1, H2), s2) + u(ks[7], (4, 1, H2), s2)
    wl1 = u(ks[8], (H2, D1), s2)
    bl1 = u(ks[9], (1, D1), s2)
    wl2 = u(ks[10], (D1, D2), 1.0 / np.sqrt(D1))
    bl2 = u(ks[11], (1, D2), 1.0 / np.sqrt(D1))
    return (wih1, whh1, b1, wih2, whh2, b2, wl1, bl1, wl2, bl2)


def pack_params(params):
    """Kernel layout: gates stacked [i|f|g|o] at 128-lane boundaries with zero
    lane/row padding; layer-2 input and hidden blocks kept SEPARATE (un-fused);
    recurrent weights cast to bf16 for single-pass MXU matmuls."""
    wih1, whh1, b1, wih2, whh2, b2, wl1, bl1, wl2, bl2 = params

    def stack_gates(w4, H, HP):
        # w4: (4, in, H) in PyTorch gate order i, f, g, o -> (in, 4*HP),
        # each gate padded to a 128-lane boundary (padding columns are zero).
        pad = lambda a: jnp.pad(a, ((0, 0), (0, HP - H)))
        return jnp.concatenate([pad(w4[0]), pad(w4[1]), pad(w4[2]), pad(w4[3])],
                               axis=1)

    def pad_rows(w, RP):
        return jnp.pad(w, ((0, RP - w.shape[0]), (0, 0)))

    wih1_k = stack_gates(wih1, H1, H1P)                                      # (1, G1) f32
    whh1_k = pad_rows(stack_gates(whh1, H1, H1P), H1P).astype(jnp.bfloat16)  # (H1P, G1)
    b1_k = stack_gates(b1, H1, H1P)                                          # (1, G1) f32
    wih2_k = pad_rows(stack_gates(wih2, H2, H2P), H1P).astype(jnp.bfloat16)  # (H1P, G2)
    whh2_k = pad_rows(stack_gates(whh2, H2, H2P), H2P).astype(jnp.bfloat16)  # (H2P, G2)
    b2_k = stack_gates(b2, H2, H2P)                                          # (1, G2) f32
    wl1_k = pad_rows(wl1, H2P)                                               # (H2P, D1) f32
    return (wih1_k, whh1_k, b1_k, wih2_k, whh2_k, b2_k, wl1_k, bl1, wl2, bl2)


def lstm_ref(x, params):
    """Pure-JAX reference mirroring the PyTorch forward (unpadded f32 params)."""
    wih1, whh1, b1, wih2, whh2, b2, wl1, bl1, wl2, bl2 = params
    B = x.shape[0]

    def run_layer(seq, wih, whh, b, H):
        def step(carry, xt):
            h, c = carry
            i = jax.nn.sigmoid(xt @ wih[0] + h @ whh[0] + b[0])
            f = jax.nn.sigmoid(xt @ wih[1] + h @ whh[1] + b[1])
            g = jnp.tanh(xt @ wih[2] + h @ whh[2] + b[2])
            o = jax.nn.sigmoid(xt @ wih[3] + h @ whh[3] + b[3])
            c = f * c + i * g
            h = o * jnp.tanh(c)
            return (h, c), h

        init = (jnp.zeros((B, H), jnp.float32), jnp.zeros((B, H), jnp.float32))
        _, hs = lax.scan(step, init, jnp.transpose(seq, (1, 0, 2)))
        return jnp.transpose(hs, (1, 0, 2))

    y = run_layer(x, wih1, whh1, b1, H1)
    y = jnp.maximum(y, 0.0)
    y = run_layer(y, wih2, whh2, b2, H2)
    y = jnp.maximum(y, 0.0)
    y = y[:, -1, :]
    y = jnp.maximum(y @ wl1 + bl1, 0.0)
    return y @ wl2 + bl2


if __name__ == "__main__":
    key = jax.random.PRNGKey(0)
    k_x, k_p = jax.random.split(key)
    B, T = 2, 8
    x = jax.random.normal(k_x, (B, T, 1), jnp.float32)
    params = init_params(k_p)
    kparams = pack_params(params)

    out = jax.block_until_ready(lstm_forward(x, kparams))
    ref = jax.block_until_ready(lstm_ref(x, params))

    assert out.shape == (B, D2), out.shape
    # Both the kernel (explicit bf16 recurrent weights) and the f32 reference
    # (TPU DEFAULT-precision dots = bf16 MXU passes) round matmul operands to
    # bf16; the remaining difference comes from the padded/fused gate
    # decomposition accumulated over the 8-step recurrence, so compare at
    # bf16-class tolerance.
    np.testing.assert_allclose(np.asarray(out), np.asarray(ref), rtol=2e-3, atol=2e-3)
    print("KERNEL_OK")
</pallas_src>

<mosaic_0001>
module attributes {stable_mosaic.version = 11 : i64} {
  func.func @lstm_kernel(%arg0: memref<8x2x1xf32, #tpu.memory_space<vmem>>, %arg1: memref<1x512xf32, #tpu.memory_space<vmem>>, %arg2: memref<128x512xbf16, #tpu.memory_space<vmem>>, %arg3: memref<1x512xf32, #tpu.memory_space<vmem>>, %arg4: memref<128x512xbf16, #tpu.memory_space<any>>, %arg5: memref<128x512xbf16, #tpu.memory_space<any>>, %arg6: memref<1x512xf32, #tpu.memory_space<vmem>>, %arg7: memref<128x10xf32, #tpu.memory_space<vmem>>, %arg8: memref<1x10xf32, #tpu.memory_space<vmem>>, %arg9: memref<10x1xf32, #tpu.memory_space<vmem>>, %arg10: memref<1x1xf32, #tpu.memory_space<vmem>>, %arg11: memref<2x1xf32, #tpu.memory_space<vmem>>, %arg12: memref<128x512xbf16, #tpu.memory_space<vmem>>, %arg13: memref<128x512xbf16, #tpu.memory_space<vmem>>, %arg14: memref<2x!tpu.dma_semaphore, #tpu.memory_space<semaphore_mem>>) attributes {dimension_semantics = [], scalar_prefetch = 0 : i64, scratch_operands = 3 : i64, tpu.core_type = #tpu.core_type<tc>} {
    %c0_i32 = arith.constant 0 : i32
    %0 = tpu.memref_slice %arg14[%c0_i32] : memref<2x!tpu.dma_semaphore, #tpu.memory_space<semaphore_mem>> -> memref<1x!tpu.dma_semaphore, #tpu.memory_space<semaphore_mem>>
    %1 = tpu.memref_squeeze %0 : memref<1x!tpu.dma_semaphore, #tpu.memory_space<semaphore_mem>> -> memref<!tpu.dma_semaphore, #tpu.memory_space<semaphore_mem>>
    tpu.enqueue_dma source(%arg4 : memref<128x512xbf16, #tpu.memory_space<any>>) target(%arg12 : memref<128x512xbf16, #tpu.memory_space<vmem>>) target_semaphore(%1 : memref<!tpu.dma_semaphore, #tpu.memory_space<semaphore_mem>>)
    %c1_i32 = arith.constant 1 : i32
    %2 = tpu.memref_slice %arg14[%c1_i32] : memref<2x!tpu.dma_semaphore, #tpu.memory_space<semaphore_mem>> -> memref<1x!tpu.dma_semaphore, #tpu.memory_space<semaphore_mem>>
    %3 = tpu.memref_squeeze %2 : memref<1x!tpu.dma_semaphore, #tpu.memory_space<semaphore_mem>> -> memref<!tpu.dma_semaphore, #tpu.memory_space<semaphore_mem>>
    tpu.enqueue_dma source(%arg5 : memref<128x512xbf16, #tpu.memory_space<any>>) target(%arg13 : memref<128x512xbf16, #tpu.memory_space<vmem>>) target_semaphore(%3 : memref<!tpu.dma_semaphore, #tpu.memory_space<semaphore_mem>>)
    %c0 = arith.constant 0 : index
    %c0_0 = arith.constant 0 : index
    %4 = vector.load %arg1[%c0, %c0_0] : memref<1x512xf32, #tpu.memory_space<vmem>>, vector<1x512xf32>
    %5 = vector.shape_cast %4 : vector<1x512xf32> to vector<1x512xf32>
    %6 = vector.broadcast %5 : vector<1x512xf32> to vector<2x512xf32>
    %c0_1 = arith.constant 0 : index
    %c0_2 = arith.constant 0 : index
    %7 = vector.load %arg3[%c0_1, %c0_2] : memref<1x512xf32, #tpu.memory_space<vmem>>, vector<1x512xf32>
    %8 = vector.shape_cast %7 : vector<1x512xf32> to vector<1x512xf32>
    %9 = vector.broadcast %8 : vector<1x512xf32> to vector<2x512xf32>
    %c0_3 = arith.constant 0 : index
    %c0_4 = arith.constant 0 : index
    %10 = vector.load %arg6[%c0_3, %c0_4] : memref<1x512xf32, #tpu.memory_space<vmem>>, vector<1x512xf32>
    %11 = vector.shape_cast %10 : vector<1x512xf32> to vector<1x512xf32>
    %12 = vector.broadcast %11 : vector<1x512xf32> to vector<2x512xf32>
    %c0_5 = arith.constant 0 : index
    %c0_6 = arith.constant 0 : index
    %13 = vector.load %arg2[%c0_5, %c0_6] : memref<128x512xbf16, #tpu.memory_space<vmem>>, vector<128x512xbf16>
    %cst = arith.constant 0.000000e+00 : f32
    %14 = vector.broadcast %cst : f32 to vector<2x128xf32>
    %cst_7 = arith.constant 0.000000e+00 : f32
    %15 = vector.broadcast %cst_7 : f32 to vector<2x128xf32>
    %cst_8 = arith.constant 0.000000e+00 : f32
    %16 = vector.broadcast %cst_8 : f32 to vector<2x128xf32>
    %c0_9 = arith.constant 0 : index
    %c0_10 = arith.constant 0 : index
    %c0_11 = arith.constant 0 : index
    %17 = vector.load %arg0[%c0_9, %c0_10, %c0_11] : memref<8x2x1xf32, #tpu.memory_space<vmem>>, vector<1x2x1xf32>
    %18 = vector.shape_cast %17 : vector<1x2x1xf32> to vector<2x1xf32>
    %19 = vector.broadcast %18 : vector<2x1xf32> to vector<2x512xf32>
    %20 = arith.mulf %19, %6 : vector<2x512xf32>
    %21 = arith.addf %20, %9 : vector<2x512xf32>
    %22 = arith.truncf %14 : vector<2x128xf32> to vector<2x128xbf16>
    %cst_12 = arith.constant dense<0.000000e+00> : vector<2x512xf32>
    %23 = tpu.matmul %22, %13, %cst_12 {dimension_numbers = #tpu.dot_dimension_numbers<[1], [0], [0], [1], [0, 0, 1, 1], [], []>} : vector<2x128xbf16>, vector<128x512xbf16>, vector<2x512xf32> -> vector<2x512xf32>
    %24 = arith.addf %21, %23 : vector<2x512xf32>
    %25 = vector.extract_strided_slice %24 {offsets = [0, 0], sizes = [2, 256], strides = [1, 1]} : vector<2x512xf32> to vector<2x256xf32>
    %26 = arith.negf %25 : vector<2x256xf32>
    %27 = math.exp %26 : vector<2x256xf32>
    %cst_13 = arith.constant 1.000000e+00 : f32
    %28 = vector.broadcast %cst_13 : f32 to vector<2x256xf32>
    %29 = arith.addf %28, %27 : vector<2x256xf32>
    %30 = arith.divf %28, %29 : vector<2x256xf32>
    %31 = vector.extract_strided_slice %24 {offsets = [0, 256], sizes = [2, 128], strides = [1, 1]} : vector<2x512xf32> to vector<2x128xf32>
    %32 = math.tanh %31 : vector<2x128xf32>
    %33 = vector.extract_strided_slice %24 {offsets = [0, 384], sizes = [2, 128], strides = [1, 1]} : vector<2x512xf32> to vector<2x128xf32>
    %34 = arith.negf %33 : vector<2x128xf32>
    %35 = math.exp %34 : vector<2x128xf32>
    %cst_14 = arith.constant 1.000000e+00 : f32
    %36 = vector.broadcast %cst_14 : f32 to vector<2x128xf32>
    %37 = arith.addf %36, %35 : vector<2x128xf32>
    %38 = arith.divf %36, %37 : vector<2x128xf32>
    %39 = vector.extract_strided_slice %30 {offsets = [0, 128], sizes = [2, 128], strides = [1, 1]} : vector<2x256xf32> to vector<2x128xf32>
    %40 = arith.mulf %39, %15 : vector<2x128xf32>
    %41 = vector.extract_strided_slice %30 {offsets = [0, 0], sizes = [2, 128], strides = [1, 1]} : vector<2x256xf32> to vector<2x128xf32>
    %42 = arith.mulf %41, %32 : vector<2x128xf32>
    %43 = arith.addf %40, %42 : vector<2x128xf32>
    %44 = math.tanh %43 : vector<2x128xf32>
    %45 = arith.mulf %38, %44 : vector<2x128xf32>
    %cst_15 = arith.constant 0.000000e+00 : f32
    %46 = vector.broadcast %cst_15 : f32 to vector<2x128xf32>
    %47 = arith.maximumf %45, %46 : vector<2x128xf32>
    %c0_i32_16 = arith.constant 0 : i32
    %48 = tpu.memref_slice %arg14[%c0_i32_16] : memref<2x!tpu.dma_semaphore, #tpu.memory_space<semaphore_mem>> -> memref<1x!tpu.dma_semaphore, #tpu.memory_space<semaphore_mem>>
    %49 = tpu.memref_squeeze %48 : memref<1x!tpu.dma_semaphore, #tpu.memory_space<semaphore_mem>> -> memref<!tpu.dma_semaphore, #tpu.memory_space<semaphore_mem>>
    tpu.wait_dma2 semaphore(%49 : memref<!tpu.dma_semaphore, #tpu.memory_space<semaphore_mem>>) src(%arg4 : memref<128x512xbf16, #tpu.memory_space<any>>) dst(%arg12 : memref<128x512xbf16, #tpu.memory_space<vmem>>)
    %c1_i32_17 = arith.constant 1 : i32
    %50 = tpu.memref_slice %arg14[%c1_i32_17] : memref<2x!tpu.dma_semaphore, #tpu.memory_space<semaphore_mem>> -> memref<1x!tpu.dma_semaphore, #tpu.memory_space<semaphore_mem>>
    %51 = tpu.memref_squeeze %50 : memref<1x!tpu.dma_semaphore, #tpu.memory_space<semaphore_mem>> -> memref<!tpu.dma_semaphore, #tpu.memory_space<semaphore_mem>>
    tpu.wait_dma2 semaphore(%51 : memref<!tpu.dma_semaphore, #tpu.memory_space<semaphore_mem>>) src(%arg5 : memref<128x512xbf16, #tpu.memory_space<any>>) dst(%arg13 : memref<128x512xbf16, #tpu.memory_space<vmem>>)
    %52 = arith.truncf %47 : vector<2x128xf32> to vector<2x128xbf16>
    %c0_18 = arith.constant 0 : index
    %c0_19 = arith.constant 0 : index
    %53 = vector.load %arg12[%c0_18, %c0_19] : memref<128x512xbf16, #tpu.memory_space<vmem>>, vector<128x512xbf16>
    %cst_20 = arith.constant dense<0.000000e+00> : vector<2x512xf32>
    %54 = tpu.matmul %52, %53, %cst_20 {dimension_numbers = #tpu.dot_dimension_numbers<[1], [0], [0], [1], [0, 0, 1, 1], [], []>} : vector<2x128xbf16>, vector<128x512xbf16>, vector<2x512xf32> -> vector<2x512xf32>
    %55 = arith.addf %54, %12 : vector<2x512xf32>
    %56 = vector.extract_strided_slice %55 {offsets = [0, 0], sizes = [2, 256], strides = [1, 1]} : vector<2x512xf32> to vector<2x256xf32>
    %57 = arith.negf %56 : vector<2x256xf32>
    %58 = math.exp %57 : vector<2x256xf32>
    %cst_21 = arith.constant 1.000000e+00 : f32
    %59 = vector.broadcast %cst_21 : f32 to vector<2x256xf32>
    %60 = arith.addf %59, %58 : vector<2x256xf32>
    %61 = arith.divf %59, %60 : vector<2x256xf32>
    %62 = vector.extract_strided_slice %55 {offsets = [0, 256], sizes = [2, 128], strides = [1, 1]} : vector<2x512xf32> to vector<2x128xf32>
    %63 = math.tanh %62 : vector<2x128xf32>
    %64 = vector.extract_strided_slice %55 {offsets = [0, 384], sizes = [2, 128], strides = [1, 1]} : vector<2x512xf32> to vector<2x128xf32>
    %65 = arith.negf %64 : vector<2x128xf32>
    %66 = math.exp %65 : vector<2x128xf32>
    %cst_22 = arith.constant 1.000000e+00 : f32
    %67 = vector.broadcast %cst_22 : f32 to vector<2x128xf32>
    %68 = arith.addf %67, %66 : vector<2x128xf32>
    %69 = arith.divf %67, %68 : vector<2x128xf32>
    %70 = vector.extract_strided_slice %61 {offsets = [0, 128], sizes = [2, 128], strides = [1, 1]} : vector<2x256xf32> to vector<2x128xf32>
    %71 = arith.mulf %70, %16 : vector<2x128xf32>
    %72 = vector.extract_strided_slice %61 {offsets = [0, 0], sizes = [2, 128], strides = [1, 1]} : vector<2x256xf32> to vector<2x128xf32>
    %73 = arith.mulf %72, %63 : vector<2x128xf32>
    %74 = arith.addf %71, %73 : vector<2x128xf32>
    %75 = math.tanh %74 : vector<2x128xf32>
    %76 = arith.mulf %69, %75 : vector<2x128xf32>
    %77 = arith.truncf %76 : vector<2x128xf32> to vector<2x128xbf16>
    %c0_23 = arith.constant 0 : index
    %c0_24 = arith.constant 0 : index
    %78 = vector.load %arg13[%c0_23, %c0_24] : memref<128x512xbf16, #tpu.memory_space<vmem>>, vector<128x512xbf16>
    %cst_25 = arith.constant dense<0.000000e+00> : vector<2x512xf32>
    %79 = tpu.matmul %77, %78, %cst_25 {dimension_numbers = #tpu.dot_dimension_numbers<[1], [0], [0], [1], [0, 0, 1, 1], [], []>} : vector<2x128xbf16>, vector<128x512xbf16>, vector<2x512xf32> -> vector<2x512xf32>
    %80 = arith.addf %79, %12 : vector<2x512xf32>
    %c1 = arith.constant 1 : index
    %c0_26 = arith.constant 0 : index
    %c0_27 = arith.constant 0 : index
    %81 = vector.load %arg0[%c1, %c0_26, %c0_27] : memref<8x2x1xf32, #tpu.memory_space<vmem>>, vector<1x2x1xf32>
    %82 = vector.shape_cast %81 : vector<1x2x1xf32> to vector<2x1xf32>
    %83 = vector.broadcast %82 : vector<2x1xf32> to vector<2x512xf32>
    %84 = arith.mulf %83, %6 : vector<2x512xf32>
    %85 = arith.addf %84, %9 : vector<2x512xf32>
    %86 = arith.truncf %45 : vector<2x128xf32> to vector<2x128xbf16>
    %cst_28 = arith.constant dense<0.000000e+00> : vector<2x512xf32>
    %87 = tpu.matmul %86, %13, %cst_28 {dimension_numbers = #tpu.dot_dimension_numbers<[1], [0], [0], [1], [0, 0, 1, 1], [], []>} : vector<2x128xbf16>, vector<128x512xbf16>, vector<2x512xf32> -> vector<2x512xf32>
    %88 = arith.addf %85, %87 : vector<2x512xf32>
    %89 = vector.extract_strided_slice %88 {offsets = [0, 0], sizes = [2, 256], strides = [1, 1]} : vector<2x512xf32> to vector<2x256xf32>
    %90 = arith.negf %89 : vector<2x256xf32>
    %91 = math.exp %90 : vector<2x256xf32>
    %cst_29 = arith.constant 1.000000e+00 : f32
    %92 = vector.broadcast %cst_29 : f32 to vector<2x256xf32>
    %93 = arith.addf %92, %91 : vector<2x256xf32>
    %94 = arith.divf %92, %93 : vector<2x256xf32>
    %95 = vector.extract_strided_slice %88 {offsets = [0, 256], sizes = [2, 128], strides = [1, 1]} : vector<2x512xf32> to vector<2x128xf32>
    %96 = math.tanh %95 : vector<2x128xf32>
    %97 = vector.extract_strided_slice %88 {offsets = [0, 384], sizes = [2, 128], strides = [1, 1]} : vector<2x512xf32> to vector<2x128xf32>
    %98 = arith.negf %97 : vector<2x128xf32>
    %99 = math.exp %98 : vector<2x128xf32>
    %cst_30 = arith.constant 1.000000e+00 : f32
    %100 = vector.broadcast %cst_30 : f32 to vector<2x128xf32>
    %101 = arith.addf %100, %99 : vector<2x128xf32>
    %102 = arith.divf %100, %101 : vector<2x128xf32>
    %103 = vector.extract_strided_slice %94 {offsets = [0, 128], sizes = [2, 128], strides = [1, 1]} : vector<2x256xf32> to vector<2x128xf32>
    %104 = arith.mulf %103, %43 : vector<2x128xf32>
    %105 = vector.extract_strided_slice %94 {offsets = [0, 0], sizes = [2, 128], strides = [1, 1]} : vector<2x256xf32> to vector<2x128xf32>
    %106 = arith.mulf %105, %96 : vector<2x128xf32>
    %107 = arith.addf %104, %106 : vector<2x128xf32>
    %108 = math.tanh %107 : vector<2x128xf32>
    %109 = arith.mulf %102, %108 : vector<2x128xf32>
    %cst_31 = arith.constant 0.000000e+00 : f32
    %110 = vector.broadcast %cst_31 : f32 to vector<2x128xf32>
    %111 = arith.maximumf %109, %110 : vector<2x128xf32>
    %112 = arith.truncf %111 : vector<2x128xf32> to vector<2x128xbf16>
    %c0_32 = arith.constant 0 : index
    %c0_33 = arith.constant 0 : index
    %113 = vector.load %arg12[%c0_32, %c0_33] : memref<128x512xbf16, #tpu.memory_space<vmem>>, vector<128x512xbf16>
    %cst_34 = arith.constant dense<0.000000e+00> : vector<2x512xf32>
    %114 = tpu.matmul %112, %113, %cst_34 {dimension_numbers = #tpu.dot_dimension_numbers<[1], [0], [0], [1], [0, 0, 1, 1], [], []>} : vector<2x128xbf16>, vector<128x512xbf16>, vector<2x512xf32> -> vector<2x512xf32>
    %115 = arith.addf %114, %80 : vector<2x512xf32>
    %116 = vector.extract_strided_slice %115 {offsets = [0, 0], sizes = [2, 256], strides = [1, 1]} : vector<2x512xf32> to vector<2x256xf32>
    %117 = arith.negf %116 : vector<2x256xf32>
    %118 = math.exp %117 : vector<2x256xf32>
    %cst_35 = arith.constant 1.000000e+00 : f32
    %119 = vector.broadcast %cst_35 : f32 to vector<2x256xf32>
    %120 = arith.addf %119, %118 : vector<2x256xf32>
    %121 = arith.divf %119, %120 : vector<2x256xf32>
    %122 = vector.extract_strided_slice %115 {offsets = [0, 256], sizes = [2, 128], strides = [1, 1]} : vector<2x512xf32> to vector<2x128xf32>
    %123 = math.tanh %122 : vector<2x128xf32>
    %124 = vector.extract_strided_slice %115 {offsets = [0, 384], sizes = [2, 128], strides = [1, 1]} : vector<2x512xf32> to vector<2x128xf32>
    %125 = arith.negf %124 : vector<2x128xf32>
    %126 = math.exp %125 : vector<2x128xf32>
    %cst_36 = arith.constant 1.000000e+00 : f32
    %127 = vector.broadcast %cst_36 : f32 to vector<2x128xf32>
    %128 = arith.addf %127, %126 : vector<2x128xf32>
    %129 = arith.divf %127, %128 : vector<2x128xf32>
    %130 = vector.extract_strided_slice %121 {offsets = [0, 128], sizes = [2, 128], strides = [1, 1]} : vector<2x256xf32> to vector<2x128xf32>
    %131 = arith.mulf %130, %74 : vector<2x128xf32>
    %132 = vector.extract_strided_slice %121 {offsets = [0, 0], sizes = [2, 128], strides = [1, 1]} : vector<2x256xf32> to vector<2x128xf32>
    %133 = arith.mulf %132, %123 : vector<2x128xf32>
    %134 = arith.addf %131, %133 : vector<2x128xf32>
    %135 = math.tanh %134 : vector<2x128xf32>
    %136 = arith.mulf %129, %135 : vector<2x128xf32>
    %137 = arith.truncf %136 : vector<2x128xf32> to vector<2x128xbf16>
    %c0_37 = arith.constant 0 : index
    %c0_38 = arith.constant 0 : index
    %138 = vector.load %arg13[%c0_37, %c0_38] : memref<128x512xbf16, #tpu.memory_space<vmem>>, vector<128x512xbf16>
    %cst_39 = arith.constant dense<0.000000e+00> : vector<2x512xf32>
    %139 = tpu.matmul %137, %138, %cst_39 {dimension_numbers = #tpu.dot_dimension_numbers<[1], [0], [0], [1], [0, 0, 1, 1], [], []>} : vector<2x128xbf16>, vector<128x512xbf16>, vector<2x512xf32> -> vector<2x512xf32>
    %140 = arith.addf %139, %12 : vector<2x512xf32>
    %c2 = arith.constant 2 : index
    %c0_40 = arith.constant 0 : index
    %c0_41 = arith.constant 0 : index
    %141 = vector.load %arg0[%c2, %c0_40, %c0_41] : memref<8x2x1xf32, #tpu.memory_space<vmem>>, vector<1x2x1xf32>
    %142 = vector.shape_cast %141 : vector<1x2x1xf32> to vector<2x1xf32>
    %143 = vector.broadcast %142 : vector<2x1xf32> to vector<2x512xf32>
    %144 = arith.mulf %143, %6 : vector<2x512xf32>
    %145 = arith.addf %144, %9 : vector<2x512xf32>
    %146 = arith.truncf %109 : vector<2x128xf32> to vector<2x128xbf16>
    %cst_42 = arith.constant dense<0.000000e+00> : vector<2x512xf32>
    %147 = tpu.matmul %146, %13, %cst_42 {dimension_numbers = #tpu.dot_dimension_numbers<[1], [0], [0], [1], [0, 0, 1, 1], [], []>} : vector<2x128xbf16>, vector<128x512xbf16>, vector<2x512xf32> -> vector<2x512xf32>
    %148 = arith.addf %145, %147 : vector<2x512xf32>
    %149 = vector.extract_strided_slice %148 {offsets = [0, 0], sizes = [2, 256], strides = [1, 1]} : vector<2x512xf32> to vector<2x256xf32>
    %150 = arith.negf %149 : vector<2x256xf32>
    %151 = math.exp %150 : vector<2x256xf32>
    %cst_43 = arith.constant 1.000000e+00 : f32
    %152 = vector.broadcast %cst_43 : f32 to vector<2x256xf32>
    %153 = arith.addf %152, %151 : vector<2x256xf32>
    %154 = arith.divf %152, %153 : vector<2x256xf32>
    %155 = vector.extract_strided_slice %148 {offsets = [0, 256], sizes = [2, 128], strides = [1, 1]} : vector<2x512xf32> to vector<2x128xf32>
    %156 = math.tanh %155 : vector<2x128xf32>
    %157 = vector.extract_strided_slice %148 {offsets = [0, 384], sizes = [2, 128], strides = [1, 1]} : vector<2x512xf32> to vector<2x128xf32>
    %158 = arith.negf %157 : vector<2x128xf32>
    %159 = math.exp %158 : vector<2x128xf32>
    %cst_44 = arith.constant 1.000000e+00 : f32
    %160 = vector.broadcast %cst_44 : f32 to vector<2x128xf32>
    %161 = arith.addf %160, %159 : vector<2x128xf32>
    %162 = arith.divf %160, %161 : vector<2x128xf32>
    %163 = vector.extract_strided_slice %154 {offsets = [0, 128], sizes = [2, 128], strides = [1, 1]} : vector<2x256xf32> to vector<2x128xf32>
    %164 = arith.mulf %163, %107 : vector<2x128xf32>
    %165 = vector.extract_strided_slice %154 {offsets = [0, 0], sizes = [2, 128], strides = [1, 1]} : vector<2x256xf32> to vector<2x128xf32>
    %166 = arith.mulf %165, %156 : vector<2x128xf32>
    %167 = arith.addf %164, %166 : vector<2x128xf32>
    %168 = math.tanh %167 : vector<2x128xf32>
    %169 = arith.mulf %162, %168 : vector<2x128xf32>
    %cst_45 = arith.constant 0.000000e+00 : f32
    %170 = vector.broadcast %cst_45 : f32 to vector<2x128xf32>
    %171 = arith.maximumf %169, %170 : vector<2x128xf32>
    %172 = arith.truncf %171 : vector<2x128xf32> to vector<2x128xbf16>
    %c0_46 = arith.constant 0 : index
    %c0_47 = arith.constant 0 : index
    %173 = vector.load %arg12[%c0_46, %c0_47] : memref<128x512xbf16, #tpu.memory_space<vmem>>, vector<128x512xbf16>
    %cst_48 = arith.constant dense<0.000000e+00> : vector<2x512xf32>
    %174 = tpu.matmul %172, %173, %cst_48 {dimension_numbers = #tpu.dot_dimension_numbers<[1], [0], [0], [1], [0, 0, 1, 1], [], []>} : vector<2x128xbf16>, vector<128x512xbf16>, vector<2x512xf32> -> vector<2x512xf32>
    %175 = arith.addf %174, %140 : vector<2x512xf32>
    %176 = vector.extract_strided_slice %175 {offsets = [0, 0], sizes = [2, 256], strides = [1, 1]} : vector<2x512xf32> to vector<2x256xf32>
    %177 = arith.negf %176 : vector<2x256xf32>
    %178 = math.exp %177 : vector<2x256xf32>
    %cst_49 = arith.constant 1.000000e+00 : f32
    %179 = vector.broadcast %cst_49 : f32 to vector<2x256xf32>
    %180 = arith.addf %179, %178 : vector<2x256xf32>
    %181 = arith.divf %179, %180 : vector<2x256xf32>
    %182 = vector.extract_strided_slice %175 {offsets = [0, 256], sizes = [2, 128], strides = [1, 1]} : vector<2x512xf32> to vector<2x128xf32>
    %183 = math.tanh %182 : vector<2x128xf32>
    %184 = vector.extract_strided_slice %175 {offsets = [0, 384], sizes = [2, 128], strides = [1, 1]} : vector<2x512xf32> to vector<2x128xf32>
    %185 = arith.negf %184 : vector<2x128xf32>
    %186 = math.exp %185 : vector<2x128xf32>
    %cst_50 = arith.constant 1.000000e+00 : f32
    %187 = vector.broadcast %cst_50 : f32 to vector<2x128xf32>
    %188 = arith.addf %187, %186 : vector<2x128xf32>
    %189 = arith.divf %187, %188 : vector<2x128xf32>
    %190 = vector.extract_strided_slice %181 {offsets = [0, 128], sizes = [2, 128], strides = [1, 1]} : vector<2x256xf32> to vector<2x128xf32>
    %191 = arith.mulf %190, %134 : vector<2x128xf32>
    %192 = vector.extract_strided_slice %181 {offsets = [0, 0], sizes = [2, 128], strides = [1, 1]} : vector<2x256xf32> to vector<2x128xf32>
    %193 = arith.mulf %192, %183 : vector<2x128xf32>
    %194 = arith.addf %191, %193 : vector<2x128xf32>
    %195 = math.tanh %194 : vector<2x128xf32>
    %196 = arith.mulf %189, %195 : vector<2x128xf32>
    %197 = arith.truncf %196 : vector<2x128xf32> to vector<2x128xbf16>
    %c0_51 = arith.constant 0 : index
    %c0_52 = arith.constant 0 : index
    %198 = vector.load %arg13[%c0_51, %c0_52] : memref<128x512xbf16, #tpu.memory_space<vmem>>, vector<128x512xbf16>
    %cst_53 = arith.constant dense<0.000000e+00> : vector<2x512xf32>
    %199 = tpu.matmul %197, %198, %cst_53 {dimension_numbers = #tpu.dot_dimension_numbers<[1], [0], [0], [1], [0, 0, 1, 1], [], []>} : vector<2x128xbf16>, vector<128x512xbf16>, vector<2x512xf32> -> vector<2x512xf32>
    %200 = arith.addf %199, %12 : vector<2x512xf32>
    %c3 = arith.constant 3 : index
    %c0_54 = arith.constant 0 : index
    %c0_55 = arith.constant 0 : index
    %201 = vector.load %arg0[%c3, %c0_54, %c0_55] : memref<8x2x1xf32, #tpu.memory_space<vmem>>, vector<1x2x1xf32>
    %202 = vector.shape_cast %201 : vector<1x2x1xf32> to vector<2x1xf32>
    %203 = vector.broadcast %202 : vector<2x1xf32> to vector<2x512xf32>
    %204 = arith.mulf %203, %6 : vector<2x512xf32>
    %205 = arith.addf %204, %9 : vector<2x512xf32>
    %206 = arith.truncf %169 : vector<2x128xf32> to vector<2x128xbf16>
    %cst_56 = arith.constant dense<0.000000e+00> : vector<2x512xf32>
    %207 = tpu.matmul %206, %13, %cst_56 {dimension_numbers = #tpu.dot_dimension_numbers<[1], [0], [0], [1], [0, 0, 1, 1], [], []>} : vector<2x128xbf16>, vector<128x512xbf16>, vector<2x512xf32> -> vector<2x512xf32>
    %208 = arith.addf %205, %207 : vector<2x512xf32>
    %209 = vector.extract_strided_slice %208 {offsets = [0, 0], sizes = [2, 256], strides = [1, 1]} : vector<2x512xf32> to vector<2x256xf32>
    %210 = arith.negf %209 : vector<2x256xf32>
    %211 = math.exp %210 : vector<2x256xf32>
    %cst_57 = arith.constant 1.000000e+00 : f32
    %212 = vector.broadcast %cst_57 : f32 to vector<2x256xf32>
    %213 = arith.addf %212, %211 : vector<2x256xf32>
    %214 = arith.divf %212, %213 : vector<2x256xf32>
    %215 = vector.extract_strided_slice %208 {offsets = [0, 256], sizes = [2, 128], strides = [1, 1]} : vector<2x512xf32> to vector<2x128xf32>
    %216 = math.tanh %215 : vector<2x128xf32>
    %217 = vector.extract_strided_slice %208 {offsets = [0, 384], sizes = [2, 128], strides = [1, 1]} : vector<2x512xf32> to vector<2x128xf32>
    %218 = arith.negf %217 : vector<2x128xf32>
    %219 = math.exp %218 : vector<2x128xf32>
    %cst_58 = arith.constant 1.000000e+00 : f32
    %220 = vector.broadcast %cst_58 : f32 to vector<2x128xf32>
    %221 = arith.addf %220, %219 : vector<2x128xf32>
    %222 = arith.divf %220, %221 : vector<2x128xf32>
    %223 = vector.extract_strided_slice %214 {offsets = [0, 128], sizes = [2, 128], strides = [1, 1]} : vector<2x256xf32> to vector<2x128xf32>
    %224 = arith.mulf %223, %167 : vector<2x128xf32>
    %225 = vector.extract_strided_slice %214 {offsets = [0, 0], sizes = [2, 128], strides = [1, 1]} : vector<2x256xf32> to vector<2x128xf32>
    %226 = arith.mulf %225, %216 : vector<2x128xf32>
    %227 = arith.addf %224, %226 : vector<2x128xf32>
    %228 = math.tanh %227 : vector<2x128xf32>
    %229 = arith.mulf %222, %228 : vector<2x128xf32>
    %cst_59 = arith.constant 0.000000e+00 : f32
    %230 = vector.broadcast %cst_59 : f32 to vector<2x128xf32>
    %231 = arith.maximumf %229, %230 : vector<2x128xf32>
    %232 = arith.truncf %231 : vector<2x128xf32> to vector<2x128xbf16>
    %c0_60 = arith.constant 0 : index
    %c0_61 = arith.constant 0 : index
    %233 = vector.load %arg12[%c0_60, %c0_61] : memref<128x512xbf16, #tpu.memory_space<vmem>>, vector<128x512xbf16>
    %cst_62 = arith.constant dense<0.000000e+00> : vector<2x512xf32>
    %234 = tpu.matmul %232, %233, %cst_62 {dimension_numbers = #tpu.dot_dimension_numbers<[1], [0], [0], [1], [0, 0, 1, 1], [], []>} : vector<2x128xbf16>, vector<128x512xbf16>, vector<2x512xf32> -> vector<2x512xf32>
    %235 = arith.addf %234, %200 : vector<2x512xf32>
    %236 = vector.extract_strided_slice %235 {offsets = [0, 0], sizes = [2, 256], strides = [1, 1]} : vector<2x512xf32> to vector<2x256xf32>
    %237 = arith.negf %236 : vector<2x256xf32>
    %238 = math.exp %237 : vector<2x256xf32>
    %cst_63 = arith.constant 1.000000e+00 : f32
    %239 = vector.broadcast %cst_63 : f32 to vector<2x256xf32>
    %240 = arith.addf %239, %238 : vector<2x256xf32>
    %241 = arith.divf %239, %240 : vector<2x256xf32>
    %242 = vector.extract_strided_slice %235 {offsets = [0, 256], sizes = [2, 128], strides = [1, 1]} : vector<2x512xf32> to vector<2x128xf32>
    %243 = math.tanh %242 : vector<2x128xf32>
    %244 = vector.extract_strided_slice %235 {offsets = [0, 384], sizes = [2, 128], strides = [1, 1]} : vector<2x512xf32> to vector<2x128xf32>
    %245 = arith.negf %244 : vector<2x128xf32>
    %246 = math.exp %245 : vector<2x128xf32>
    %cst_64 = arith.constant 1.000000e+00 : f32
    %247 = vector.broadcast %cst_64 : f32 to vector<2x128xf32>
    %248 = arith.addf %247, %246 : vector<2x128xf32>
    %249 = arith.divf %247, %248 : vector<2x128xf32>
    %250 = vector.extract_strided_slice %241 {offsets = [0, 128], sizes = [2, 128], strides = [1, 1]} : vector<2x256xf32> to vector<2x128xf32>
    %251 = arith.mulf %250, %194 : vector<2x128xf32>
    %252 = vector.extract_strided_slice %241 {offsets = [0, 0], sizes = [2, 128], strides = [1, 1]} : vector<2x256xf32> to vector<2x128xf32>
    %253 = arith.mulf %252, %243 : vector<2x128xf32>
    %254 = arith.addf %251, %253 : vector<2x128xf32>
    %255 = math.tanh %254 : vector<2x128xf32>
    %256 = arith.mulf %249, %255 : vector<2x128xf32>
    %257 = arith.truncf %256 : vector<2x128xf32> to vector<2x128xbf16>
    %c0_65 = arith.constant 0 : index
    %c0_66 = arith.constant 0 : index
    %258 = vector.load %arg13[%c0_65, %c0_66] : memref<128x512xbf16, #tpu.memory_space<vmem>>, vector<128x512xbf16>
    %cst_67 = arith.constant dense<0.000000e+00> : vector<2x512xf32>
    %259 = tpu.matmul %257, %258, %cst_67 {dimension_numbers = #tpu.dot_dimension_numbers<[1], [0], [0], [1], [0, 0, 1, 1], [], []>} : vector<2x128xbf16>, vector<128x512xbf16>, vector<2x512xf32> -> vector<2x512xf32>
    %260 = arith.addf %259, %12 : vector<2x512xf32>
    %c4 = arith.constant 4 : index
    %c0_68 = arith.constant 0 : index
    %c0_69 = arith.constant 0 : index
    %261 = vector.load %arg0[%c4, %c0_68, %c0_69] : memref<8x2x1xf32, #tpu.memory_space<vmem>>, vector<1x2x1xf32>
    %262 = vector.shape_cast %261 : vector<1x2x1xf32> to vector<2x1xf32>
    %263 = vector.broadcast %262 : vector<2x1xf32> to vector<2x512xf32>
    %264 = arith.mulf %263, %6 : vector<2x512xf32>
    %265 = arith.addf %264, %9 : vector<2x512xf32>
    %266 = arith.truncf %229 : vector<2x128xf32> to vector<2x128xbf16>
    %cst_70 = arith.constant dense<0.000000e+00> : vector<2x512xf32>
    %267 = tpu.matmul %266, %13, %cst_70 {dimension_numbers = #tpu.dot_dimension_numbers<[1], [0], [0], [1], [0, 0, 1, 1], [], []>} : vector<2x128xbf16>, vector<128x512xbf16>, vector<2x512xf32> -> vector<2x512xf32>
    %268 = arith.addf %265, %267 : vector<2x512xf32>
    %269 = vector.extract_strided_slice %268 {offsets = [0, 0], sizes = [2, 256], strides = [1, 1]} : vector<2x512xf32> to vector<2x256xf32>
    %270 = arith.negf %269 : vector<2x256xf32>
    %271 = math.exp %270 : vector<2x256xf32>
    %cst_71 = arith.constant 1.000000e+00 : f32
    %272 = vector.broadcast %cst_71 : f32 to vector<2x256xf32>
    %273 = arith.addf %272, %271 : vector<2x256xf32>
    %274 = arith.divf %272, %273 : vector<2x256xf32>
    %275 = vector.extract_strided_slice %268 {offsets = [0, 256], sizes = [2, 128], strides = [1, 1]} : vector<2x512xf32> to vector<2x128xf32>
    %276 = math.tanh %275 : vector<2x128xf32>
    %277 = vector.extract_strided_slice %268 {offsets = [0, 384], sizes = [2, 128], strides = [1, 1]} : vector<2x512xf32> to vector<2x128xf32>
    %278 = arith.negf %277 : vector<2x128xf32>
    %279 = math.exp %278 : vector<2x128xf32>
    %cst_72 = arith.constant 1.000000e+00 : f32
    %280 = vector.broadcast %cst_72 : f32 to vector<2x128xf32>
    %281 = arith.addf %280, %279 : vector<2x128xf32>
    %282 = arith.divf %280, %281 : vector<2x128xf32>
    %283 = vector.extract_strided_slice %274 {offsets = [0, 128], sizes = [2, 128], strides = [1, 1]} : vector<2x256xf32> to vector<2x128xf32>
    %284 = arith.mulf %283, %227 : vector<2x128xf32>
    %285 = vector.extract_strided_slice %274 {offsets = [0, 0], sizes = [2, 128], strides = [1, 1]} : vector<2x256xf32> to vector<2x128xf32>
    %286 = arith.mulf %285, %276 : vector<2x128xf32>
    %287 = arith.addf %284, %286 : vector<2x128xf32>
    %288 = math.tanh %287 : vector<2x128xf32>
    %289 = arith.mulf %282, %288 : vector<2x128xf32>
    %cst_73 = arith.constant 0.000000e+00 : f32
    %290 = vector.broadcast %cst_73 : f32 to vector<2x128xf32>
    %291 = arith.maximumf %289, %290 : vector<2x128xf32>
    %292 = arith.truncf %291 : vector<2x128xf32> to vector<2x128xbf16>
    %c0_74 = arith.constant 0 : index
    %c0_75 = arith.constant 0 : index
    %293 = vector.load %arg12[%c0_74, %c0_75] : memref<128x512xbf16, #tpu.memory_space<vmem>>, vector<128x512xbf16>
    %cst_76 = arith.constant dense<0.000000e+00> : vector<2x512xf32>
    %294 = tpu.matmul %292, %293, %cst_76 {dimension_numbers = #tpu.dot_dimension_numbers<[1], [0], [0], [1], [0, 0, 1, 1], [], []>} : vector<2x128xbf16>, vector<128x512xbf16>, vector<2x512xf32> -> vector<2x512xf32>
    %295 = arith.addf %294, %260 : vector<2x512xf32>
    %296 = vector.extract_strided_slice %295 {offsets = [0, 0], sizes = [2, 256], strides = [1, 1]} : vector<2x512xf32> to vector<2x256xf32>
    %297 = arith.negf %296 : vector<2x256xf32>
    %298 = math.exp %297 : vector<2x256xf32>
    %cst_77 = arith.constant 1.000000e+00 : f32
    %299 = vector.broadcast %cst_77 : f32 to vector<2x256xf32>
    %300 = arith.addf %299, %298 : vector<2x256xf32>
    %301 = arith.divf %299, %300 : vector<2x256xf32>
    %302 = vector.extract_strided_slice %295 {offsets = [0, 256], sizes = [2, 128], strides = [1, 1]} : vector<2x512xf32> to vector<2x128xf32>
    %303 = math.tanh %302 : vector<2x128xf32>
    %304 = vector.extract_strided_slice %295 {offsets = [0, 384], sizes = [2, 128], strides = [1, 1]} : vector<2x512xf32> to vector<2x128xf32>
    %305 = arith.negf %304 : vector<2x128xf32>
    %306 = math.exp %305 : vector<2x128xf32>
    %cst_78 = arith.constant 1.000000e+00 : f32
    %307 = vector.broadcast %cst_78 : f32 to vector<2x128xf32>
    %308 = arith.addf %307, %306 : vector<2x128xf32>
    %309 = arith.divf %307, %308 : vector<2x128xf32>
    %310 = vector.extract_strided_slice %301 {offsets = [0, 128], sizes = [2, 128], strides = [1, 1]} : vector<2x256xf32> to vector<2x128xf32>
    %311 = arith.mulf %310, %254 : vector<2x128xf32>
    %312 = vector.extract_strided_slice %301 {offsets = [0, 0], sizes = [2, 128], strides = [1, 1]} : vector<2x256xf32> to vector<2x128xf32>
    %313 = arith.mulf %312, %303 : vector<2x128xf32>
    %314 = arith.addf %311, %313 : vector<2x128xf32>
    %315 = math.tanh %314 : vector<2x128xf32>
    %316 = arith.mulf %309, %315 : vector<2x128xf32>
    %317 = arith.truncf %316 : vector<2x128xf32> to vector<2x128xbf16>
    %c0_79 = arith.constant 0 : index
    %c0_80 = arith.constant 0 : index
    %318 = vector.load %arg13[%c0_79, %c0_80] : memref<128x512xbf16, #tpu.memory_space<vmem>>, vector<128x512xbf16>
    %cst_81 = arith.constant dense<0.000000e+00> : vector<2x512xf32>
    %319 = tpu.matmul %317, %318, %cst_81 {dimension_numbers = #tpu.dot_dimension_numbers<[1], [0], [0], [1], [0, 0, 1, 1], [], []>} : vector<2x128xbf16>, vector<128x512xbf16>, vector<2x512xf32> -> vector<2x512xf32>
    %320 = arith.addf %319, %12 : vector<2x512xf32>
    %c5 = arith.constant 5 : index
    %c0_82 = arith.constant 0 : index
    %c0_83 = arith.constant 0 : index
    %321 = vector.load %arg0[%c5, %c0_82, %c0_83] : memref<8x2x1xf32, #tpu.memory_space<vmem>>, vector<1x2x1xf32>
    %322 = vector.shape_cast %321 : vector<1x2x1xf32> to vector<2x1xf32>
    %323 = vector.broadcast %322 : vector<2x1xf32> to vector<2x512xf32>
    %324 = arith.mulf %323, %6 : vector<2x512xf32>
    %325 = arith.addf %324, %9 : vector<2x512xf32>
    %326 = arith.truncf %289 : vector<2x128xf32> to vector<2x128xbf16>
    %cst_84 = arith.constant dense<0.000000e+00> : vector<2x512xf32>
    %327 = tpu.matmul %326, %13, %cst_84 {dimension_numbers = #tpu.dot_dimension_numbers<[1], [0], [0], [1], [0, 0, 1, 1], [], []>} : vector<2x128xbf16>, vector<128x512xbf16>, vector<2x512xf32> -> vector<2x512xf32>
    %328 = arith.addf %325, %327 : vector<2x512xf32>
    %329 = vector.extract_strided_slice %328 {offsets = [0, 0], sizes = [2, 256], strides = [1, 1]} : vector<2x512xf32> to vector<2x256xf32>
    %330 = arith.negf %329 : vector<2x256xf32>
    %331 = math.exp %330 : vector<2x256xf32>
    %cst_85 = arith.constant 1.000000e+00 : f32
    %332 = vector.broadcast %cst_85 : f32 to vector<2x256xf32>
    %333 = arith.addf %332, %331 : vector<2x256xf32>
    %334 = arith.divf %332, %333 : vector<2x256xf32>
    %335 = vector.extract_strided_slice %328 {offsets = [0, 256], sizes = [2, 128], strides = [1, 1]} : vector<2x512xf32> to vector<2x128xf32>
    %336 = math.tanh %335 : vector<2x128xf32>
    %337 = vector.extract_strided_slice %328 {offsets = [0, 384], sizes = [2, 128], strides = [1, 1]} : vector<2x512xf32> to vector<2x128xf32>
    %338 = arith.negf %337 : vector<2x128xf32>
    %339 = math.exp %338 : vector<2x128xf32>
    %cst_86 = arith.constant 1.000000e+00 : f32
    %340 = vector.broadcast %cst_86 : f32 to vector<2x128xf32>
    %341 = arith.addf %340, %339 : vector<2x128xf32>
    %342 = arith.divf %340, %341 : vector<2x128xf32>
    %343 = vector.extract_strided_slice %334 {offsets = [0, 128], sizes = [2, 128], strides = [1, 1]} : vector<2x256xf32> to vector<2x128xf32>
    %344 = arith.mulf %343, %287 : vector<2x128xf32>
    %345 = vector.extract_strided_slice %334 {offsets = [0, 0], sizes = [2, 128], strides = [1, 1]} : vector<2x256xf32> to vector<2x128xf32>
    %346 = arith.mulf %345, %336 : vector<2x128xf32>
    %347 = arith.addf %344, %346 : vector<2x128xf32>
    %348 = math.tanh %347 : vector<2x128xf32>
    %349 = arith.mulf %342, %348 : vector<2x128xf32>
    %cst_87 = arith.constant 0.000000e+00 : f32
    %350 = vector.broadcast %cst_87 : f32 to vector<2x128xf32>
    %351 = arith.maximumf %349, %350 : vector<2x128xf32>
    %352 = arith.truncf %351 : vector<2x128xf32> to vector<2x128xbf16>
    %c0_88 = arith.constant 0 : index
    %c0_89 = arith.constant 0 : index
    %353 = vector.load %arg12[%c0_88, %c0_89] : memref<128x512xbf16, #tpu.memory_space<vmem>>, vector<128x512xbf16>
    %cst_90 = arith.constant dense<0.000000e+00> : vector<2x512xf32>
    %354 = tpu.matmul %352, %353, %cst_90 {dimension_numbers = #tpu.dot_dimension_numbers<[1], [0], [0], [1], [0, 0, 1, 1], [], []>} : vector<2x128xbf16>, vector<128x512xbf16>, vector<2x512xf32> -> vector<2x512xf32>
    %355 = arith.addf %354, %320 : vector<2x512xf32>
    %356 = vector.extract_strided_slice %355 {offsets = [0, 0], sizes = [2, 256], strides = [1, 1]} : vector<2x512xf32> to vector<2x256xf32>
    %357 = arith.negf %356 : vector<2x256xf32>
    %358 = math.exp %357 : vector<2x256xf32>
    %cst_91 = arith.constant 1.000000e+00 : f32
    %359 = vector.broadcast %cst_91 : f32 to vector<2x256xf32>
    %360 = arith.addf %359, %358 : vector<2x256xf32>
    %361 = arith.divf %359, %360 : vector<2x256xf32>
    %362 = vector.extract_strided_slice %355 {offsets = [0, 256], sizes = [2, 128], strides = [1, 1]} : vector<2x512xf32> to vector<2x128xf32>
    %363 = math.tanh %362 : vector<2x128xf32>
    %364 = vector.extract_strided_slice %355 {offsets = [0, 384], sizes = [2, 128], strides = [1, 1]} : vector<2x512xf32> to vector<2x128xf32>
    %365 = arith.negf %364 : vector<2x128xf32>
    %366 = math.exp %365 : vector<2x128xf32>
    %cst_92 = arith.constant 1.000000e+00 : f32
    %367 = vector.broadcast %cst_92 : f32 to vector<2x128xf32>
    %368 = arith.addf %367, %366 : vector<2x128xf32>
    %369 = arith.divf %367, %368 : vector<2x128xf32>
    %370 = vector.extract_strided_slice %361 {offsets = [0, 128], sizes = [2, 128], strides = [1, 1]} : vector<2x256xf32> to vector<2x128xf32>
    %371 = arith.mulf %370, %314 : vector<2x128xf32>
    %372 = vector.extract_strided_slice %361 {offsets = [0, 0], sizes = [2, 128], strides = [1, 1]} : vector<2x256xf32> to vector<2x128xf32>
    %373 = arith.mulf %372, %363 : vector<2x128xf32>
    %374 = arith.addf %371, %373 : vector<2x128xf32>
    %375 = math.tanh %374 : vector<2x128xf32>
    %376 = arith.mulf %369, %375 : vector<2x128xf32>
    %377 = arith.truncf %376 : vector<2x128xf32> to vector<2x128xbf16>
    %c0_93 = arith.constant 0 : index
    %c0_94 = arith.constant 0 : index
    %378 = vector.load %arg13[%c0_93, %c0_94] : memref<128x512xbf16, #tpu.memory_space<vmem>>, vector<128x512xbf16>
    %cst_95 = arith.constant dense<0.000000e+00> : vector<2x512xf32>
    %379 = tpu.matmul %377, %378, %cst_95 {dimension_numbers = #tpu.dot_dimension_numbers<[1], [0], [0], [1], [0, 0, 1, 1], [], []>} : vector<2x128xbf16>, vector<128x512xbf16>, vector<2x512xf32> -> vector<2x512xf32>
    %380 = arith.addf %379, %12 : vector<2x512xf32>
    %c6 = arith.constant 6 : index
    %c0_96 = arith.constant 0 : index
    %c0_97 = arith.constant 0 : index
    %381 = vector.load %arg0[%c6, %c0_96, %c0_97] : memref<8x2x1xf32, #tpu.memory_space<vmem>>, vector<1x2x1xf32>
    %382 = vector.shape_cast %381 : vector<1x2x1xf32> to vector<2x1xf32>
    %383 = vector.broadcast %382 : vector<2x1xf32> to vector<2x512xf32>
    %384 = arith.mulf %383, %6 : vector<2x512xf32>
    %385 = arith.addf %384, %9 : vector<2x512xf32>
    %386 = arith.truncf %349 : vector<2x128xf32> to vector<2x128xbf16>
    %cst_98 = arith.constant dense<0.000000e+00> : vector<2x512xf32>
    %387 = tpu.matmul %386, %13, %cst_98 {dimension_numbers = #tpu.dot_dimension_numbers<[1], [0], [0], [1], [0, 0, 1, 1], [], []>} : vector<2x128xbf16>, vector<128x512xbf16>, vector<2x512xf32> -> vector<2x512xf32>
    %388 = arith.addf %385, %387 : vector<2x512xf32>
    %389 = vector.extract_strided_slice %388 {offsets = [0, 0], sizes = [2, 256], strides = [1, 1]} : vector<2x512xf32> to vector<2x256xf32>
    %390 = arith.negf %389 : vector<2x256xf32>
    %391 = math.exp %390 : vector<2x256xf32>
    %cst_99 = arith.constant 1.000000e+00 : f32
    %392 = vector.broadcast %cst_99 : f32 to vector<2x256xf32>
    %393 = arith.addf %392, %391 : vector<2x256xf32>
    %394 = arith.divf %392, %393 : vector<2x256xf32>
    %395 = vector.extract_strided_slice %388 {offsets = [0, 256], sizes = [2, 128], strides = [1, 1]} : vector<2x512xf32> to vector<2x128xf32>
    %396 = math.tanh %395 : vector<2x128xf32>
    %397 = vector.extract_strided_slice %388 {offsets = [0, 384], sizes = [2, 128], strides = [1, 1]} : vector<2x512xf32> to vector<2x128xf32>
    %398 = arith.negf %397 : vector<2x128xf32>
    %399 = math.exp %398 : vector<2x128xf32>
    %cst_100 = arith.constant 1.000000e+00 : f32
    %400 = vector.broadcast %cst_100 : f32 to vector<2x128xf32>
    %401 = arith.addf %400, %399 : vector<2x128xf32>
    %402 = arith.divf %400, %401 : vector<2x128xf32>
    %403 = vector.extract_strided_slice %394 {offsets = [0, 128], sizes = [2, 128], strides = [1, 1]} : vector<2x256xf32> to vector<2x128xf32>
    %404 = arith.mulf %403, %347 : vector<2x128xf32>
    %405 = vector.extract_strided_slice %394 {offsets = [0, 0], sizes = [2, 128], strides = [1, 1]} : vector<2x256xf32> to vector<2x128xf32>
    %406 = arith.mulf %405, %396 : vector<2x128xf32>
    %407 = arith.addf %404, %406 : vector<2x128xf32>
    %408 = math.tanh %407 : vector<2x128xf32>
    %409 = arith.mulf %402, %408 : vector<2x128xf32>
    %cst_101 = arith.constant 0.000000e+00 : f32
    %410 = vector.broadcast %cst_101 : f32 to vector<2x128xf32>
    %411 = arith.maximumf %409, %410 : vector<2x128xf32>
    %412 = arith.truncf %411 : vector<2x128xf32> to vector<2x128xbf16>
    %c0_102 = arith.constant 0 : index
    %c0_103 = arith.constant 0 : index
    %413 = vector.load %arg12[%c0_102, %c0_103] : memref<128x512xbf16, #tpu.memory_space<vmem>>, vector<128x512xbf16>
    %cst_104 = arith.constant dense<0.000000e+00> : vector<2x512xf32>
    %414 = tpu.matmul %412, %413, %cst_104 {dimension_numbers = #tpu.dot_dimension_numbers<[1], [0], [0], [1], [0, 0, 1, 1], [], []>} : vector<2x128xbf16>, vector<128x512xbf16>, vector<2x512xf32> -> vector<2x512xf32>
    %415 = arith.addf %414, %380 : vector<2x512xf32>
    %416 = vector.extract_strided_slice %415 {offsets = [0, 0], sizes = [2, 256], strides = [1, 1]} : vector<2x512xf32> to vector<2x256xf32>
    %417 = arith.negf %416 : vector<2x256xf32>
    %418 = math.exp %417 : vector<2x256xf32>
    %cst_105 = arith.constant 1.000000e+00 : f32
    %419 = vector.broadcast %cst_105 : f32 to vector<2x256xf32>
    %420 = arith.addf %419, %418 : vector<2x256xf32>
    %421 = arith.divf %419, %420 : vector<2x256xf32>
    %422 = vector.extract_strided_slice %415 {offsets = [0, 256], sizes = [2, 128], strides = [1, 1]} : vector<2x512xf32> to vector<2x128xf32>
    %423 = math.tanh %422 : vector<2x128xf32>
    %424 = vector.extract_strided_slice %415 {offsets = [0, 384], sizes = [2, 128], strides = [1, 1]} : vector<2x512xf32> to vector<2x128xf32>
    %425 = arith.negf %424 : vector<2x128xf32>
    %426 = math.exp %425 : vector<2x128xf32>
    %cst_106 = arith.constant 1.000000e+00 : f32
    %427 = vector.broadcast %cst_106 : f32 to vector<2x128xf32>
    %428 = arith.addf %427, %426 : vector<2x128xf32>
    %429 = arith.divf %427, %428 : vector<2x128xf32>
    %430 = vector.extract_strided_slice %421 {offsets = [0, 128], sizes = [2, 128], strides = [1, 1]} : vector<2x256xf32> to vector<2x128xf32>
    %431 = arith.mulf %430, %374 : vector<2x128xf32>
    %432 = vector.extract_strided_slice %421 {offsets = [0, 0], sizes = [2, 128], strides = [1, 1]} : vector<2x256xf32> to vector<2x128xf32>
    %433 = arith.mulf %432, %423 : vector<2x128xf32>
    %434 = arith.addf %431, %433 : vector<2x128xf32>
    %435 = math.tanh %434 : vector<2x128xf32>
    %436 = arith.mulf %429, %435 : vector<2x128xf32>
    %437 = arith.truncf %436 : vector<2x128xf32> to vector<2x128xbf16>
    %c0_107 = arith.constant 0 : index
    %c0_108 = arith.constant 0 : index
    %438 = vector.load %arg13[%c0_107, %c0_108] : memref<128x512xbf16, #tpu.memory_space<vmem>>, vector<128x512xbf16>
    %cst_109 = arith.constant dense<0.000000e+00> : vector<2x512xf32>
    %439 = tpu.matmul %437, %438, %cst_109 {dimension_numbers = #tpu.dot_dimension_numbers<[1], [0], [0], [1], [0, 0, 1, 1], [], []>} : vector<2x128xbf16>, vector<128x512xbf16>, vector<2x512xf32> -> vector<2x512xf32>
    %440 = arith.addf %439, %12 : vector<2x512xf32>
    %c7 = arith.constant 7 : index
    %c0_110 = arith.constant 0 : index
    %c0_111 = arith.constant 0 : index
    %441 = vector.load %arg0[%c7, %c0_110, %c0_111] : memref<8x2x1xf32, #tpu.memory_space<vmem>>, vector<1x2x1xf32>
    %442 = vector.shape_cast %441 : vector<1x2x1xf32> to vector<2x1xf32>
    %443 = vector.broadcast %442 : vector<2x1xf32> to vector<2x512xf32>
    %444 = arith.mulf %443, %6 : vector<2x512xf32>
    %445 = arith.addf %444, %9 : vector<2x512xf32>
    %446 = arith.truncf %409 : vector<2x128xf32> to vector<2x128xbf16>
    %cst_112 = arith.constant dense<0.000000e+00> : vector<2x512xf32>
    %447 = tpu.matmul %446, %13, %cst_112 {dimension_numbers = #tpu.dot_dimension_numbers<[1], [0], [0], [1], [0, 0, 1, 1], [], []>} : vector<2x128xbf16>, vector<128x512xbf16>, vector<2x512xf32> -> vector<2x512xf32>
    %448 = arith.addf %445, %447 : vector<2x512xf32>
    %449 = vector.extract_strided_slice %448 {offsets = [0, 0], sizes = [2, 256], strides = [1, 1]} : vector<2x512xf32> to vector<2x256xf32>
    %450 = arith.negf %449 : vector<2x256xf32>
    %451 = math.exp %450 : vector<2x256xf32>
    %cst_113 = arith.constant 1.000000e+00 : f32
    %452 = vector.broadcast %cst_113 : f32 to vector<2x256xf32>
    %453 = arith.addf %452, %451 : vector<2x256xf32>
    %454 = arith.divf %452, %453 : vector<2x256xf32>
    %455 = vector.extract_strided_slice %448 {offsets = [0, 256], sizes = [2, 128], strides = [1, 1]} : vector<2x512xf32> to vector<2x128xf32>
    %456 = math.tanh %455 : vector<2x128xf32>
    %457 = vector.extract_strided_slice %448 {offsets = [0, 384], sizes = [2, 128], strides = [1, 1]} : vector<2x512xf32> to vector<2x128xf32>
    %458 = arith.negf %457 : vector<2x128xf32>
    %459 = math.exp %458 : vector<2x128xf32>
    %cst_114 = arith.constant 1.000000e+00 : f32
    %460 = vector.broadcast %cst_114 : f32 to vector<2x128xf32>
    %461 = arith.addf %460, %459 : vector<2x128xf32>
    %462 = arith.divf %460, %461 : vector<2x128xf32>
    %463 = vector.extract_strided_slice %454 {offsets = [0, 128], sizes = [2, 128], strides = [1, 1]} : vector<2x256xf32> to vector<2x128xf32>
    %464 = arith.mulf %463, %407 : vector<2x128xf32>
    %465 = vector.extract_strided_slice %454 {offsets = [0, 0], sizes = [2, 128], strides = [1, 1]} : vector<2x256xf32> to vector<2x128xf32>
    %466 = arith.mulf %465, %456 : vector<2x128xf32>
    %467 = arith.addf %464, %466 : vector<2x128xf32>
    %468 = math.tanh %467 : vector<2x128xf32>
    %469 = arith.mulf %462, %468 : vector<2x128xf32>
    %cst_115 = arith.constant 0.000000e+00 : f32
    %470 = vector.broadcast %cst_115 : f32 to vector<2x128xf32>
    %471 = arith.maximumf %469, %470 : vector<2x128xf32>
    %472 = arith.truncf %471 : vector<2x128xf32> to vector<2x128xbf16>
    %c0_116 = arith.constant 0 : index
    %c0_117 = arith.constant 0 : index
    %473 = vector.load %arg12[%c0_116, %c0_117] : memref<128x512xbf16, #tpu.memory_space<vmem>>, vector<128x512xbf16>
    %cst_118 = arith.constant dense<0.000000e+00> : vector<2x512xf32>
    %474 = tpu.matmul %472, %473, %cst_118 {dimension_numbers = #tpu.dot_dimension_numbers<[1], [0], [0], [1], [0, 0, 1, 1], [], []>} : vector<2x128xbf16>, vector<128x512xbf16>, vector<2x512xf32> -> vector<2x512xf32>
    %475 = arith.addf %474, %440 : vector<2x512xf32>
    %476 = vector.extract_strided_slice %475 {offsets = [0, 0], sizes = [2, 256], strides = [1, 1]} : vector<2x512xf32> to vector<2x256xf32>
    %477 = arith.negf %476 : vector<2x256xf32>
    %478 = math.exp %477 : vector<2x256xf32>
    %cst_119 = arith.constant 1.000000e+00 : f32
    %479 = vector.broadcast %cst_119 : f32 to vector<2x256xf32>
    %480 = arith.addf %479, %478 : vector<2x256xf32>
    %481 = arith.divf %479, %480 : vector<2x256xf32>
    %482 = vector.extract_strided_slice %475 {offsets = [0, 256], sizes = [2, 128], strides = [1, 1]} : vector<2x512xf32> to vector<2x128xf32>
    %483 = math.tanh %482 : vector<2x128xf32>
    %484 = vector.extract_strided_slice %475 {offsets = [0, 384], sizes = [2, 128], strides = [1, 1]} : vector<2x512xf32> to vector<2x128xf32>
    %485 = arith.negf %484 : vector<2x128xf32>
    %486 = math.exp %485 : vector<2x128xf32>
    %cst_120 = arith.constant 1.000000e+00 : f32
    %487 = vector.broadcast %cst_120 : f32 to vector<2x128xf32>
    %488 = arith.addf %487, %486 : vector<2x128xf32>
    %489 = arith.divf %487, %488 : vector<2x128xf32>
    %490 = vector.extract_strided_slice %481 {offsets = [0, 128], sizes = [2, 128], strides = [1, 1]} : vector<2x256xf32> to vector<2x128xf32>
    %491 = arith.mulf %490, %434 : vector<2x128xf32>
    %492 = vector.extract_strided_slice %481 {offsets = [0, 0], sizes = [2, 128], strides = [1, 1]} : vector<2x256xf32> to vector<2x128xf32>
    %493 = arith.mulf %492, %483 : vector<2x128xf32>
    %494 = arith.addf %491, %493 : vector<2x128xf32>
    %495 = math.tanh %494 : vector<2x128xf32>
    %496 = arith.mulf %489, %495 : vector<2x128xf32>
    %cst_121 = arith.constant 0.000000e+00 : f32
    %497 = vector.broadcast %cst_121 : f32 to vector<2x128xf32>
    %498 = arith.maximumf %496, %497 : vector<2x128xf32>
    %c0_122 = arith.constant 0 : index
    %c0_123 = arith.constant 0 : index
    %499 = vector.load %arg7[%c0_122, %c0_123] : memref<128x10xf32, #tpu.memory_space<vmem>>, vector<128x10xf32>
    %cst_124 = arith.constant dense<0.000000e+00> : vector<2x10xf32>
    %500 = tpu.matmul %498, %499, %cst_124 {dimension_numbers = #tpu.dot_dimension_numbers<[1], [0], [0], [1], [0, 0, 1, 1], [], []>} : vector<2x128xf32>, vector<128x10xf32>, vector<2x10xf32> -> vector<2x10xf32>
    %c0_125 = arith.constant 0 : index
    %c0_126 = arith.constant 0 : index
    %501 = vector.load %arg8[%c0_125, %c0_126] : memref<1x10xf32, #tpu.memory_space<vmem>>, vector<1x10xf32>
    %502 = vector.broadcast %501 : vector<1x10xf32> to vector<2x10xf32>
    %503 = arith.addf %500, %502 : vector<2x10xf32>
    %cst_127 = arith.constant 0.000000e+00 : f32
    %504 = vector.broadcast %cst_127 : f32 to vector<2x10xf32>
    %505 = arith.maximumf %503, %504 : vector<2x10xf32>
    %c0_128 = arith.constant 0 : index
    %c0_129 = arith.constant 0 : index
    %506 = vector.load %arg9[%c0_128, %c0_129] : memref<10x1xf32, #tpu.memory_space<vmem>>, vector<10x1xf32>
    %cst_130 = arith.constant dense<0.000000e+00> : vector<2x1xf32>
    %507 = tpu.matmul %505, %506, %cst_130 {dimension_numbers = #tpu.dot_dimension_numbers<[1], [0], [0], [1], [0, 0, 1, 1], [], []>} : vector<2x10xf32>, vector<10x1xf32>, vector<2x1xf32> -> vector<2x1xf32>
    %c0_131 = arith.constant 0 : index
    %c0_132 = arith.constant 0 : index
    %508 = vector.load %arg10[%c0_131, %c0_132] : memref<1x1xf32, #tpu.memory_space<vmem>>, vector<1x1xf32>
    %509 = vector.broadcast %508 : vector<1x1xf32> to vector<2x1xf32>
    %510 = arith.addf %507, %509 : vector<2x1xf32>
    %c0_133 = arith.constant 0 : index
    %c0_134 = arith.constant 0 : index
    %511 = vector.load %arg11[%c0_133, %c0_134] : memref<2x1xf32, #tpu.memory_space<vmem>>, vector<2x1xf32>
    tpu.vector_store %arg11[%c0_133, %c0_134], %510 {strides = array<i32>} : memref<2x1xf32, #tpu.memory_space<vmem>>, vector<2x1xf32>,
    return
  }
}

</mosaic_0001>

<llo_original>
// kernel: tpu_custom_call.1
$region0: #{tpu_custom_call.1}
  #allocation0 [shape = 'u32[]', space=smem, size = 0x4, offset = 0x4, fixed_abs, tag = 'smem constant byte address 0x4 - core index']
  #allocation1 [shape = 'u32[144,128]{1,0:T(1,128)}', space=vmem, size = 0x12000, scoped, tag = 'internal scratch']
  #allocation2 [shape = 'bf16[128,512]{1,0:T(8,128)(2,1)}', space=vmem, size = 0x20000, scoped, tag = 'scratch operand']
  #allocation3 [shape = 'bf16[128,512]{1,0:T(8,128)(2,1)}', space=vmem, size = 0x20000, scoped, tag = 'scratch operand']
  #allocation4 [shape = 's32[2]{0}', space=sflag, size = 0x8, scoped, tag = 'scratch operand']
  #allocation5 [shape = 'f32[1,1]{1,0:T(1,128)S(1)}', space=vmem, size = 0x200, scoped, tag = 'scoped memory for tpu_custom_call.1']
  #allocation8 [shape = 's32[]', space=sflag, size = 0x4, offset = 0, fixed_abs, tag = 'sflag constant byte address 0x0 - dummy sync flag']
  #allocation9 [shape = 's32[]', space=sflag, size = 0x4, offset = 0, fixed_abs, tag = 'sflag constant byte address 0x0 - dummy sync flag']
  #allocation10 [shape = 'u32[]', space=smem, size = 0x4, offset = 0x44, fixed_abs, tag = 'smem constant byte address 0x44 - assertion arg 0']
  #allocation11 [shape = 'u32[]', space=smem, size = 0x4, offset = 0x48, fixed_abs, tag = 'smem constant byte address 0x48 - assertion arg 1']
  #allocation12 [shape = 's32[]', space=sflag, size = 0x4, offset = 0, fixed_abs, tag = 'sflag constant byte address 0x0 - dummy sync flag']
  #allocation13 [shape = 's32[]', space=sflag, size = 0x4, offset = 0, fixed_abs, tag = 'sflag constant byte address 0x0 - dummy sync flag']
  %s0 = inlined_call_operand.vmem [shape: f32[8,2,1], index: 0, kind: input, shape index: {}]
  %s1 = inlined_call_operand.vmem [shape: f32[1,512], index: 1, kind: input, shape index: {}]
  %s2 = inlined_call_operand.hbm [shape: bf16[128,512], index: 2, kind: input, shape index: {}]
  %s3 = inlined_call_operand.vmem [shape: f32[1,512], index: 3, kind: input, shape index: {}]
  %s4 = inlined_call_operand.hbm [shape: bf16[128,512], index: 4, kind: input, shape index: {}]
  %s5 = inlined_call_operand.hbm [shape: bf16[128,512], index: 5, kind: input, shape index: {}]
  %s6 = inlined_call_operand.vmem [shape: f32[1,512], index: 6, kind: input, shape index: {}]
  %s7 = inlined_call_operand.vmem [shape: f32[128,10], index: 7, kind: input, shape index: {}]
  %s8 = inlined_call_operand.vmem [shape: f32[1,10], index: 8, kind: input, shape index: {}]
  %s9 = inlined_call_operand.vmem [shape: f32[10,1], index: 9, kind: input, shape index: {}]
  %s10 = inlined_call_operand.<no memory space> [shape: f32[1,1], index: 10, kind: input, shape index: {}]
  %s11 = inlined_call_operand.vmem [shape: f32[2,1], index: 11, kind: output, shape index: {}]
  %s12 = sld [smem:[#allocation0]]
  $region58: #{tpu_custom_call.1} parent=0
    _
  %s14 = ssub.s32 1, %s12
  %s15 = scalar_select 0, %s14, %s12
  %v16 = vstv %s10
  %17 = vst [vmem:[#allocation5] sm:$0x1] %v16
  $region1: #{tpu_custom_call.1} parent=0
    #allocation6 [shape = 'u8[131072]{0}', space=vmem, size = 0x20000, scoped, tag = 'input window, operand 2, single buffered']
    #allocation7 [shape = 's32[1]{0}', space=sflag, size = 0x4, scoped, tag = 'scoped memory for tpu_custom_call.1']
    %18 = vsyncpa [#allocation7], 0
    // Predicated region
    $region2: #{tpu_custom_call.1} parent=1 // pred_check
      _
    $region3: #{tpu_custom_call.1} parent=1 // pred_check_branch
      %20 = sbr.rel (0) target = $region5
    $region4: #{tpu_custom_call.1} parent=1 // pred_region
      _
    $region5: #{tpu_custom_call.1} parent=1 // pred_fallthru
      _
    // Predicated region
    $region6: #{tpu_custom_call.1} parent=1 // pred_check
      _
    $region7: #{tpu_custom_call.1} parent=1 // pred_check_branch
      %22 = sbr.rel (0) target = $region9
    $region8: #{tpu_custom_call.1} parent=1 // pred_region
      _
    $region9: #{tpu_custom_call.1} parent=1 // pred_fallthru
      _
    // Predicated region
    $region10: #{tpu_custom_call.1} parent=1 // pred_check
      _
    $region11: #{tpu_custom_call.1} parent=1 // pred_check_branch
      %24 = sbr.rel (0) target = $region13
    $region12: #{tpu_custom_call.1} parent=1 // pred_region
      %s26 = ssub.s32 4096, 4096
      %27 = vsyncadd [#allocation7], %s26
      %s28 = sshll.u32 [#allocation6], 4
      %s29 = int_to_ptr.vmem [resolvable:$true] %s28
      %34 = dma.hbm_to_vmem [thread:$0]  %s2, 4096, %s29, [#allocation7], 256, 256, 16
    $region13: #{tpu_custom_call.1} parent=1 // pred_fallthru
      _
    // Predicated region
    $region14: #{tpu_custom_call.1} parent=1 // pred_check
      _
    $region15: #{tpu_custom_call.1} parent=1 // pred_check_branch
      %36 = sbr.rel (0) target = $region17
    $region16: #{tpu_custom_call.1} parent=1 // pred_region
      _
    $region17: #{tpu_custom_call.1} parent=1 // pred_fallthru
      _
    // Predicated region
    $region18: #{tpu_custom_call.1} parent=1 // pred_check
      _
    $region19: #{tpu_custom_call.1} parent=1 // pred_check_branch
      %38 = sbr.rel (0) target = $region21
    $region20: #{tpu_custom_call.1} parent=1 // pred_region
      _
    $region21: #{tpu_custom_call.1} parent=1 // pred_fallthru
      _
    // Predicated region
    $region22: #{tpu_custom_call.1} parent=1 // pred_check
      _
    $region23: #{tpu_custom_call.1} parent=1 // pred_check_branch
      %40 = sbr.rel (0) target = $region25
    $region24: #{tpu_custom_call.1} parent=1 // pred_region
      _
    $region25: #{tpu_custom_call.1} parent=1 // pred_fallthru
      _
    // Predicated region
    $region26: #{tpu_custom_call.1} parent=1 // pred_check
      _
    $region27: #{tpu_custom_call.1} parent=1 // pred_check_branch
      %42 = sbr.rel (0) target = $region29
    $region28: #{tpu_custom_call.1} parent=1 // pred_region
      _
    $region29: #{tpu_custom_call.1} parent=1 // pred_fallthru
      _
    // Predicated region
    $region30: #{tpu_custom_call.1} parent=1 // pred_check
      _
    $region31: #{tpu_custom_call.1} parent=1 // pred_check_branch
      %44 = sbr.rel (0) target = $region33
    $region32: #{tpu_custom_call.1} parent=1 // pred_region
      _
    $region33: #{tpu_custom_call.1} parent=1 // pred_fallthru
      _
    // Predicated region
    $region34: #{tpu_custom_call.1} parent=1 // pred_check
      _
    $region35: #{tpu_custom_call.1} parent=1 // pred_check_branch
      %46 = sbr.rel (0) target = $region37
    $region36: #{tpu_custom_call.1} parent=1 // pred_region
      _
    $region37: #{tpu_custom_call.1} parent=1 // pred_fallthru
      _
    // Predicated region
    $region38: #{tpu_custom_call.1} parent=1 // pred_check
      _
    $region39: #{tpu_custom_call.1} parent=1 // pred_check_branch
      %48 = sbr.rel (0) target = $region41
    $region40: #{tpu_custom_call.1} parent=1 // pred_region
      %49 = dma.done [#allocation7], 4096
    $region41: #{tpu_custom_call.1} parent=1 // pred_fallthru
      _
    // Predicated region
    $region42: #{tpu_custom_call.1} parent=1 // pred_check
      _
    $region43: #{tpu_custom_call.1} parent=1 // pred_check_branch
      %52 = sbr.rel target = $region45
    $region44: #{tpu_custom_call.1} parent=1 // pred_region
      %53 = sst [smem:[#allocation10]] [#allocation9]
      %54 = sst [smem:[#allocation11]] [#allocation8]
    $region45: #{tpu_custom_call.1} parent=1 // pred_fallthru
      _
    %56 = shalt.err (0)
    %s58 = sshll.u32 [#allocation2], 4
    %s59 = int_to_ptr.vmem [resolvable:$true] %s58
    %61 = dma.hbm_to_vmem [thread:$0]  %s4, 4096, %s59, [#allocation4]
    %s62 = scalar_lea.sflag [#allocation4], 1
    // Predicated region
    $region46: #{tpu_custom_call.1} parent=1 // pred_check
      _
    $region47: #{tpu_custom_call.1} parent=1 // pred_check_branch
      %64 = sbr.rel target = $region49
    $region48: #{tpu_custom_call.1} parent=1 // pred_region
      %65 = sst [smem:[#allocation10]] [#allocation13]
      %66 = sst [smem:[#allocation11]] [#allocation12]
    $region49: #{tpu_custom_call.1} parent=1 // pred_fallthru
      _
    %68 = shalt.err (0)
    %s70 = sshll.u32 [#allocation3], 4
    %s71 = int_to_ptr.vmem [resolvable:$true] %s70
    %73 = dma.hbm_to_vmem [thread:$0]  %s5, 4096, %s71, %s62
    %v74 = vld [vmem:[%s1] sm:$0xf]
    %v76 = vlaneseq
    %v77 = vshrl.u32 %v76, 7
    %v78 = vsub.s32 0, %v77
    %v79 = vrot.slane %v74, %v78
    %v80 = vlaneseq
    %v81 = vshrl.u32 %v80, 7
    %v82 = vsub.s32 1, %v81
    %v83 = vrot.slane %v74, %v82
    %v84 = vlaneseq
    %v85 = vshrl.u32 %v84, 7
    %v86 = vsub.s32 2, %v85
    %v87 = vrot.slane %v74, %v86
    %v88 = vlaneseq
    %v89 = vshrl.u32 %v88, 7
    %v90 = vsub.s32 3, %v89
    %v91 = vrot.slane %v74, %v90
    %v96 = vld [vmem:[%s3] sm:$0xf]
    %v98 = vlaneseq
    %v99 = vshrl.u32 %v98, 7
    %v100 = vsub.s32 0, %v99
    %v101 = vrot.slane %v96, %v100
    %v102 = vlaneseq
    %v103 = vshrl.u32 %v102, 7
    %v104 = vsub.s32 1, %v103
    %v105 = vrot.slane %v96, %v104
    %v106 = vlaneseq
    %v107 = vshrl.u32 %v106, 7
    %v108 = vsub.s32 2, %v107
    %v109 = vrot.slane %v96, %v108
    %v110 = vlaneseq
    %v111 = vshrl.u32 %v110, 7
    %v112 = vsub.s32 3, %v111
    %v113 = vrot.slane %v96, %v112
    %v118 = vld [vmem:[%s6] sm:$0xf]
    %v120 = vlaneseq
    %v121 = vshrl.u32 %v120, 7
    %v122 = vsub.s32 0, %v121
    %v123 = vrot.slane %v118, %v122
    %v124 = vlaneseq
    %v125 = vshrl.u32 %v124, 7
    %v126 = vsub.s32 1, %v125
    %v127 = vrot.slane %v118, %v126
    %v128 = vlaneseq
    %v129 = vshrl.u32 %v128, 7
    %v130 = vsub.s32 2, %v129
    %v131 = vrot.slane %v118, %v130
    %v132 = vlaneseq
    %v133 = vshrl.u32 %v132, 7
    %v134 = vsub.s32 3, %v133
    %v135 = vrot.slane %v118, %v134
    %v140 = vld [vmem:[#allocation6] sm:$0xff]
    %v141 = vld [vmem:[#allocation6 + $0x8] sm:$0xff]
    %v142 = vld [vmem:[#allocation6 + $0x10] sm:$0xff]
    %v143 = vld [vmem:[#allocation6 + $0x18] sm:$0xff]
    %v144 = vld [vmem:[#allocation6 + $0x20] sm:$0xff]
    %v145 = vld [vmem:[#allocation6 + $0x28] sm:$0xff]
    %v146 = vld [vmem:[#allocation6 + $0x30] sm:$0xff]
    %v147 = vld [vmem:[#allocation6 + $0x38] sm:$0xff]
    %v148 = vld [vmem:[#allocation6 + $0x40] sm:$0xff]
    %v149 = vld [vmem:[#allocation6 + $0x48] sm:$0xff]
    %v150 = vld [vmem:[#allocation6 + $0x50] sm:$0xff]
    %v151 = vld [vmem:[#allocation6 + $0x58] sm:$0xff]
    %v152 = vld [vmem:[#allocation6 + $0x60] sm:$0xff]
    %v153 = vld [vmem:[#allocation6 + $0x68] sm:$0xff]
    %v154 = vld [vmem:[#allocation6 + $0x70] sm:$0xff]
    %v155 = vld [vmem:[#allocation6 + $0x78] sm:$0xff]
    %v156 = vld [vmem:[#allocation6 + $0x80] sm:$0xff]
    %v157 = vld [vmem:[#allocation6 + $0x88] sm:$0xff]
    %v158 = vld [vmem:[#allocation6 + $0x90] sm:$0xff]
    %v159 = vld [vmem:[#allocation6 + $0x98] sm:$0xff]
    %v160 = vld [vmem:[#allocation6 + $0xa0] sm:$0xff]
    %v161 = vld [vmem:[#allocation6 + $0xa8] sm:$0xff]
    %v162 = vld [vmem:[#allocation6 + $0xb0] sm:$0xff]
    %v163 = vld [vmem:[#allocation6 + $0xb8] sm:$0xff]
    %v164 = vld [vmem:[#allocation6 + $0xc0] sm:$0xff]
    %v165 = vld [vmem:[#allocation6 + $0xc8] sm:$0xff]
    %v166 = vld [vmem:[#allocation6 + $0xd0] sm:$0xff]
    %v167 = vld [vmem:[#allocation6 + $0xd8] sm:$0xff]
    %v168 = vld [vmem:[#allocation6 + $0xe0] sm:$0xff]
    %v169 = vld [vmem:[#allocation6 + $0xe8] sm:$0xff]
    %v170 = vld [vmem:[#allocation6 + $0xf0] sm:$0xff]
    %v171 = vld [vmem:[#allocation6 + $0xf8] sm:$0xff]
    %v172 = vld [vmem:[%s0] sm:$0x3]
    %174 = vset.pattern.permute.xlu0 0
    %175 = vperm.xlu0 %174, %v172
    %v176 = vpop.permute.xlu0 %175
    %v178 = vmul.f32 %v176, %v79
    %v179 = vmul.f32 %v176, %v83
    %v180 = vmul.f32 %v176, %v87
    %v181 = vmul.f32 %v176, %v91
    %v182 = vadd.f32 %v178, %v101
    %v183 = vadd.f32 %v179, %v105
    %v184 = vadd.f32 %v180, %v109
    %v185 = vadd.f32 %v181, %v113
    %v218 = vunpack.c.l.b16 %v140
    %v219 = vunpack.c.h.b16 %v140
    %v220 = vunpack.c.l.b16 %v141
    %v221 = vunpack.c.h.b16 %v141
    %v222 = vunpack.c.l.b16 %v142
    %v223 = vunpack.c.h.b16 %v142
    %v224 = vunpack.c.l.b16 %v143
    %v225 = vunpack.c.h.b16 %v143
    %v226 = vunpack.c.l.b16 %v144
    %v227 = vunpack.c.h.b16 %v144
    %v228 = vunpack.c.l.b16 %v145
    %v229 = vunpack.c.h.b16 %v145
    %v230 = vunpack.c.l.b16 %v146
    %v231 = vunpack.c.h.b16 %v146
    %v232 = vunpack.c.l.b16 %v147
    %v233 = vunpack.c.h.b16 %v147
    %v234 = vunpack.c.l.b16 %v148
    %v235 = vunpack.c.h.b16 %v148
    %v236 = vunpack.c.l.b16 %v149
    %v237 = vunpack.c.h.b16 %v149
    %v238 = vunpack.c.l.b16 %v150
    %v239 = vunpack.c.h.b16 %v150
    %v240 = vunpack.c.l.b16 %v151
    %v241 = vunpack.c.h.b16 %v151
    %v242 = vunpack.c.l.b16 %v152
    %v243 = vunpack.c.h.b16 %v152
    %v244 = vunpack.c.l.b16 %v153
    %v245 = vunpack.c.h.b16 %v153
    %v246 = vunpack.c.l.b16 %v154
    %v247 = vunpack.c.h.b16 %v154
    %v248 = vunpack.c.l.b16 %v155
    %v249 = vunpack.c.h.b16 %v155
    %v250 = vunpack.c.l.b16 %v156
    %v251 = vunpack.c.h.b16 %v156
    %v252 = vunpack.c.l.b16 %v157
    %v253 = vunpack.c.h.b16 %v157
    %v254 = vunpack.c.l.b16 %v158
    %v255 = vunpack.c.h.b16 %v158
    %v256 = vunpack.c.l.b16 %v159
    %v257 = vunpack.c.h.b16 %v159
    %v258 = vunpack.c.l.b16 %v160
    %v259 = vunpack.c.h.b16 %v160
    %v260 = vunpack.c.l.b16 %v161
    %v261 = vunpack.c.h.b16 %v161
    %v262 = vunpack.c.l.b16 %v162
    %v263 = vunpack.c.h.b16 %v162
    %v264 = vunpack.c.l.b16 %v163
    %v265 = vunpack.c.h.b16 %v163
    %v266 = vunpack.c.l.b16 %v164
    %v267 = vunpack.c.h.b16 %v164
    %v268 = vunpack.c.l.b16 %v165
    %v269 = vunpack.c.h.b16 %v165
    %v270 = vunpack.c.l.b16 %v166
    %v271 = vunpack.c.h.b16 %v166
    %v272 = vunpack.c.l.b16 %v167
    %v273 = vunpack.c.h.b16 %v167
    %v274 = vunpack.c.l.b16 %v168
    %v275 = vunpack.c.h.b16 %v168
    %v276 = vunpack.c.l.b16 %v169
    %v277 = vunpack.c.h.b16 %v169
    %v278 = vunpack.c.l.b16 %v170
    %v279 = vunpack.c.h.b16 %v170
    %v280 = vunpack.c.l.b16 %v171
    %v281 = vunpack.c.h.b16 %v171
    %v282 = vpack.c.b16 %v222, %v218
    %v283 = vpack.c.b16 %v223, %v219
    %v284 = vpack.c.b16 %v224, %v220
    %v285 = vpack.c.b16 %v225, %v221
    %v286 = vpack.c.b16 %v230, %v226
    %v287 = vpack.c.b16 %v231, %v227
    %v288 = vpack.c.b16 %v232, %v228
    %v289 = vpack.c.b16 %v233, %v229
    %v290 = vpack.c.b16 %v238, %v234
    %v291 = vpack.c.b16 %v239, %v235
    %v292 = vpack.c.b16 %v240, %v236
    %v293 = vpack.c.b16 %v241, %v237
    %v294 = vpack.c.b16 %v246, %v242
    %v295 = vpack.c.b16 %v247, %v243
    %v296 = vpack.c.b16 %v248, %v244
    %v297 = vpack.c.b16 %v249, %v245
    %v298 = vpack.c.b16 %v254, %v250
    %v299 = vpack.c.b16 %v255, %v251
    %v300 = vpack.c.b16 %v256, %v252
    %v301 = vpack.c.b16 %v257, %v253
    %v302 = vpack.c.b16 %v262, %v258
    %v303 = vpack.c.b16 %v263, %v259
    %v304 = vpack.c.b16 %v264, %v260
    %v305 = vpack.c.b16 %v265, %v261
    %v306 = vpack.c.b16 %v270, %v266
    %v307 = vpack.c.b16 %v271, %v267
    %v308 = vpack.c.b16 %v272, %v268
    %v309 = vpack.c.b16 %v273, %v269
    %v310 = vpack.c.b16 %v278, %v274
    %v311 = vpack.c.b16 %v279, %v275
    %v312 = vpack.c.b16 %v280, %v276
    %v313 = vpack.c.b16 %v281, %v277
    %346 = vmatprep.subr.bf16.mxu0 %v311
    %347 = vmatpush1.bf16.msra.mxu0 %v310
    %348 = vmatprep.subr.bf16.mxu0 %v307
    %349 = vmatpush1.bf16.msra.mxu0 %v306
    %350 = vmatprep.subr.bf16.mxu0 %v303
    %351 = vmatpush1.bf16.msra.mxu0 %v302
    %352 = vmatprep.subr.bf16.mxu0 %v299
    %353 = vmatpush1.bf16.msra.mxu0 %v298
    %354 = vmatprep.subr.bf16.mxu0 %v295
    %355 = vmatpush1.bf16.msra.mxu0 %v294
    %356 = vmatprep.subr.bf16.mxu0 %v291
    %357 = vmatpush1.bf16.msra.mxu0 %v290
    %358 = vmatprep.subr.bf16.mxu0 %v287
    %359 = vmatpush1.bf16.msra.mxu0 %v286
    %360 = vmatprep.subr.bf16.mxu0 %v283
    %361 = vmatpush1.bf16.msra.mxu0 %v282
    %362 = vmatprep.subr.bf16.mxu0 0
    %363 = vmatpush2.bf16.msra.mxu0 0
    %364 = vmatprep.subr.bf16.mxu0 0
    %365 = vmatpush2.bf16.msra.mxu0 0
    %366 = vmatprep.subr.bf16.mxu0 0
    %367 = vmatpush2.bf16.msra.mxu0 0
    %368 = vmatprep.subr.bf16.mxu0 0
    %369 = vmatpush2.bf16.msra.mxu0 0
    %370 = vmatprep.subr.bf16.mxu0 0
    %371 = vmatpush2.bf16.msra.mxu0 0
    %372 = vmatprep.subr.bf16.mxu0 0
    %373 = vmatpush2.bf16.msra.mxu0 0
    %374 = vmatprep.subr.bf16.mxu0 0
    %375 = vmatpush2.bf16.msra.mxu0 0
    %376 = vmatprep.subr.bf16.mxu0 0
    %377 = vmatpush2.bf16.msra.mxu0 0
    %378 = vmatprep.mubr.bf16.mxu0 0
    %379 = vmatmul.mubr.bf16.gmra.mxu0 0
    %v380 = vpop.f32.mrf.mxu0
    %v381 = vadd.f32 0.0, %v380
    %v382 = vpop.f32.mrf.mxu0
    %v383 = vadd.f32 0.0, %v382
    %v384 = vpop.f32.mrf.mxu0
    %v385 = vpop.f32.mrf.mxu0
    %386 = vdwg.mxu0
    %387 = vmatprep.subr.bf16.mxu0 %v313
    %388 = vmatpush1.bf16.msra.mxu0 %v312
    %389 = vmatprep.subr.bf16.mxu0 %v309
    %390 = vmatpush1.bf16.msra.mxu0 %v308
    %391 = vmatprep.subr.bf16.mxu0 %v305
    %392 = vmatpush1.bf16.msra.mxu0 %v304
    %393 = vmatprep.subr.bf16.mxu0 %v301
    %394 = vmatpush1.bf16.msra.mxu0 %v300
    %395 = vmatprep.subr.bf16.mxu0 %v297
    %396 = vmatpush1.bf16.msra.mxu0 %v296
    %397 = vmatprep.subr.bf16.mxu0 %v293
    %398 = vmatpush1.bf16.msra.mxu0 %v292
    %399 = vmatprep.subr.bf16.mxu0 %v289
    %400 = vmatpush1.bf16.msra.mxu0 %v288
    %401 = vmatprep.subr.bf16.mxu0 %v285
    %402 = vmatpush1.bf16.msra.mxu0 %v284
    %403 = vmatprep.subr.bf16.mxu0 0
    %404 = vmatpush2.bf16.msra.mxu0 0
    %405 = vmatprep.subr.bf16.mxu0 0
    %406 = vmatpush2.bf16.msra.mxu0 0
    %407 = vmatprep.subr.bf16.mxu0 0
    %408 = vmatpush2.bf16.msra.mxu0 0
    %409 = vmatprep.subr.bf16.mxu0 0
    %410 = vmatpush2.bf16.msra.mxu0 0
    %411 = vmatprep.subr.bf16.mxu0 0
    %412 = vmatpush2.bf16.msra.mxu0 0
    %413 = vmatprep.subr.bf16.mxu0 0
    %414 = vmatpush2.bf16.msra.mxu0 0
    %415 = vmatprep.subr.bf16.mxu0 0
    %416 = vmatpush2.bf16.msra.mxu0 0
    %417 = vmatprep.subr.bf16.mxu0 0
    %418 = vmatpush2.bf16.msra.mxu0 0
    %419 = vmatprep.mubr.bf16.mxu0 0
    %420 = vmatmul.mubr.bf16.gmra.mxu0 0
    %v421 = vpop.f32.mrf.mxu0
    %v422 = vadd.f32 0.0, %v421
    %v423 = vpop.f32.mrf.mxu0
    %v424 = vadd.f32 0.0, %v423
    %v425 = vpop.f32.mrf.mxu0
    %v426 = vpop.f32.mrf.mxu0
    %427 = vdwg.mxu0
    %v428 = vadd.f32 %v182, %v381
    %v429 = vadd.f32 %v183, %v383
    %v430 = vadd.f32 %v184, %v422
    %v431 = vadd.f32 %v185, %v424
    %v432 = vxor.u32 %v428, 2147483648
    %v433 = vxor.u32 %v429, 2147483648
    %v434 = vmul.f32 %v432, 1.442695
    %v435 = vpow.pop %v434
    %v436 = vmul.f32 %v433, 1.442695
    %v437 = vpow.pop %v436
    %v438 = vadd.f32 %v435, 1.0
    %v439 = vadd.f32 %v437, 1.0
    %v440 = vrcp.pop %v438
    %v441 = vmul.f32 1.0, %v440
    %v442 = vrcp.pop %v439
    %v443 = vmul.f32 1.0, %v442
    %v444 = vtanh.pop %v430
    %v445 = vxor.u32 %v431, 2147483648
    %v446 = vmul.f32 %v445, 1.442695
    %v447 = vpow.pop %v446
    %v448 = vadd.f32 %v447, 1.0
    %v449 = vrcp.pop %v448
    %v450 = vmul.f32 1.0, %v449
    %v451 = vmul.f32 %v443, 0.0
    %v452 = vmul.f32 %v441, %v444
    %v453 = vadd.f32 %v451, %v452
    %v454 = vtanh.pop %v453
    %v455 = vmul.f32 %v450, %v454
    %v456 = vmax.f32 %v455, 0.0
    %s457 = smul.u32 4, 16
    %s458 = smul.u32 %s457, 4
    %s459 = sshll.u32 %s458, 4
    %460 = dma.done [#allocation4], %s459
    %s461 = sshll.u32 %s458, 4
    %462 = dma.done %s62, %s461
    %v463 = vpack.c.bf16 %v456, %v456
    %v464 = vld [vmem:[#allocation2] sm:$0xff]
    %v465 = vld [vmem:[#allocation2 + $0x8] sm:$0xff]
    %v466 = vld [vmem:[#allocation2 + $0x10] sm:$0xff]
    %v467 = vld [vmem:[#allocation2 + $0x18] sm:$0xff]
    %v468 = vld [vmem:[#allocation2 + $0x20] sm:$0xff]
    %v469 = vld [vmem:[#allocation2 + $0x28] sm:$0xff]
    %v470 = vld [vmem:[#allocation2 + $0x30] sm:$0xff]
    %v471 = vld [vmem:[#allocation2 + $0x38] sm:$0xff]
    %v472 = vld [vmem:[#allocation2 + $0x40] sm:$0xff]
    %v473 = vld [vmem:[#allocation2 + $0x48] sm:$0xff]
    %v474 = vld [vmem:[#allocation2 + $0x50] sm:$0xff]
    %v475 = vld [vmem:[#allocation2 + $0x58] sm:$0xff]
    %v476 = vld [vmem:[#allocation2 + $0x60] sm:$0xff]
    %v477 = vld [vmem:[#allocation2 + $0x68] sm:$0xff]
    %v478 = vld [vmem:[#allocation2 + $0x70] sm:$0xff]
    %v479 = vld [vmem:[#allocation2 + $0x78] sm:$0xff]
    %v480 = vld [vmem:[#allocation2 + $0x80] sm:$0xff]
    %v481 = vld [vmem:[#allocation2 + $0x88] sm:$0xff]
    %v482 = vld [vmem:[#allocation2 + $0x90] sm:$0xff]
    %v483 = vld [vmem:[#allocation2 + $0x98] sm:$0xff]
    %v484 = vld [vmem:[#allocation2 + $0xa0] sm:$0xff]
    %v485 = vld [vmem:[#allocation2 + $0xa8] sm:$0xff]
    %v486 = vld [vmem:[#allocation2 + $0xb0] sm:$0xff]
    %v487 = vld [vmem:[#allocation2 + $0xb8] sm:$0xff]
    %v488 = vld [vmem:[#allocation2 + $0xc0] sm:$0xff]
    %v489 = vld [vmem:[#allocation2 + $0xc8] sm:$0xff]
    %v490 = vld [vmem:[#allocation2 + $0xd0] sm:$0xff]
    %v491 = vld [vmem:[#allocation2 + $0xd8] sm:$0xff]
    %v492 = vld [vmem:[#allocation2 + $0xe0] sm:$0xff]
    %v493 = vld [vmem:[#allocation2 + $0xe8] sm:$0xff]
    %v494 = vld [vmem:[#allocation2 + $0xf0] sm:$0xff]
    %v495 = vld [vmem:[#allocation2 + $0xf8] sm:$0xff]
    %v528 = vunpack.c.l.b16 %v464
    %v529 = vunpack.c.h.b16 %v464
    %v530 = vunpack.c.l.b16 %v465
    %v531 = vunpack.c.h.b16 %v465
    %v532 = vunpack.c.l.b16 %v466
    %v533 = vunpack.c.h.b16 %v466
    %v534 = vunpack.c.l.b16 %v467
    %v535 = vunpack.c.h.b16 %v467
    %v536 = vunpack.c.l.b16 %v468
    %v537 = vunpack.c.h.b16 %v468
    %v538 = vunpack.c.l.b16 %v469
    %v539 = vunpack.c.h.b16 %v469
    %v540 = vunpack.c.l.b16 %v470
    %v541 = vunpack.c.h.b16 %v470
    %v542 = vunpack.c.l.b16 %v471
    %v543 = vunpack.c.h.b16 %v471
    %v544 = vunpack.c.l.b16 %v472
    %v545 = vunpack.c.h.b16 %v472
    %v546 = vunpack.c.l.b16 %v473
    %v547 = vunpack.c.h.b16 %v473
    %v548 = vunpack.c.l.b16 %v474
    %v549 = vunpack.c.h.b16 %v474
    %v550 = vunpack.c.l.b16 %v475
    %v551 = vunpack.c.h.b16 %v475
    %v552 = vunpack.c.l.b16 %v476
    %v553 = vunpack.c.h.b16 %v476
    %v554 = vunpack.c.l.b16 %v477
    %v555 = vunpack.c.h.b16 %v477
    %v556 = vunpack.c.l.b16 %v478
    %v557 = vunpack.c.h.b16 %v478
    %v558 = vunpack.c.l.b16 %v479
    %v559 = vunpack.c.h.b16 %v479
    %v560 = vunpack.c.l.b16 %v480
    %v561 = vunpack.c.h.b16 %v480
    %v562 = vunpack.c.l.b16 %v481
    %v563 = vunpack.c.h.b16 %v481
    %v564 = vunpack.c.l.b16 %v482
    %v565 = vunpack.c.h.b16 %v482
    %v566 = vunpack.c.l.b16 %v483
    %v567 = vunpack.c.h.b16 %v483
    %v568 = vunpack.c.l.b16 %v484
    %v569 = vunpack.c.h.b16 %v484
    %v570 = vunpack.c.l.b16 %v485
    %v571 = vunpack.c.h.b16 %v485
    %v572 = vunpack.c.l.b16 %v486
    %v573 = vunpack.c.h.b16 %v486
    %v574 = vunpack.c.l.b16 %v487
    %v575 = vunpack.c.h.b16 %v487
    %v576 = vunpack.c.l.b16 %v488
    %v577 = vunpack.c.h.b16 %v488
    %v578 = vunpack.c.l.b16 %v489
    %v579 = vunpack.c.h.b16 %v489
    %v580 = vunpack.c.l.b16 %v490
    %v581 = vunpack.c.h.b16 %v490
    %v582 = vunpack.c.l.b16 %v491
    %v583 = vunpack.c.h.b16 %v491
    %v584 = vunpack.c.l.b16 %v492
    %v585 = vunpack.c.h.b16 %v492
    %v586 = vunpack.c.l.b16 %v493
    %v587 = vunpack.c.h.b16 %v493
    %v588 = vunpack.c.l.b16 %v494
    %v589 = vunpack.c.h.b16 %v494
    %v590 = vunpack.c.l.b16 %v495
    %v591 = vunpack.c.h.b16 %v495
    %v592 = vpack.c.b16 %v532, %v528
    %v593 = vpack.c.b16 %v533, %v529
    %v594 = vpack.c.b16 %v534, %v530
    %v595 = vpack.c.b16 %v535, %v531
    %v596 = vpack.c.b16 %v540, %v536
    %v597 = vpack.c.b16 %v541, %v537
    %v598 = vpack.c.b16 %v542, %v538
    %v599 = vpack.c.b16 %v543, %v539
    %v600 = vpack.c.b16 %v548, %v544
    %v601 = vpack.c.b16 %v549, %v545
    %v602 = vpack.c.b16 %v550, %v546
    %v603 = vpack.c.b16 %v551, %v547
    %v604 = vpack.c.b16 %v556, %v552
    %v605 = vpack.c.b16 %v557, %v553
    %v606 = vpack.c.b16 %v558, %v554
    %v607 = vpack.c.b16 %v559, %v555
    %v608 = vpack.c.b16 %v564, %v560
    %v609 = vpack.c.b16 %v565, %v561
    %v610 = vpack.c.b16 %v566, %v562
    %v611 = vpack.c.b16 %v567, %v563
    %v612 = vpack.c.b16 %v572, %v568
    %v613 = vpack.c.b16 %v573, %v569
    %v614 = vpack.c.b16 %v574, %v570
    %v615 = vpack.c.b16 %v575, %v571
    %v616 = vpack.c.b16 %v580, %v576
    %v617 = vpack.c.b16 %v581, %v577
    %v618 = vpack.c.b16 %v582, %v578
    %v619 = vpack.c.b16 %v583, %v579
    %v620 = vpack.c.b16 %v588, %v584
    %v621 = vpack.c.b16 %v589, %v585
    %v622 = vpack.c.b16 %v590, %v586
    %v623 = vpack.c.b16 %v591, %v587
    %656 = vmatprep.subr.bf16.mxu0 %v621
    %657 = vmatpush1.bf16.msra.mxu0 %v620
    %658 = vmatprep.subr.bf16.mxu0 %v617
    %659 = vmatpush1.bf16.msra.mxu0 %v616
    %660 = vmatprep.subr.bf16.mxu0 %v613
    %661 = vmatpush1.bf16.msra.mxu0 %v612
    %662 = vmatprep.subr.bf16.mxu0 %v609
    %663 = vmatpush1.bf16.msra.mxu0 %v608
    %664 = vmatprep.subr.bf16.mxu0 %v605
    %665 = vmatpush1.bf16.msra.mxu0 %v604
    %666 = vmatprep.subr.bf16.mxu0 %v601
    %667 = vmatpush1.bf16.msra.mxu0 %v600
    %668 = vmatprep.subr.bf16.mxu0 %v597
    %669 = vmatpush1.bf16.msra.mxu0 %v596
    %670 = vmatprep.subr.bf16.mxu0 %v593
    %671 = vmatpush1.bf16.msra.mxu0 %v592
    %672 = vmatprep.subr.bf16.mxu0 0
    %673 = vmatpush2.bf16.msra.mxu0 0
    %674 = vmatprep.subr.bf16.mxu0 0
    %675 = vmatpush2.bf16.msra.mxu0 0
    %676 = vmatprep.subr.bf16.mxu0 0
    %677 = vmatpush2.bf16.msra.mxu0 0
    %678 = vmatprep.subr.bf16.mxu0 0
    %679 = vmatpush2.bf16.msra.mxu0 0
    %680 = vmatprep.subr.bf16.mxu0 0
    %681 = vmatpush2.bf16.msra.mxu0 0
    %682 = vmatprep.subr.bf16.mxu0 0
    %683 = vmatpush2.bf16.msra.mxu0 0
    %684 = vmatprep.subr.bf16.mxu0 0
    %685 = vmatpush2.bf16.msra.mxu0 0
    %686 = vmatprep.subr.bf16.mxu0 0
    %687 = vmatpush2.bf16.msra.mxu0 0
    %688 = vmatprep.mubr.bf16.mxu0 0
    %689 = vmatmul.mubr.bf16.gmra.mxu0 %v463
    %v690 = vpop.f32.mrf.mxu0
    %v691 = vadd.f32 %v123, %v690
    %v692 = vpop.f32.mrf.mxu0
    %v693 = vadd.f32 %v127, %v692
    %v694 = vpop.f32.mrf.mxu0
    %v695 = vpop.f32.mrf.mxu0
    %696 = vdwg.mxu0
    %697 = vmatprep.subr.bf16.mxu0 %v623
    %698 = vmatpush1.bf16.msra.mxu0 %v622
    %699 = vmatprep.subr.bf16.mxu0 %v619
    %700 = vmatpush1.bf16.msra.mxu0 %v618
    %701 = vmatprep.subr.bf16.mxu0 %v615
    %702 = vmatpush1.bf16.msra.mxu0 %v614
    %703 = vmatprep.subr.bf16.mxu0 %v611
    %704 = vmatpush1.bf16.msra.mxu0 %v610
    %705 = vmatprep.subr.bf16.mxu0 %v607
    %706 = vmatpush1.bf16.msra.mxu0 %v606
    %707 = vmatprep.subr.bf16.mxu0 %v603
    %708 = vmatpush1.bf16.msra.mxu0 %v602
    %709 = vmatprep.subr.bf16.mxu0 %v599
    %710 = vmatpush1.bf16.msra.mxu0 %v598
    %711 = vmatprep.subr.bf16.mxu0 %v595
    %712 = vmatpush1.bf16.msra.mxu0 %v594
    %713 = vmatprep.subr.bf16.mxu0 0
    %714 = vmatpush2.bf16.msra.mxu0 0
    %715 = vmatprep.subr.bf16.mxu0 0
    %716 = vmatpush2.bf16.msra.mxu0 0
    %717 = vmatprep.subr.bf16.mxu0 0
    %718 = vmatpush2.bf16.msra.mxu0 0
    %719 = vmatprep.subr.bf16.mxu0 0
    %720 = vmatpush2.bf16.msra.mxu0 0
    %721 = vmatprep.subr.bf16.mxu0 0
    %722 = vmatpush2.bf16.msra.mxu0 0
    %723 = vmatprep.subr.bf16.mxu0 0
    %724 = vmatpush2.bf16.msra.mxu0 0
    %725 = vmatprep.subr.bf16.mxu0 0
    %726 = vmatpush2.bf16.msra.mxu0 0
    %727 = vmatprep.subr.bf16.mxu0 0
    %728 = vmatpush2.bf16.msra.mxu0 0
    %729 = vmatprep.mubr.bf16.mxu0 0
    %730 = vmatmul.mubr.bf16.gmra.mxu0 %v463
    %v731 = vpop.f32.mrf.mxu0
    %v732 = vadd.f32 %v131, %v731
    %v733 = vpop.f32.mrf.mxu0
    %v734 = vadd.f32 %v135, %v733
    %v735 = vpop.f32.mrf.mxu0
    %v736 = vpop.f32.mrf.mxu0
    %737 = vdwg.mxu0
    %v738 = vxor.u32 %v691, 2147483648
    %v739 = vxor.u32 %v693, 2147483648
    %v740 = vmul.f32 %v738, 1.442695
    %v741 = vpow.pop %v740
    %v742 = vmul.f32 %v739, 1.442695
    %v743 = vpow.pop %v742
    %v744 = vadd.f32 %v741, 1.0
    %v745 = vadd.f32 %v743, 1.0
    %v746 = vrcp.pop %v744
    %v747 = vmul.f32 1.0, %v746
    %v748 = vrcp.pop %v745
    %v749 = vmul.f32 1.0, %v748
    %v750 = vtanh.pop %v732
    %v751 = vxor.u32 %v734, 2147483648
    %v752 = vmul.f32 %v751, 1.442695
    %v753 = vpow.pop %v752
    %v754 = vadd.f32 %v753, 1.0
    %v755 = vrcp.pop %v754
    %v756 = vmul.f32 1.0, %v755
    %v757 = vmul.f32 %v749, 0.0
    %v758 = vmul.f32 %v747, %v750
    %v759 = vadd.f32 %v757, %v758
    %v760 = vtanh.pop %v759
    %v761 = vmul.f32 %v756, %v760
    %v762 = vpack.c.bf16 %v761, %v761
    %v763 = vld [vmem:[#allocation3] sm:$0xff]
    %v764 = vld [vmem:[#allocation3 + $0x8] sm:$0xff]
    %v765 = vld [vmem:[#allocation3 + $0x10] sm:$0xff]
    %v766 = vld [vmem:[#allocation3 + $0x18] sm:$0xff]
    %v767 = vld [vmem:[#allocation3 + $0x20] sm:$0xff]
    %v768 = vld [vmem:[#allocation3 + $0x28] sm:$0xff]
    %v769 = vld [vmem:[#allocation3 + $0x30] sm:$0xff]
    %v770 = vld [vmem:[#allocation3 + $0x38] sm:$0xff]
    %v771 = vld [vmem:[#allocation3 + $0x40] sm:$0xff]
    %v772 = vld [vmem:[#allocation3 + $0x48] sm:$0xff]
    %v773 = vld [vmem:[#allocation3 + $0x50] sm:$0xff]
    %v774 = vld [vmem:[#allocation3 + $0x58] sm:$0xff]
    %v775 = vld [vmem:[#allocation3 + $0x60] sm:$0xff]
    %v776 = vld [vmem:[#allocation3 + $0x68] sm:$0xff]
    %v777 = vld [vmem:[#allocation3 + $0x70] sm:$0xff]
    %v778 = vld [vmem:[#allocation3 + $0x78] sm:$0xff]
    %v779 = vld [vmem:[#allocation3 + $0x80] sm:$0xff]
    %v780 = vld [vmem:[#allocation3 + $0x88] sm:$0xff]
    %v781 = vld [vmem:[#allocation3 + $0x90] sm:$0xff]
    %v782 = vld [vmem:[#allocation3 + $0x98] sm:$0xff]
    %v783 = vld [vmem:[#allocation3 + $0xa0] sm:$0xff]
    %v784 = vld [vmem:[#allocation3 + $0xa8] sm:$0xff]
    %v785 = vld [vmem:[#allocation3 + $0xb0] sm:$0xff]
    %v786 = vld [vmem:[#allocation3 + $0xb8] sm:$0xff]
    %v787 = vld [vmem:[#allocation3 + $0xc0] sm:$0xff]
    %v788 = vld [vmem:[#allocation3 + $0xc8] sm:$0xff]
    %v789 = vld [vmem:[#allocation3 + $0xd0] sm:$0xff]
    %v790 = vld [vmem:[#allocation3 + $0xd8] sm:$0xff]
    %v791 = vld [vmem:[#allocation3 + $0xe0] sm:$0xff]
    %v792 = vld [vmem:[#allocation3 + $0xe8] sm:$0xff]
    %v793 = vld [vmem:[#allocation3 + $0xf0] sm:$0xff]
    %v794 = vld [vmem:[#allocation3 + $0xf8] sm:$0xff]
    %v827 = vunpack.c.l.b16 %v763
    %v828 = vunpack.c.h.b16 %v763
    %v829 = vunpack.c.l.b16 %v764
    %v830 = vunpack.c.h.b16 %v764
    %v831 = vunpack.c.l.b16 %v765
    %v832 = vunpack.c.h.b16 %v765
    %v833 = vunpack.c.l.b16 %v766
    %v834 = vunpack.c.h.b16 %v766
    %v835 = vunpack.c.l.b16 %v767
    %v836 = vunpack.c.h.b16 %v767
    %v837 = vunpack.c.l.b16 %v768
    %v838 = vunpack.c.h.b16 %v768
    %v839 = vunpack.c.l.b16 %v769
    %v840 = vunpack.c.h.b16 %v769
    %v841 = vunpack.c.l.b16 %v770
    %v842 = vunpack.c.h.b16 %v770
    %v843 = vunpack.c.l.b16 %v771
    %v844 = vunpack.c.h.b16 %v771
    %v845 = vunpack.c.l.b16 %v772
    %v846 = vunpack.c.h.b16 %v772
    %v847 = vunpack.c.l.b16 %v773
    %v848 = vunpack.c.h.b16 %v773
    %v849 = vunpack.c.l.b16 %v774
    %v850 = vunpack.c.h.b16 %v774
    %v851 = vunpack.c.l.b16 %v775
    %v852 = vunpack.c.h.b16 %v775
    %v853 = vunpack.c.l.b16 %v776
    %v854 = vunpack.c.h.b16 %v776
    %v855 = vunpack.c.l.b16 %v777
    %v856 = vunpack.c.h.b16 %v777
    %v857 = vunpack.c.l.b16 %v778
    %v858 = vunpack.c.h.b16 %v778
    %v859 = vunpack.c.l.b16 %v779
    %v860 = vunpack.c.h.b16 %v779
    %v861 = vunpack.c.l.b16 %v780
    %v862 = vunpack.c.h.b16 %v780
    %v863 = vunpack.c.l.b16 %v781
    %v864 = vunpack.c.h.b16 %v781
    %v865 = vunpack.c.l.b16 %v782
    %v866 = vunpack.c.h.b16 %v782
    %v867 = vunpack.c.l.b16 %v783
    %v868 = vunpack.c.h.b16 %v783
    %v869 = vunpack.c.l.b16 %v784
    %v870 = vunpack.c.h.b16 %v784
    %v871 = vunpack.c.l.b16 %v785
    %v872 = vunpack.c.h.b16 %v785
    %v873 = vunpack.c.l.b16 %v786
    %v874 = vunpack.c.h.b16 %v786
    %v875 = vunpack.c.l.b16 %v787
    %v876 = vunpack.c.h.b16 %v787
    %v877 = vunpack.c.l.b16 %v788
    %v878 = vunpack.c.h.b16 %v788
    %v879 = vunpack.c.l.b16 %v789
    %v880 = vunpack.c.h.b16 %v789
    %v881 = vunpack.c.l.b16 %v790
    %v882 = vunpack.c.h.b16 %v790
    %v883 = vunpack.c.l.b16 %v791
    %v884 = vunpack.c.h.b16 %v791
    %v885 = vunpack.c.l.b16 %v792
    %v886 = vunpack.c.h.b16 %v792
    %v887 = vunpack.c.l.b16 %v793
    %v888 = vunpack.c.h.b16 %v793
    %v889 = vunpack.c.l.b16 %v794
    %v890 = vunpack.c.h.b16 %v794
    %v891 = vpack.c.b16 %v831, %v827
    %v892 = vpack.c.b16 %v832, %v828
    %v893 = vpack.c.b16 %v833, %v829
    %v894 = vpack.c.b16 %v834, %v830
    %v895 = vpack.c.b16 %v839, %v835
    %v896 = vpack.c.b16 %v840, %v836
    %v897 = vpack.c.b16 %v841, %v837
    %v898 = vpack.c.b16 %v842, %v838
    %v899 = vpack.c.b16 %v847, %v843
    %v900 = vpack.c.b16 %v848, %v844
    %v901 = vpack.c.b16 %v849, %v845
    %v902 = vpack.c.b16 %v850, %v846
    %v903 = vpack.c.b16 %v855, %v851
    %v904 = vpack.c.b16 %v856, %v852
    %v905 = vpack.c.b16 %v857, %v853
    %v906 = vpack.c.b16 %v858, %v854
    %v907 = vpack.c.b16 %v863, %v859
    %v908 = vpack.c.b16 %v864, %v860
    %v909 = vpack.c.b16 %v865, %v861
    %v910 = vpack.c.b16 %v866, %v862
    %v911 = vpack.c.b16 %v871, %v867
    %v912 = vpack.c.b16 %v872, %v868
    %v913 = vpack.c.b16 %v873, %v869
    %v914 = vpack.c.b16 %v874, %v870
    %v915 = vpack.c.b16 %v879, %v875
    %v916 = vpack.c.b16 %v880, %v876
    %v917 = vpack.c.b16 %v881, %v877
    %v918 = vpack.c.b16 %v882, %v878
    %v919 = vpack.c.b16 %v887, %v883
    %v920 = vpack.c.b16 %v888, %v884
    %v921 = vpack.c.b16 %v889, %v885
    %v922 = vpack.c.b16 %v890, %v886
    %955 = vmatprep.subr.bf16.mxu0 %v920
    %956 = vmatpush1.bf16.msra.mxu0 %v919
    %957 = vmatprep.subr.bf16.mxu0 %v916
    %958 = vmatpush1.bf16.msra.mxu0 %v915
    %959 = vmatprep.subr.bf16.mxu0 %v912
    %960 = vmatpush1.bf16.msra.mxu0 %v911
    %961 = vmatprep.subr.bf16.mxu0 %v908
    %962 = vmatpush1.bf16.msra.mxu0 %v907
    %963 = vmatprep.subr.bf16.mxu0 %v904
    %964 = vmatpush1.bf16.msra.mxu0 %v903
    %965 = vmatprep.subr.bf16.mxu0 %v900
    %966 = vmatpush1.bf16.msra.mxu0 %v899
    %967 = vmatprep.subr.bf16.mxu0 %v896
    %968 = vmatpush1.bf16.msra.mxu0 %v895
    %969 = vmatprep.subr.bf16.mxu0 %v892
    %970 = vmatpush1.bf16.msra.mxu0 %v891
    %971 = vmatprep.subr.bf16.mxu0 0
    %972 = vmatpush2.bf16.msra.mxu0 0
    %973 = vmatprep.subr.bf16.mxu0 0
    %974 = vmatpush2.bf16.msra.mxu0 0
    %975 = vmatprep.subr.bf16.mxu0 0
    %976 = vmatpush2.bf16.msra.mxu0 0
    %977 = vmatprep.subr.bf16.mxu0 0
    %978 = vmatpush2.bf16.msra.mxu0 0
    %979 = vmatprep.subr.bf16.mxu0 0
    %980 = vmatpush2.bf16.msra.mxu0 0
    %981 = vmatprep.subr.bf16.mxu0 0
    %982 = vmatpush2.bf16.msra.mxu0 0
    %983 = vmatprep.subr.bf16.mxu0 0
    %984 = vmatpush2.bf16.msra.mxu0 0
    %985 = vmatprep.subr.bf16.mxu0 0
    %986 = vmatpush2.bf16.msra.mxu0 0
    %987 = vmatprep.mubr.bf16.mxu0 0
    %988 = vmatmul.mubr.bf16.gmra.mxu0 %v762
    %v989 = vpop.f32.mrf.mxu0
    %v990 = vadd.f32 %v123, %v989
    %v991 = vpop.f32.mrf.mxu0
    %v992 = vadd.f32 %v127, %v991
    %v993 = vpop.f32.mrf.mxu0
    %v994 = vpop.f32.mrf.mxu0
    %995 = vdwg.mxu0
    %996 = vmatprep.subr.bf16.mxu0 %v922
    %997 = vmatpush1.bf16.msra.mxu0 %v921
    %998 = vmatprep.subr.bf16.mxu0 %v918
    %999 = vmatpush1.bf16.msra.mxu0 %v917
    %1000 = vmatprep.subr.bf16.mxu0 %v914
    %1001 = vmatpush1.bf16.msra.mxu0 %v913
    %1002 = vmatprep.subr.bf16.mxu0 %v910
    %1003 = vmatpush1.bf16.msra.mxu0 %v909
    %1004 = vmatprep.subr.bf16.mxu0 %v906
    %1005 = vmatpush1.bf16.msra.mxu0 %v905
    %1006 = vmatprep.subr.bf16.mxu0 %v902
    %1007 = vmatpush1.bf16.msra.mxu0 %v901
    %1008 = vmatprep.subr.bf16.mxu0 %v898
    %1009 = vmatpush1.bf16.msra.mxu0 %v897
    %1010 = vmatprep.subr.bf16.mxu0 %v894
    %1011 = vmatpush1.bf16.msra.mxu0 %v893
    %1012 = vmatprep.subr.bf16.mxu0 0
    %1013 = vmatpush2.bf16.msra.mxu0 0
    %1014 = vmatprep.subr.bf16.mxu0 0
    %1015 = vmatpush2.bf16.msra.mxu0 0
    %1016 = vmatprep.subr.bf16.mxu0 0
    %1017 = vmatpush2.bf16.msra.mxu0 0
    %1018 = vmatprep.subr.bf16.mxu0 0
    %1019 = vmatpush2.bf16.msra.mxu0 0
    %1020 = vmatprep.subr.bf16.mxu0 0
    %1021 = vmatpush2.bf16.msra.mxu0 0
    %1022 = vmatprep.subr.bf16.mxu0 0
    %1023 = vmatpush2.bf16.msra.mxu0 0
    %1024 = vmatprep.subr.bf16.mxu0 0
    %1025 = vmatpush2.bf16.msra.mxu0 0
    %1026 = vmatprep.subr.bf16.mxu0 0
    %1027 = vmatpush2.bf16.msra.mxu0 0
    %1028 = vmatprep.mubr.bf16.mxu0 0
    %1029 = vmatmul.mubr.bf16.gmra.mxu0 %v762
    %v1030 = vpop.f32.mrf.mxu0
    %v1031 = vadd.f32 %v131, %v1030
    %v1032 = vpop.f32.mrf.mxu0
    %v1033 = vadd.f32 %v135, %v1032
    %v1034 = vpop.f32.mrf.mxu0
    %v1035 = vpop.f32.mrf.mxu0
    %1036 = vdwg.mxu0
    %s1037 = scalar_lea.vmem %s0, 2
    %v1038 = vld [vmem:[%s1037] sm:$0x3]
    %1040 = vset.pattern.permute.xlu0 0
    %1041 = vperm.xlu0 %1040, %v1038
    %v1042 = vpop.permute.xlu0 %1041
    %v1044 = vmul.f32 %v1042, %v79
    %v1045 = vmul.f32 %v1042, %v83
    %v1046 = vmul.f32 %v1042, %v87
    %v1047 = vmul.f32 %v1042, %v91
    %v1048 = vadd.f32 %v1044, %v101
    %v1049 = vadd.f32 %v1045, %v105
    %v1050 = vadd.f32 %v1046, %v109
    %v1051 = vadd.f32 %v1047, %v113
    %v1052 = vpack.c.bf16 %v455, %v455
    %1053 = vmatprep.subr.bf16.mxu0 %v311
    %1054 = vmatpush1.bf16.msra.mxu0 %v310
    %1055 = vmatprep.subr.bf16.mxu0 %v307
    %1056 = vmatpush1.bf16.msra.mxu0 %v306
    %1057 = vmatprep.subr.bf16.mxu0 %v303
    %1058 = vmatpush1.bf16.msra.mxu0 %v302
    %1059 = vmatprep.subr.bf16.mxu0 %v299
    %1060 = vmatpush1.bf16.msra.mxu0 %v298
    %1061 = vmatprep.subr.bf16.mxu0 %v295
    %1062 = vmatpush1.bf16.msra.mxu0 %v294
    %1063 = vmatprep.subr.bf16.mxu0 %v291
    %1064 = vmatpush1.bf16.msra.mxu0 %v290
    %1065 = vmatprep.subr.bf16.mxu0 %v287
    %1066 = vmatpush1.bf16.msra.mxu0 %v286
    %1067 = vmatprep.subr.bf16.mxu0 %v283
    %1068 = vmatpush1.bf16.msra.mxu0 %v282
    %1069 = vmatprep.subr.bf16.mxu0 0
    %1070 = vmatpush2.bf16.msra.mxu0 0
    %1071 = vmatprep.subr.bf16.mxu0 0
    %1072 = vmatpush2.bf16.msra.mxu0 0
    %1073 = vmatprep.subr.bf16.mxu0 0
    %1074 = vmatpush2.bf16.msra.mxu0 0
    %1075 = vmatprep.subr.bf16.mxu0 0
    %1076 = vmatpush2.bf16.msra.mxu0 0
    %1077 = vmatprep.subr.bf16.mxu0 0
    %1078 = vmatpush2.bf16.msra.mxu0 0
    %1079 = vmatprep.subr.bf16.mxu0 0
    %1080 = vmatpush2.bf16.msra.mxu0 0
    %1081 = vmatprep.subr.bf16.mxu0 0
    %1082 = vmatpush2.bf16.msra.mxu0 0
    %1083 = vmatprep.subr.bf16.mxu0 0
    %1084 = vmatpush2.bf16.msra.mxu0 0
    %1085 = vmatprep.mubr.bf16.mxu0 0
    %1086 = vmatmul.mubr.bf16.gmra.mxu0 %v1052
    %v1087 = vpop.f32.mrf.mxu0
    %v1088 = vadd.f32 0.0, %v1087
    %v1089 = vpop.f32.mrf.mxu0
    %v1090 = vadd.f32 0.0, %v1089
    %v1091 = vpop.f32.mrf.mxu0
    %v1092 = vpop.f32.mrf.mxu0
    %1093 = vdwg.mxu0
    %1094 = vmatprep.subr.bf16.mxu0 %v313
    %1095 = vmatpush1.bf16.msra.mxu0 %v312
    %1096 = vmatprep.subr.bf16.mxu0 %v309
    %1097 = vmatpush1.bf16.msra.mxu0 %v308
    %1098 = vmatprep.subr.bf16.mxu0 %v305
    %1099 = vmatpush1.bf16.msra.mxu0 %v304
    %1100 = vmatprep.subr.bf16.mxu0 %v301
    %1101 = vmatpush1.bf16.msra.mxu0 %v300
    %1102 = vmatprep.subr.bf16.mxu0 %v297
    %1103 = vmatpush1.bf16.msra.mxu0 %v296
    %1104 = vmatprep.subr.bf16.mxu0 %v293
    %1105 = vmatpush1.bf16.msra.mxu0 %v292
    %1106 = vmatprep.subr.bf16.mxu0 %v289
    %1107 = vmatpush1.bf16.msra.mxu0 %v288
    %1108 = vmatprep.subr.bf16.mxu0 %v285
    %1109 = vmatpush1.bf16.msra.mxu0 %v284
    %1110 = vmatprep.subr.bf16.mxu0 0
    %1111 = vmatpush2.bf16.msra.mxu0 0
    %1112 = vmatprep.subr.bf16.mxu0 0
    %1113 = vmatpush2.bf16.msra.mxu0 0
    %1114 = vmatprep.subr.bf16.mxu0 0
    %1115 = vmatpush2.bf16.msra.mxu0 0
    %1116 = vmatprep.subr.bf16.mxu0 0
    %1117 = vmatpush2.bf16.msra.mxu0 0
    %1118 = vmatprep.subr.bf16.mxu0 0
    %1119 = vmatpush2.bf16.msra.mxu0 0
    %1120 = vmatprep.subr.bf16.mxu0 0
    %1121 = vmatpush2.bf16.msra.mxu0 0
    %1122 = vmatprep.subr.bf16.mxu0 0
    %1123 = vmatpush2.bf16.msra.mxu0 0
    %1124 = vmatprep.subr.bf16.mxu0 0
    %1125 = vmatpush2.bf16.msra.mxu0 0
    %1126 = vmatprep.mubr.bf16.mxu0 0
    %1127 = vmatmul.mubr.bf16.gmra.mxu0 %v1052
    %v1128 = vpop.f32.mrf.mxu0
    %v1129 = vadd.f32 0.0, %v1128
    %v1130 = vpop.f32.mrf.mxu0
    %v1131 = vadd.f32 0.0, %v1130
    %v1132 = vpop.f32.mrf.mxu0
    %v1133 = vpop.f32.mrf.mxu0
    %1134 = vdwg.mxu0
    %v1135 = vadd.f32 %v1048, %v1088
    %v1136 = vadd.f32 %v1049, %v1090
    %v1137 = vadd.f32 %v1050, %v1129
    %v1138 = vadd.f32 %v1051, %v1131
    %v1139 = vxor.u32 %v1135, 2147483648
    %v1140 = vxor.u32 %v1136, 2147483648
    %v1141 = vmul.f32 %v1139, 1.442695
    %v1142 = vpow.pop %v1141
    %v1143 = vmul.f32 %v1140, 1.442695
    %v1144 = vpow.pop %v1143
    %v1145 = vadd.f32 %v1142, 1.0
    %v1146 = vadd.f32 %v1144, 1.0
    %v1147 = vrcp.pop %v1145
    %v1148 = vmul.f32 1.0, %v1147
    %v1149 = vrcp.pop %v1146
    %v1150 = vmul.f32 1.0, %v1149
    %v1151 = vtanh.pop %v1137
    %v1152 = vxor.u32 %v1138, 2147483648
    %v1153 = vmul.f32 %v1152, 1.442695
    %v1154 = vpow.pop %v1153
    %v1155 = vadd.f32 %v1154, 1.0
    %v1156 = vrcp.pop %v1155
    %v1157 = vmul.f32 1.0, %v1156
    %v1158 = vmul.f32 %v1150, %v453
    %v1159 = vmul.f32 %v1148, %v1151
    %v1160 = vadd.f32 %v1158, %v1159
    %v1161 = vtanh.pop %v1160
    %v1162 = vmul.f32 %v1157, %v1161
    %v1163 = vmax.f32 %v1162, 0.0
    %v1164 = vpack.c.bf16 %v1163, %v1163
    %1165 = vmatprep.subr.bf16.mxu0 %v621
    %1166 = vmatpush1.bf16.msra.mxu0 %v620
    %1167 = vmatprep.subr.bf16.mxu0 %v617
    %1168 = vmatpush1.bf16.msra.mxu0 %v616
    %1169 = vmatprep.subr.bf16.mxu0 %v613
    %1170 = vmatpush1.bf16.msra.mxu0 %v612
    %1171 = vmatprep.subr.bf16.mxu0 %v609
    %1172 = vmatpush1.bf16.msra.mxu0 %v608
    %1173 = vmatprep.subr.bf16.mxu0 %v605
    %1174 = vmatpush1.bf16.msra.mxu0 %v604
    %1175 = vmatprep.subr.bf16.mxu0 %v601
    %1176 = vmatpush1.bf16.msra.mxu0 %v600
    %1177 = vmatprep.subr.bf16.mxu0 %v597
    %1178 = vmatpush1.bf16.msra.mxu0 %v596
    %1179 = vmatprep.subr.bf16.mxu0 %v593
    %1180 = vmatpush1.bf16.msra.mxu0 %v592
    %1181 = vmatprep.subr.bf16.mxu0 0
    %1182 = vmatpush2.bf16.msra.mxu0 0
    %1183 = vmatprep.subr.bf16.mxu0 0
    %1184 = vmatpush2.bf16.msra.mxu0 0
    %1185 = vmatprep.subr.bf16.mxu0 0
    %1186 = vmatpush2.bf16.msra.mxu0 0
    %1187 = vmatprep.subr.bf16.mxu0 0
    %1188 = vmatpush2.bf16.msra.mxu0 0
    %1189 = vmatprep.subr.bf16.mxu0 0
    %1190 = vmatpush2.bf16.msra.mxu0 0
    %1191 = vmatprep.subr.bf16.mxu0 0
    %1192 = vmatpush2.bf16.msra.mxu0 0
    %1193 = vmatprep.subr.bf16.mxu0 0
    %1194 = vmatpush2.bf16.msra.mxu0 0
    %1195 = vmatprep.subr.bf16.mxu0 0
    %1196 = vmatpush2.bf16.msra.mxu0 0
    %1197 = vmatprep.mubr.bf16.mxu0 0
    %1198 = vmatmul.mubr.bf16.gmra.mxu0 %v1164
    %v1199 = vpop.f32.mrf.mxu0
    %v1200 = vadd.f32 %v990, %v1199
    %v1201 = vpop.f32.mrf.mxu0
    %v1202 = vadd.f32 %v992, %v1201
    %v1203 = vpop.f32.mrf.mxu0
    %v1204 = vpop.f32.mrf.mxu0
    %1205 = vdwg.mxu0
    %1206 = vmatprep.subr.bf16.mxu0 %v623
    %1207 = vmatpush1.bf16.msra.mxu0 %v622
    %1208 = vmatprep.subr.bf16.mxu0 %v619
    %1209 = vmatpush1.bf16.msra.mxu0 %v618
    %1210 = vmatprep.subr.bf16.mxu0 %v615
    %1211 = vmatpush1.bf16.msra.mxu0 %v614
    %1212 = vmatprep.subr.bf16.mxu0 %v611
    %1213 = vmatpush1.bf16.msra.mxu0 %v610
    %1214 = vmatprep.subr.bf16.mxu0 %v607
    %1215 = vmatpush1.bf16.msra.mxu0 %v606
    %1216 = vmatprep.subr.bf16.mxu0 %v603
    %1217 = vmatpush1.bf16.msra.mxu0 %v602
    %1218 = vmatprep.subr.bf16.mxu0 %v599
    %1219 = vmatpush1.bf16.msra.mxu0 %v598
    %1220 = vmatprep.subr.bf16.mxu0 %v595
    %1221 = vmatpush1.bf16.msra.mxu0 %v594
    %1222 = vmatprep.subr.bf16.mxu0 0
    %1223 = vmatpush2.bf16.msra.mxu0 0
    %1224 = vmatprep.subr.bf16.mxu0 0
    %1225 = vmatpush2.bf16.msra.mxu0 0
    %1226 = vmatprep.subr.bf16.mxu0 0
    %1227 = vmatpush2.bf16.msra.mxu0 0
    %1228 = vmatprep.subr.bf16.mxu0 0
    %1229 = vmatpush2.bf16.msra.mxu0 0
    %1230 = vmatprep.subr.bf16.mxu0 0
    %1231 = vmatpush2.bf16.msra.mxu0 0
    %1232 = vmatprep.subr.bf16.mxu0 0
    %1233 = vmatpush2.bf16.msra.mxu0 0
    %1234 = vmatprep.subr.bf16.mxu0 0
    %1235 = vmatpush2.bf16.msra.mxu0 0
    %1236 = vmatprep.subr.bf16.mxu0 0
    %1237 = vmatpush2.bf16.msra.mxu0 0
    %1238 = vmatprep.mubr.bf16.mxu0 0
    %1239 = vmatmul.mubr.bf16.gmra.mxu0 %v1164
    %v1240 = vpop.f32.mrf.mxu0
    %v1241 = vadd.f32 %v1031, %v1240
    %v1242 = vpop.f32.mrf.mxu0
    %v1243 = vadd.f32 %v1033, %v1242
    %v1244 = vpop.f32.mrf.mxu0
    %v1245 = vpop.f32.mrf.mxu0
    %1246 = vdwg.mxu0
    %v1247 = vxor.u32 %v1200, 2147483648
    %v1248 = vxor.u32 %v1202, 2147483648
    %v1249 = vmul.f32 %v1247, 1.442695
    %v1250 = vpow.pop %v1249
    %v1251 = vmul.f32 %v1248, 1.442695
    %v1252 = vpow.pop %v1251
    %v1253 = vadd.f32 %v1250, 1.0
    %v1254 = vadd.f32 %v1252, 1.0
    %v1255 = vrcp.pop %v1253
    %v1256 = vmul.f32 1.0, %v1255
    %v1257 = vrcp.pop %v1254
    %v1258 = vmul.f32 1.0, %v1257
    %v1259 = vtanh.pop %v1241
    %v1260 = vxor.u32 %v1243, 2147483648
    %v1261 = vmul.f32 %v1260, 1.442695
    %v1262 = vpow.pop %v1261
    %v1263 = vadd.f32 %v1262, 1.0
    %v1264 = vrcp.pop %v1263
    %v1265 = vmul.f32 1.0, %v1264
    %v1266 = vmul.f32 %v1258, %v759
    %v1267 = vmul.f32 %v1256, %v1259
    %v1268 = vadd.f32 %v1266, %v1267
    %v1269 = vtanh.pop %v1268
    %v1270 = vmul.f32 %v1265, %v1269
    %v1271 = vpack.c.bf16 %v1270, %v1270
    %1272 = vmatprep.subr.bf16.mxu0 %v920
    %1273 = vmatpush1.bf16.msra.mxu0 %v919
    %1274 = vmatprep.subr.bf16.mxu0 %v916
    %1275 = vmatpush1.bf16.msra.mxu0 %v915
    %1276 = vmatprep.subr.bf16.mxu0 %v912
    %1277 = vmatpush1.bf16.msra.mxu0 %v911
    %1278 = vmatprep.subr.bf16.mxu0 %v908
    %1279 = vmatpush1.bf16.msra.mxu0 %v907
    %1280 = vmatprep.subr.bf16.mxu0 %v904
    %1281 = vmatpush1.bf16.msra.mxu0 %v903
    %1282 = vmatprep.subr.bf16.mxu0 %v900
    %1283 = vmatpush1.bf16.msra.mxu0 %v899
    %1284 = vmatprep.subr.bf16.mxu0 %v896
    %1285 = vmatpush1.bf16.msra.mxu0 %v895
    %1286 = vmatprep.subr.bf16.mxu0 %v892
    %1287 = vmatpush1.bf16.msra.mxu0 %v891
    %1288 = vmatprep.subr.bf16.mxu0 0
    %1289 = vmatpush2.bf16.msra.mxu0 0
    %1290 = vmatprep.subr.bf16.mxu0 0
    %1291 = vmatpush2.bf16.msra.mxu0 0
    %1292 = vmatprep.subr.bf16.mxu0 0
    %1293 = vmatpush2.bf16.msra.mxu0 0
    %1294 = vmatprep.subr.bf16.mxu0 0
    %1295 = vmatpush2.bf16.msra.mxu0 0
    %1296 = vmatprep.subr.bf16.mxu0 0
    %1297 = vmatpush2.bf16.msra.mxu0 0
    %1298 = vmatprep.subr.bf16.mxu0 0
    %1299 = vmatpush2.bf16.msra.mxu0 0
    %1300 = vmatprep.subr.bf16.mxu0 0
    %1301 = vmatpush2.bf16.msra.mxu0 0
    %1302 = vmatprep.subr.bf16.mxu0 0
    %1303 = vmatpush2.bf16.msra.mxu0 0
    %1304 = vmatprep.mubr.bf16.mxu0 0
    %1305 = vmatmul.mubr.bf16.gmra.mxu0 %v1271
    %v1306 = vpop.f32.mrf.mxu0
    %v1307 = vadd.f32 %v123, %v1306
    %v1308 = vpop.f32.mrf.mxu0
    %v1309 = vadd.f32 %v127, %v1308
    %v1310 = vpop.f32.mrf.mxu0
    %v1311 = vpop.f32.mrf.mxu0
    %1312 = vdwg.mxu0
    %1313 = vmatprep.subr.bf16.mxu0 %v922
    %1314 = vmatpush1.bf16.msra.mxu0 %v921
    %1315 = vmatprep.subr.bf16.mxu0 %v918
    %1316 = vmatpush1.bf16.msra.mxu0 %v917
    %1317 = vmatprep.subr.bf16.mxu0 %v914
    %1318 = vmatpush1.bf16.msra.mxu0 %v913
    %1319 = vmatprep.subr.bf16.mxu0 %v910
    %1320 = vmatpush1.bf16.msra.mxu0 %v909
    %1321 = vmatprep.subr.bf16.mxu0 %v906
    %1322 = vmatpush1.bf16.msra.mxu0 %v905
    %1323 = vmatprep.subr.bf16.mxu0 %v902
    %1324 = vmatpush1.bf16.msra.mxu0 %v901
    %1325 = vmatprep.subr.bf16.mxu0 %v898
    %1326 = vmatpush1.bf16.msra.mxu0 %v897
    %1327 = vmatprep.subr.bf16.mxu0 %v894
    %1328 = vmatpush1.bf16.msra.mxu0 %v893
    %1329 = vmatprep.subr.bf16.mxu0 0
    %1330 = vmatpush2.bf16.msra.mxu0 0
    %1331 = vmatprep.subr.bf16.mxu0 0
    %1332 = vmatpush2.bf16.msra.mxu0 0
    %1333 = vmatprep.subr.bf16.mxu0 0
    %1334 = vmatpush2.bf16.msra.mxu0 0
    %1335 = vmatprep.subr.bf16.mxu0 0
    %1336 = vmatpush2.bf16.msra.mxu0 0
    %1337 = vmatprep.subr.bf16.mxu0 0
    %1338 = vmatpush2.bf16.msra.mxu0 0
    %1339 = vmatprep.subr.bf16.mxu0 0
    %1340 = vmatpush2.bf16.msra.mxu0 0
    %1341 = vmatprep.subr.bf16.mxu0 0
    %1342 = vmatpush2.bf16.msra.mxu0 0
    %1343 = vmatprep.subr.bf16.mxu0 0
    %1344 = vmatpush2.bf16.msra.mxu0 0
    %1345 = vmatprep.mubr.bf16.mxu0 0
    %1346 = vmatmul.mubr.bf16.gmra.mxu0 %v1271
    %v1347 = vpop.f32.mrf.mxu0
    %v1348 = vadd.f32 %v131, %v1347
    %v1349 = vpop.f32.mrf.mxu0
    %v1350 = vadd.f32 %v135, %v1349
    %v1351 = vpop.f32.mrf.mxu0
    %v1352 = vpop.f32.mrf.mxu0
    %1353 = vdwg.mxu0
    %s1354 = scalar_lea.vmem %s0, 4
    %v1355 = vld [vmem:[%s1354] sm:$0x3]
    %1357 = vset.pattern.permute.xlu0 0
    %1358 = vperm.xlu0 %1357, %v1355
    %v1359 = vpop.permute.xlu0 %1358
    %v1361 = vmul.f32 %v1359, %v79
    %v1362 = vmul.f32 %v1359, %v83
    %v1363 = vmul.f32 %v1359, %v87
    %v1364 = vmul.f32 %v1359, %v91
    %v1365 = vadd.f32 %v1361, %v101
    %v1366 = vadd.f32 %v1362, %v105
    %v1367 = vadd.f32 %v1363, %v109
    %v1368 = vadd.f32 %v1364, %v113
    %v1369 = vpack.c.bf16 %v1162, %v1162
    %1370 = vmatprep.subr.bf16.mxu0 %v311
    %1371 = vmatpush1.bf16.msra.mxu0 %v310
    %1372 = vmatprep.subr.bf16.mxu0 %v307
    %1373 = vmatpush1.bf16.msra.mxu0 %v306
    %1374 = vmatprep.subr.bf16.mxu0 %v303
    %1375 = vmatpush1.bf16.msra.mxu0 %v302
    %1376 = vmatprep.subr.bf16.mxu0 %v299
    %1377 = vmatpush1.bf16.msra.mxu0 %v298
    %1378 = vmatprep.subr.bf16.mxu0 %v295
    %1379 = vmatpush1.bf16.msra.mxu0 %v294
    %1380 = vmatprep.subr.bf16.mxu0 %v291
    %1381 = vmatpush1.bf16.msra.mxu0 %v290
    %1382 = vmatprep.subr.bf16.mxu0 %v287
    %1383 = vmatpush1.bf16.msra.mxu0 %v286
    %1384 = vmatprep.subr.bf16.mxu0 %v283
    %1385 = vmatpush1.bf16.msra.mxu0 %v282
    %1386 = vmatprep.subr.bf16.mxu0 0
    %1387 = vmatpush2.bf16.msra.mxu0 0
    %1388 = vmatprep.subr.bf16.mxu0 0
    %1389 = vmatpush2.bf16.msra.mxu0 0
    %1390 = vmatprep.subr.bf16.mxu0 0
    %1391 = vmatpush2.bf16.msra.mxu0 0
    %1392 = vmatprep.subr.bf16.mxu0 0
    %1393 = vmatpush2.bf16.msra.mxu0 0
    %1394 = vmatprep.subr.bf16.mxu0 0
    %1395 = vmatpush2.bf16.msra.mxu0 0
    %1396 = vmatprep.subr.bf16.mxu0 0
    %1397 = vmatpush2.bf16.msra.mxu0 0
    %1398 = vmatprep.subr.bf16.mxu0 0
    %1399 = vmatpush2.bf16.msra.mxu0 0
    %1400 = vmatprep.subr.bf16.mxu0 0
    %1401 = vmatpush2.bf16.msra.mxu0 0
    %1402 = vmatprep.mubr.bf16.mxu0 0
    %1403 = vmatmul.mubr.bf16.gmra.mxu0 %v1369
    %v1404 = vpop.f32.mrf.mxu0
    %v1405 = vadd.f32 0.0, %v1404
    %v1406 = vpop.f32.mrf.mxu0
    %v1407 = vadd.f32 0.0, %v1406
    %v1408 = vpop.f32.mrf.mxu0
    %v1409 = vpop.f32.mrf.mxu0
    %1410 = vdwg.mxu0
    %1411 = vmatprep.subr.bf16.mxu0 %v313
    %1412 = vmatpush1.bf16.msra.mxu0 %v312
    %1413 = vmatprep.subr.bf16.mxu0 %v309
    %1414 = vmatpush1.bf16.msra.mxu0 %v308
    %1415 = vmatprep.subr.bf16.mxu0 %v305
    %1416 = vmatpush1.bf16.msra.mxu0 %v304
    %1417 = vmatprep.subr.bf16.mxu0 %v301
    %1418 = vmatpush1.bf16.msra.mxu0 %v300
    %1419 = vmatprep.subr.bf16.mxu0 %v297
    %1420 = vmatpush1.bf16.msra.mxu0 %v296
    %1421 = vmatprep.subr.bf16.mxu0 %v293
    %1422 = vmatpush1.bf16.msra.mxu0 %v292
    %1423 = vmatprep.subr.bf16.mxu0 %v289
    %1424 = vmatpush1.bf16.msra.mxu0 %v288
    %1425 = vmatprep.subr.bf16.mxu0 %v285
    %1426 = vmatpush1.bf16.msra.mxu0 %v284
    %1427 = vmatprep.subr.bf16.mxu0 0
    %1428 = vmatpush2.bf16.msra.mxu0 0
    %1429 = vmatprep.subr.bf16.mxu0 0
    %1430 = vmatpush2.bf16.msra.mxu0 0
    %1431 = vmatprep.subr.bf16.mxu0 0
    %1432 = vmatpush2.bf16.msra.mxu0 0
    %1433 = vmatprep.subr.bf16.mxu0 0
    %1434 = vmatpush2.bf16.msra.mxu0 0
    %1435 = vmatprep.subr.bf16.mxu0 0
    %1436 = vmatpush2.bf16.msra.mxu0 0
    %1437 = vmatprep.subr.bf16.mxu0 0
    %1438 = vmatpush2.bf16.msra.mxu0 0
    %1439 = vmatprep.subr.bf16.mxu0 0
    %1440 = vmatpush2.bf16.msra.mxu0 0
    %1441 = vmatprep.subr.bf16.mxu0 0
    %1442 = vmatpush2.bf16.msra.mxu0 0
    %1443 = vmatprep.mubr.bf16.mxu0 0
    %1444 = vmatmul.mubr.bf16.gmra.mxu0 %v1369
    %v1445 = vpop.f32.mrf.mxu0
    %v1446 = vadd.f32 0.0, %v1445
    %v1447 = vpop.f32.mrf.mxu0
    %v1448 = vadd.f32 0.0, %v1447
    %v1449 = vpop.f32.mrf.mxu0
    %v1450 = vpop.f32.mrf.mxu0
    %1451 = vdwg.mxu0
    %v1452 = vadd.f32 %v1365, %v1405
    %v1453 = vadd.f32 %v1366, %v1407
    %v1454 = vadd.f32 %v1367, %v1446
    %v1455 = vadd.f32 %v1368, %v1448
    %v1456 = vxor.u32 %v1452, 2147483648
    %v1457 = vxor.u32 %v1453, 2147483648
    %v1458 = vmul.f32 %v1456, 1.442695
    %v1459 = vpow.pop %v1458
    %v1460 = vmul.f32 %v1457, 1.442695
    %v1461 = vpow.pop %v1460
    %v1462 = vadd.f32 %v1459, 1.0
    %v1463 = vadd.f32 %v1461, 1.0
    %v1464 = vrcp.pop %v1462
    %v1465 = vmul.f32 1.0, %v1464
    %v1466 = vrcp.pop %v1463
    %v1467 = vmul.f32 1.0, %v1466
    %v1468 = vtanh.pop %v1454
    %v1469 = vxor.u32 %v1455, 2147483648
    %v1470 = vmul.f32 %v1469, 1.442695
    %v1471 = vpow.pop %v1470
    %v1472 = vadd.f32 %v1471, 1.0
    %v1473 = vrcp.pop %v1472
    %v1474 = vmul.f32 1.0, %v1473
    %v1475 = vmul.f32 %v1467, %v1160
    %v1476 = vmul.f32 %v1465, %v1468
    %v1477 = vadd.f32 %v1475, %v1476
    %v1478 = vtanh.pop %v1477
    %v1479 = vmul.f32 %v1474, %v1478
    %v1480 = vmax.f32 %v1479, 0.0
    %v1481 = vpack.c.bf16 %v1480, %v1480
    %1482 = vmatprep.subr.bf16.mxu0 %v621
    %1483 = vmatpush1.bf16.msra.mxu0 %v620
    %1484 = vmatprep.subr.bf16.mxu0 %v617
    %1485 = vmatpush1.bf16.msra.mxu0 %v616
    %1486 = vmatprep.subr.bf16.mxu0 %v613
    %1487 = vmatpush1.bf16.msra.mxu0 %v612
    %1488 = vmatprep.subr.bf16.mxu0 %v609
    %1489 = vmatpush1.bf16.msra.mxu0 %v608
    %1490 = vmatprep.subr.bf16.mxu0 %v605
    %1491 = vmatpush1.bf16.msra.mxu0 %v604
    %1492 = vmatprep.subr.bf16.mxu0 %v601
    %1493 = vmatpush1.bf16.msra.mxu0 %v600
    %1494 = vmatprep.subr.bf16.mxu0 %v597
    %1495 = vmatpush1.bf16.msra.mxu0 %v596
    %1496 = vmatprep.subr.bf16.mxu0 %v593
    %1497 = vmatpush1.bf16.msra.mxu0 %v592
    %1498 = vmatprep.subr.bf16.mxu0 0
    %1499 = vmatpush2.bf16.msra.mxu0 0
    %1500 = vmatprep.subr.bf16.mxu0 0
    %1501 = vmatpush2.bf16.msra.mxu0 0
    %1502 = vmatprep.subr.bf16.mxu0 0
    %1503 = vmatpush2.bf16.msra.mxu0 0
    %1504 = vmatprep.subr.bf16.mxu0 0
    %1505 = vmatpush2.bf16.msra.mxu0 0
    %1506 = vmatprep.subr.bf16.mxu0 0
    %1507 = vmatpush2.bf16.msra.mxu0 0
    %1508 = vmatprep.subr.bf16.mxu0 0
    %1509 = vmatpush2.bf16.msra.mxu0 0
    %1510 = vmatprep.subr.bf16.mxu0 0
    %1511 = vmatpush2.bf16.msra.mxu0 0
    %1512 = vmatprep.subr.bf16.mxu0 0
    %1513 = vmatpush2.bf16.msra.mxu0 0
    %1514 = vmatprep.mubr.bf16.mxu0 0
    %1515 = vmatmul.mubr.bf16.gmra.mxu0 %v1481
    %v1516 = vpop.f32.mrf.mxu0
    %v1517 = vadd.f32 %v1307, %v1516
    %v1518 = vpop.f32.mrf.mxu0
    %v1519 = vadd.f32 %v1309, %v1518
    %v1520 = vpop.f32.mrf.mxu0
    %v1521 = vpop.f32.mrf.mxu0
    %1522 = vdwg.mxu0
    %1523 = vmatprep.subr.bf16.mxu0 %v623
    %1524 = vmatpush1.bf16.msra.mxu0 %v622
    %1525 = vmatprep.subr.bf16.mxu0 %v619
    %1526 = vmatpush1.bf16.msra.mxu0 %v618
    %1527 = vmatprep.subr.bf16.mxu0 %v615
    %1528 = vmatpush1.bf16.msra.mxu0 %v614
    %1529 = vmatprep.subr.bf16.mxu0 %v611
    %1530 = vmatpush1.bf16.msra.mxu0 %v610
    %1531 = vmatprep.subr.bf16.mxu0 %v607
    %1532 = vmatpush1.bf16.msra.mxu0 %v606
    %1533 = vmatprep.subr.bf16.mxu0 %v603
    %1534 = vmatpush1.bf16.msra.mxu0 %v602
    %1535 = vmatprep.subr.bf16.mxu0 %v599
    %1536 = vmatpush1.bf16.msra.mxu0 %v598
    %1537 = vmatprep.subr.bf16.mxu0 %v595
    %1538 = vmatpush1.bf16.msra.mxu0 %v594
    %1539 = vmatprep.subr.bf16.mxu0 0
    %1540 = vmatpush2.bf16.msra.mxu0 0
    %1541 = vmatprep.subr.bf16.mxu0 0
    %1542 = vmatpush2.bf16.msra.mxu0 0
    %1543 = vmatprep.subr.bf16.mxu0 0
    %1544 = vmatpush2.bf16.msra.mxu0 0
    %1545 = vmatprep.subr.bf16.mxu0 0
    %1546 = vmatpush2.bf16.msra.mxu0 0
    %1547 = vmatprep.subr.bf16.mxu0 0
    %1548 = vmatpush2.bf16.msra.mxu0 0
    %1549 = vmatprep.subr.bf16.mxu0 0
    %1550 = vmatpush2.bf16.msra.mxu0 0
    %1551 = vmatprep.subr.bf16.mxu0 0
    %1552 = vmatpush2.bf16.msra.mxu0 0
    %1553 = vmatprep.subr.bf16.mxu0 0
    %1554 = vmatpush2.bf16.msra.mxu0 0
    %1555 = vmatprep.mubr.bf16.mxu0 0
    %1556 = vmatmul.mubr.bf16.gmra.mxu0 %v1481
    %v1557 = vpop.f32.mrf.mxu0
    %v1558 = vadd.f32 %v1348, %v1557
    %v1559 = vpop.f32.mrf.mxu0
    %v1560 = vadd.f32 %v1350, %v1559
    %v1561 = vpop.f32.mrf.mxu0
    %v1562 = vpop.f32.mrf.mxu0
    %1563 = vdwg.mxu0
    %v1564 = vxor.u32 %v1517, 2147483648
    %v1565 = vxor.u32 %v1519, 2147483648
    %v1566 = vmul.f32 %v1564, 1.442695
    %v1567 = vpow.pop %v1566
    %v1568 = vmul.f32 %v1565, 1.442695
    %v1569 = vpow.pop %v1568
    %v1570 = vadd.f32 %v1567, 1.0
    %v1571 = vadd.f32 %v1569, 1.0
    %v1572 = vrcp.pop %v1570
    %v1573 = vmul.f32 1.0, %v1572
    %v1574 = vrcp.pop %v1571
    %v1575 = vmul.f32 1.0, %v1574
    %v1576 = vtanh.pop %v1558
    %v1577 = vxor.u32 %v1560, 2147483648
    %v1578 = vmul.f32 %v1577, 1.442695
    %v1579 = vpow.pop %v1578
    %v1580 = vadd.f32 %v1579, 1.0
    %v1581 = vrcp.pop %v1580
    %v1582 = vmul.f32 1.0, %v1581
    %v1583 = vmul.f32 %v1575, %v1268
    %v1584 = vmul.f32 %v1573, %v1576
    %v1585 = vadd.f32 %v1583, %v1584
    %v1586 = vtanh.pop %v1585
    %v1587 = vmul.f32 %v1582, %v1586
    %v1588 = vpack.c.bf16 %v1587, %v1587
    %1589 = vmatprep.subr.bf16.mxu0 %v920
    %1590 = vmatpush1.bf16.msra.mxu0 %v919
    %1591 = vmatprep.subr.bf16.mxu0 %v916
    %1592 = vmatpush1.bf16.msra.mxu0 %v915
    %1593 = vmatprep.subr.bf16.mxu0 %v912
    %1594 = vmatpush1.bf16.msra.mxu0 %v911
    %1595 = vmatprep.subr.bf16.mxu0 %v908
    %1596 = vmatpush1.bf16.msra.mxu0 %v907
    %1597 = vmatprep.subr.bf16.mxu0 %v904
    %1598 = vmatpush1.bf16.msra.mxu0 %v903
    %1599 = vmatprep.subr.bf16.mxu0 %v900
    %1600 = vmatpush1.bf16.msra.mxu0 %v899
    %1601 = vmatprep.subr.bf16.mxu0 %v896
    %1602 = vmatpush1.bf16.msra.mxu0 %v895
    %1603 = vmatprep.subr.bf16.mxu0 %v892
    %1604 = vmatpush1.bf16.msra.mxu0 %v891
    %1605 = vmatprep.subr.bf16.mxu0 0
    %1606 = vmatpush2.bf16.msra.mxu0 0
    %1607 = vmatprep.subr.bf16.mxu0 0
    %1608 = vmatpush2.bf16.msra.mxu0 0
    %1609 = vmatprep.subr.bf16.mxu0 0
    %1610 = vmatpush2.bf16.msra.mxu0 0
    %1611 = vmatprep.subr.bf16.mxu0 0
    %1612 = vmatpush2.bf16.msra.mxu0 0
    %1613 = vmatprep.subr.bf16.mxu0 0
    %1614 = vmatpush2.bf16.msra.mxu0 0
    %1615 = vmatprep.subr.bf16.mxu0 0
    %1616 = vmatpush2.bf16.msra.mxu0 0
    %1617 = vmatprep.subr.bf16.mxu0 0
    %1618 = vmatpush2.bf16.msra.mxu0 0
    %1619 = vmatprep.subr.bf16.mxu0 0
    %1620 = vmatpush2.bf16.msra.mxu0 0
    %1621 = vmatprep.mubr.bf16.mxu0 0
    %1622 = vmatmul.mubr.bf16.gmra.mxu0 %v1588
    %v1623 = vpop.f32.mrf.mxu0
    %v1624 = vadd.f32 %v123, %v1623
    %v1625 = vpop.f32.mrf.mxu0
    %v1626 = vadd.f32 %v127, %v1625
    %v1627 = vpop.f32.mrf.mxu0
    %v1628 = vpop.f32.mrf.mxu0
    %1629 = vdwg.mxu0
    %1630 = vmatprep.subr.bf16.mxu0 %v922
    %1631 = vmatpush1.bf16.msra.mxu0 %v921
    %1632 = vmatprep.subr.bf16.mxu0 %v918
    %1633 = vmatpush1.bf16.msra.mxu0 %v917
    %1634 = vmatprep.subr.bf16.mxu0 %v914
    %1635 = vmatpush1.bf16.msra.mxu0 %v913
    %1636 = vmatprep.subr.bf16.mxu0 %v910
    %1637 = vmatpush1.bf16.msra.mxu0 %v909
    %1638 = vmatprep.subr.bf16.mxu0 %v906
    %1639 = vmatpush1.bf16.msra.mxu0 %v905
    %1640 = vmatprep.subr.bf16.mxu0 %v902
    %1641 = vmatpush1.bf16.msra.mxu0 %v901
    %1642 = vmatprep.subr.bf16.mxu0 %v898
    %1643 = vmatpush1.bf16.msra.mxu0 %v897
    %1644 = vmatprep.subr.bf16.mxu0 %v894
    %1645 = vmatpush1.bf16.msra.mxu0 %v893
    %1646 = vmatprep.subr.bf16.mxu0 0
    %1647 = vmatpush2.bf16.msra.mxu0 0
    %1648 = vmatprep.subr.bf16.mxu0 0
    %1649 = vmatpush2.bf16.msra.mxu0 0
    %1650 = vmatprep.subr.bf16.mxu0 0
    %1651 = vmatpush2.bf16.msra.mxu0 0
    %1652 = vmatprep.subr.bf16.mxu0 0
    %1653 = vmatpush2.bf16.msra.mxu0 0
    %1654 = vmatprep.subr.bf16.mxu0 0
    %1655 = vmatpush2.bf16.msra.mxu0 0
    %1656 = vmatprep.subr.bf16.mxu0 0
    %1657 = vmatpush2.bf16.msra.mxu0 0
    %1658 = vmatprep.subr.bf16.mxu0 0
    %1659 = vmatpush2.bf16.msra.mxu0 0
    %1660 = vmatprep.subr.bf16.mxu0 0
    %1661 = vmatpush2.bf16.msra.mxu0 0
    %1662 = vmatprep.mubr.bf16.mxu0 0
    %1663 = vmatmul.mubr.bf16.gmra.mxu0 %v1588
    %v1664 = vpop.f32.mrf.mxu0
    %v1665 = vadd.f32 %v131, %v1664
    %v1666 = vpop.f32.mrf.mxu0
    %v1667 = vadd.f32 %v135, %v1666
    %v1668 = vpop.f32.mrf.mxu0
    %v1669 = vpop.f32.mrf.mxu0
    %1670 = vdwg.mxu0
    %s1671 = scalar_lea.vmem %s0, 6
    %v1672 = vld [vmem:[%s1671] sm:$0x3]
    %1674 = vset.pattern.permute.xlu0 0
    %1675 = vperm.xlu0 %1674, %v1672
    %v1676 = vpop.permute.xlu0 %1675
    %v1678 = vmul.f32 %v1676, %v79
    %v1679 = vmul.f32 %v1676, %v83
    %v1680 = vmul.f32 %v1676, %v87
    %v1681 = vmul.f32 %v1676, %v91
    %v1682 = vadd.f32 %v1678, %v101
    %v1683 = vadd.f32 %v1679, %v105
    %v1684 = vadd.f32 %v1680, %v109
    %v1685 = vadd.f32 %v1681, %v113
    %v1686 = vpack.c.bf16 %v1479, %v1479
    %1687 = vmatprep.subr.bf16.mxu0 %v311
    %1688 = vmatpush1.bf16.msra.mxu0 %v310
    %1689 = vmatprep.subr.bf16.mxu0 %v307
    %1690 = vmatpush1.bf16.msra.mxu0 %v306
    %1691 = vmatprep.subr.bf16.mxu0 %v303
    %1692 = vmatpush1.bf16.msra.mxu0 %v302
    %1693 = vmatprep.subr.bf16.mxu0 %v299
    %1694 = vmatpush1.bf16.msra.mxu0 %v298
    %1695 = vmatprep.subr.bf16.mxu0 %v295
    %1696 = vmatpush1.bf16.msra.mxu0 %v294
    %1697 = vmatprep.subr.bf16.mxu0 %v291
    %1698 = vmatpush1.bf16.msra.mxu0 %v290
    %1699 = vmatprep.subr.bf16.mxu0 %v287
    %1700 = vmatpush1.bf16.msra.mxu0 %v286
    %1701 = vmatprep.subr.bf16.mxu0 %v283
    %1702 = vmatpush1.bf16.msra.mxu0 %v282
    %1703 = vmatprep.subr.bf16.mxu0 0
    %1704 = vmatpush2.bf16.msra.mxu0 0
    %1705 = vmatprep.subr.bf16.mxu0 0
    %1706 = vmatpush2.bf16.msra.mxu0 0
    %1707 = vmatprep.subr.bf16.mxu0 0
    %1708 = vmatpush2.bf16.msra.mxu0 0
    %1709 = vmatprep.subr.bf16.mxu0 0
    %1710 = vmatpush2.bf16.msra.mxu0 0
    %1711 = vmatprep.subr.bf16.mxu0 0
    %1712 = vmatpush2.bf16.msra.mxu0 0
    %1713 = vmatprep.subr.bf16.mxu0 0
    %1714 = vmatpush2.bf16.msra.mxu0 0
    %1715 = vmatprep.subr.bf16.mxu0 0
    %1716 = vmatpush2.bf16.msra.mxu0 0
    %1717 = vmatprep.subr.bf16.mxu0 0
    %1718 = vmatpush2.bf16.msra.mxu0 0
    %1719 = vmatprep.mubr.bf16.mxu0 0
    %1720 = vmatmul.mubr.bf16.gmra.mxu0 %v1686
    %v1721 = vpop.f32.mrf.mxu0
    %v1722 = vadd.f32 0.0, %v1721
    %v1723 = vpop.f32.mrf.mxu0
    %v1724 = vadd.f32 0.0, %v1723
    %v1725 = vpop.f32.mrf.mxu0
    %v1726 = vpop.f32.mrf.mxu0
    %1727 = vdwg.mxu0
    %1728 = vmatprep.subr.bf16.mxu0 %v313
    %1729 = vmatpush1.bf16.msra.mxu0 %v312
    %1730 = vmatprep.subr.bf16.mxu0 %v309
    %1731 = vmatpush1.bf16.msra.mxu0 %v308
    %1732 = vmatprep.subr.bf16.mxu0 %v305
    %1733 = vmatpush1.bf16.msra.mxu0 %v304
    %1734 = vmatprep.subr.bf16.mxu0 %v301
    %1735 = vmatpush1.bf16.msra.mxu0 %v300
    %1736 = vmatprep.subr.bf16.mxu0 %v297
    %1737 = vmatpush1.bf16.msra.mxu0 %v296
    %1738 = vmatprep.subr.bf16.mxu0 %v293
    %1739 = vmatpush1.bf16.msra.mxu0 %v292
    %1740 = vmatprep.subr.bf16.mxu0 %v289
    %1741 = vmatpush1.bf16.msra.mxu0 %v288
    %1742 = vmatprep.subr.bf16.mxu0 %v285
    %1743 = vmatpush1.bf16.msra.mxu0 %v284
    %1744 = vmatprep.subr.bf16.mxu0 0
    %1745 = vmatpush2.bf16.msra.mxu0 0
    %1746 = vmatprep.subr.bf16.mxu0 0
    %1747 = vmatpush2.bf16.msra.mxu0 0
    %1748 = vmatprep.subr.bf16.mxu0 0
    %1749 = vmatpush2.bf16.msra.mxu0 0
    %1750 = vmatprep.subr.bf16.mxu0 0
    %1751 = vmatpush2.bf16.msra.mxu0 0
    %1752 = vmatprep.subr.bf16.mxu0 0
    %1753 = vmatpush2.bf16.msra.mxu0 0
    %1754 = vmatprep.subr.bf16.mxu0 0
    %1755 = vmatpush2.bf16.msra.mxu0 0
    %1756 = vmatprep.subr.bf16.mxu0 0
    %1757 = vmatpush2.bf16.msra.mxu0 0
    %1758 = vmatprep.subr.bf16.mxu0 0
    %1759 = vmatpush2.bf16.msra.mxu0 0
    %1760 = vmatprep.mubr.bf16.mxu0 0
    %1761 = vmatmul.mubr.bf16.gmra.mxu0 %v1686
    %v1762 = vpop.f32.mrf.mxu0
    %v1763 = vadd.f32 0.0, %v1762
    %v1764 = vpop.f32.mrf.mxu0
    %v1765 = vadd.f32 0.0, %v1764
    %v1766 = vpop.f32.mrf.mxu0
    %v1767 = vpop.f32.mrf.mxu0
    %1768 = vdwg.mxu0
    %v1769 = vadd.f32 %v1682, %v1722
    %v1770 = vadd.f32 %v1683, %v1724
    %v1771 = vadd.f32 %v1684, %v1763
    %v1772 = vadd.f32 %v1685, %v1765
    %v1773 = vxor.u32 %v1769, 2147483648
    %v1774 = vxor.u32 %v1770, 2147483648
    %v1775 = vmul.f32 %v1773, 1.442695
    %v1776 = vpow.pop %v1775
    %v1777 = vmul.f32 %v1774, 1.442695
    %v1778 = vpow.pop %v1777
    %v1779 = vadd.f32 %v1776, 1.0
    %v1780 = vadd.f32 %v1778, 1.0
    %v1781 = vrcp.pop %v1779
    %v1782 = vmul.f32 1.0, %v1781
    %v1783 = vrcp.pop %v1780
    %v1784 = vmul.f32 1.0, %v1783
    %v1785 = vtanh.pop %v1771
    %v1786 = vxor.u32 %v1772, 2147483648
    %v1787 = vmul.f32 %v1786, 1.442695
    %v1788 = vpow.pop %v1787
    %v1789 = vadd.f32 %v1788, 1.0
    %v1790 = vrcp.pop %v1789
    %v1791 = vmul.f32 1.0, %v1790
    %v1792 = vmul.f32 %v1784, %v1477
    %v1793 = vmul.f32 %v1782, %v1785
    %v1794 = vadd.f32 %v1792, %v1793
    %v1795 = vtanh.pop %v1794
    %v1796 = vmul.f32 %v1791, %v1795
    %v1797 = vmax.f32 %v1796, 0.0
    %v1798 = vpack.c.bf16 %v1797, %v1797
    %1799 = vmatprep.subr.bf16.mxu0 %v621
    %1800 = vmatpush1.bf16.msra.mxu0 %v620
    %1801 = vmatprep.subr.bf16.mxu0 %v617
    %1802 = vmatpush1.bf16.msra.mxu0 %v616
    %1803 = vmatprep.subr.bf16.mxu0 %v613
    %1804 = vmatpush1.bf16.msra.mxu0 %v612
    %1805 = vmatprep.subr.bf16.mxu0 %v609
    %1806 = vmatpush1.bf16.msra.mxu0 %v608
    %1807 = vmatprep.subr.bf16.mxu0 %v605
    %1808 = vmatpush1.bf16.msra.mxu0 %v604
    %1809 = vmatprep.subr.bf16.mxu0 %v601
    %1810 = vmatpush1.bf16.msra.mxu0 %v600
    %1811 = vmatprep.subr.bf16.mxu0 %v597
    %1812 = vmatpush1.bf16.msra.mxu0 %v596
    %1813 = vmatprep.subr.bf16.mxu0 %v593
    %1814 = vmatpush1.bf16.msra.mxu0 %v592
    %1815 = vmatprep.subr.bf16.mxu0 0
    %1816 = vmatpush2.bf16.msra.mxu0 0
    %1817 = vmatprep.subr.bf16.mxu0 0
    %1818 = vmatpush2.bf16.msra.mxu0 0
    %1819 = vmatprep.subr.bf16.mxu0 0
    %1820 = vmatpush2.bf16.msra.mxu0 0
    %1821 = vmatprep.subr.bf16.mxu0 0
    %1822 = vmatpush2.bf16.msra.mxu0 0
    %1823 = vmatprep.subr.bf16.mxu0 0
    %1824 = vmatpush2.bf16.msra.mxu0 0
    %1825 = vmatprep.subr.bf16.mxu0 0
    %1826 = vmatpush2.bf16.msra.mxu0 0
    %1827 = vmatprep.subr.bf16.mxu0 0
    %1828 = vmatpush2.bf16.msra.mxu0 0
    %1829 = vmatprep.subr.bf16.mxu0 0
    %1830 = vmatpush2.bf16.msra.mxu0 0
    %1831 = vmatprep.mubr.bf16.mxu0 0
    %1832 = vmatmul.mubr.bf16.gmra.mxu0 %v1798
    %v1833 = vpop.f32.mrf.mxu0
    %v1834 = vadd.f32 %v1624, %v1833
    %v1835 = vpop.f32.mrf.mxu0
    %v1836 = vadd.f32 %v1626, %v1835
    %v1837 = vpop.f32.mrf.mxu0
    %v1838 = vpop.f32.mrf.mxu0
    %1839 = vdwg.mxu0
    %1840 = vmatprep.subr.bf16.mxu0 %v623
    %1841 = vmatpush1.bf16.msra.mxu0 %v622
    %1842 = vmatprep.subr.bf16.mxu0 %v619
    %1843 = vmatpush1.bf16.msra.mxu0 %v618
    %1844 = vmatprep.subr.bf16.mxu0 %v615
    %1845 = vmatpush1.bf16.msra.mxu0 %v614
    %1846 = vmatprep.subr.bf16.mxu0 %v611
    %1847 = vmatpush1.bf16.msra.mxu0 %v610
    %1848 = vmatprep.subr.bf16.mxu0 %v607
    %1849 = vmatpush1.bf16.msra.mxu0 %v606
    %1850 = vmatprep.subr.bf16.mxu0 %v603
    %1851 = vmatpush1.bf16.msra.mxu0 %v602
    %1852 = vmatprep.subr.bf16.mxu0 %v599
    %1853 = vmatpush1.bf16.msra.mxu0 %v598
    %1854 = vmatprep.subr.bf16.mxu0 %v595
    %1855 = vmatpush1.bf16.msra.mxu0 %v594
    %1856 = vmatprep.subr.bf16.mxu0 0
    %1857 = vmatpush2.bf16.msra.mxu0 0
    %1858 = vmatprep.subr.bf16.mxu0 0
    %1859 = vmatpush2.bf16.msra.mxu0 0
    %1860 = vmatprep.subr.bf16.mxu0 0
    %1861 = vmatpush2.bf16.msra.mxu0 0
    %1862 = vmatprep.subr.bf16.mxu0 0
    %1863 = vmatpush2.bf16.msra.mxu0 0
    %1864 = vmatprep.subr.bf16.mxu0 0
    %1865 = vmatpush2.bf16.msra.mxu0 0
    %1866 = vmatprep.subr.bf16.mxu0 0
    %1867 = vmatpush2.bf16.msra.mxu0 0
    %1868 = vmatprep.subr.bf16.mxu0 0
    %1869 = vmatpush2.bf16.msra.mxu0 0
    %1870 = vmatprep.subr.bf16.mxu0 0
    %1871 = vmatpush2.bf16.msra.mxu0 0
    %1872 = vmatprep.mubr.bf16.mxu0 0
    %1873 = vmatmul.mubr.bf16.gmra.mxu0 %v1798
    %v1874 = vpop.f32.mrf.mxu0
    %v1875 = vadd.f32 %v1665, %v1874
    %v1876 = vpop.f32.mrf.mxu0
    %v1877 = vadd.f32 %v1667, %v1876
    %v1878 = vpop.f32.mrf.mxu0
    %v1879 = vpop.f32.mrf.mxu0
    %1880 = vdwg.mxu0
    %v1881 = vxor.u32 %v1834, 2147483648
    %v1882 = vxor.u32 %v1836, 2147483648
    %v1883 = vmul.f32 %v1881, 1.442695
    %v1884 = vpow.pop %v1883
    %v1885 = vmul.f32 %v1882, 1.442695
    %v1886 = vpow.pop %v1885
    %v1887 = vadd.f32 %v1884, 1.0
    %v1888 = vadd.f32 %v1886, 1.0
    %v1889 = vrcp.pop %v1887
    %v1890 = vmul.f32 1.0, %v1889
    %v1891 = vrcp.pop %v1888
    %v1892 = vmul.f32 1.0, %v1891
    %v1893 = vtanh.pop %v1875
    %v1894 = vxor.u32 %v1877, 2147483648
    %v1895 = vmul.f32 %v1894, 1.442695
    %v1896 = vpow.pop %v1895
    %v1897 = vadd.f32 %v1896, 1.0
    %v1898 = vrcp.pop %v1897
    %v1899 = vmul.f32 1.0, %v1898
    %v1900 = vmul.f32 %v1892, %v1585
    %v1901 = vmul.f32 %v1890, %v1893
    %v1902 = vadd.f32 %v1900, %v1901
    %v1903 = vtanh.pop %v1902
    %v1904 = vmul.f32 %v1899, %v1903
    %v1905 = vpack.c.bf16 %v1904, %v1904
    %1906 = vmatprep.subr.bf16.mxu0 %v920
    %1907 = vmatpush1.bf16.msra.mxu0 %v919
    %1908 = vmatprep.subr.bf16.mxu0 %v916
    %1909 = vmatpush1.bf16.msra.mxu0 %v915
    %1910 = vmatprep.subr.bf16.mxu0 %v912
    %1911 = vmatpush1.bf16.msra.mxu0 %v911
    %1912 = vmatprep.subr.bf16.mxu0 %v908
    %1913 = vmatpush1.bf16.msra.mxu0 %v907
    %1914 = vmatprep.subr.bf16.mxu0 %v904
    %1915 = vmatpush1.bf16.msra.mxu0 %v903
    %1916 = vmatprep.subr.bf16.mxu0 %v900
    %1917 = vmatpush1.bf16.msra.mxu0 %v899
    %1918 = vmatprep.subr.bf16.mxu0 %v896
    %1919 = vmatpush1.bf16.msra.mxu0 %v895
    %1920 = vmatprep.subr.bf16.mxu0 %v892
    %1921 = vmatpush1.bf16.msra.mxu0 %v891
    %1922 = vmatprep.subr.bf16.mxu0 0
    %1923 = vmatpush2.bf16.msra.mxu0 0
    %1924 = vmatprep.subr.bf16.mxu0 0
    %1925 = vmatpush2.bf16.msra.mxu0 0
    %1926 = vmatprep.subr.bf16.mxu0 0
    %1927 = vmatpush2.bf16.msra.mxu0 0
    %1928 = vmatprep.subr.bf16.mxu0 0
    %1929 = vmatpush2.bf16.msra.mxu0 0
    %1930 = vmatprep.subr.bf16.mxu0 0
    %1931 = vmatpush2.bf16.msra.mxu0 0
    %1932 = vmatprep.subr.bf16.mxu0 0
    %1933 = vmatpush2.bf16.msra.mxu0 0
    %1934 = vmatprep.subr.bf16.mxu0 0
    %1935 = vmatpush2.bf16.msra.mxu0 0
    %1936 = vmatprep.subr.bf16.mxu0 0
    %1937 = vmatpush2.bf16.msra.mxu0 0
    %1938 = vmatprep.mubr.bf16.mxu0 0
    %1939 = vmatmul.mubr.bf16.gmra.mxu0 %v1905
    %v1940 = vpop.f32.mrf.mxu0
    %v1941 = vadd.f32 %v123, %v1940
    %v1942 = vpop.f32.mrf.mxu0
    %v1943 = vadd.f32 %v127, %v1942
    %v1944 = vpop.f32.mrf.mxu0
    %v1945 = vpop.f32.mrf.mxu0
    %1946 = vdwg.mxu0
    %1947 = vmatprep.subr.bf16.mxu0 %v922
    %1948 = vmatpush1.bf16.msra.mxu0 %v921
    %1949 = vmatprep.subr.bf16.mxu0 %v918
    %1950 = vmatpush1.bf16.msra.mxu0 %v917
    %1951 = vmatprep.subr.bf16.mxu0 %v914
    %1952 = vmatpush1.bf16.msra.mxu0 %v913
    %1953 = vmatprep.subr.bf16.mxu0 %v910
    %1954 = vmatpush1.bf16.msra.mxu0 %v909
    %1955 = vmatprep.subr.bf16.mxu0 %v906
    %1956 = vmatpush1.bf16.msra.mxu0 %v905
    %1957 = vmatprep.subr.bf16.mxu0 %v902
    %1958 = vmatpush1.bf16.msra.mxu0 %v901
    %1959 = vmatprep.subr.bf16.mxu0 %v898
    %1960 = vmatpush1.bf16.msra.mxu0 %v897
    %1961 = vmatprep.subr.bf16.mxu0 %v894
    %1962 = vmatpush1.bf16.msra.mxu0 %v893
    %1963 = vmatprep.subr.bf16.mxu0 0
    %1964 = vmatpush2.bf16.msra.mxu0 0
    %1965 = vmatprep.subr.bf16.mxu0 0
    %1966 = vmatpush2.bf16.msra.mxu0 0
    %1967 = vmatprep.subr.bf16.mxu0 0
    %1968 = vmatpush2.bf16.msra.mxu0 0
    %1969 = vmatprep.subr.bf16.mxu0 0
    %1970 = vmatpush2.bf16.msra.mxu0 0
    %1971 = vmatprep.subr.bf16.mxu0 0
    %1972 = vmatpush2.bf16.msra.mxu0 0
    %1973 = vmatprep.subr.bf16.mxu0 0
    %1974 = vmatpush2.bf16.msra.mxu0 0
    %1975 = vmatprep.subr.bf16.mxu0 0
    %1976 = vmatpush2.bf16.msra.mxu0 0
    %1977 = vmatprep.subr.bf16.mxu0 0
    %1978 = vmatpush2.bf16.msra.mxu0 0
    %1979 = vmatprep.mubr.bf16.mxu0 0
    %1980 = vmatmul.mubr.bf16.gmra.mxu0 %v1905
    %v1981 = vpop.f32.mrf.mxu0
    %v1982 = vadd.f32 %v131, %v1981
    %v1983 = vpop.f32.mrf.mxu0
    %v1984 = vadd.f32 %v135, %v1983
    %v1985 = vpop.f32.mrf.mxu0
    %v1986 = vpop.f32.mrf.mxu0
    %1987 = vdwg.mxu0
    %s1988 = scalar_lea.vmem %s0, 8
    %v1989 = vld [vmem:[%s1988] sm:$0x3]
    %1991 = vset.pattern.permute.xlu0 0
    %1992 = vperm.xlu0 %1991, %v1989
    %v1993 = vpop.permute.xlu0 %1992
    %v1995 = vmul.f32 %v1993, %v79
    %v1996 = vmul.f32 %v1993, %v83
    %v1997 = vmul.f32 %v1993, %v87
    %v1998 = vmul.f32 %v1993, %v91
    %v1999 = vadd.f32 %v1995, %v101
    %v2000 = vadd.f32 %v1996, %v105
    %v2001 = vadd.f32 %v1997, %v109
    %v2002 = vadd.f32 %v1998, %v113
    %v2003 = vpack.c.bf16 %v1796, %v1796
    %2004 = vmatprep.subr.bf16.mxu0 %v311
    %2005 = vmatpush1.bf16.msra.mxu0 %v310
    %2006 = vmatprep.subr.bf16.mxu0 %v307
    %2007 = vmatpush1.bf16.msra.mxu0 %v306
    %2008 = vmatprep.subr.bf16.mxu0 %v303
    %2009 = vmatpush1.bf16.msra.mxu0 %v302
    %2010 = vmatprep.subr.bf16.mxu0 %v299
    %2011 = vmatpush1.bf16.msra.mxu0 %v298
    %2012 = vmatprep.subr.bf16.mxu0 %v295
    %2013 = vmatpush1.bf16.msra.mxu0 %v294
    %2014 = vmatprep.subr.bf16.mxu0 %v291
    %2015 = vmatpush1.bf16.msra.mxu0 %v290
    %2016 = vmatprep.subr.bf16.mxu0 %v287
    %2017 = vmatpush1.bf16.msra.mxu0 %v286
    %2018 = vmatprep.subr.bf16.mxu0 %v283
    %2019 = vmatpush1.bf16.msra.mxu0 %v282
    %2020 = vmatprep.subr.bf16.mxu0 0
    %2021 = vmatpush2.bf16.msra.mxu0 0
    %2022 = vmatprep.subr.bf16.mxu0 0
    %2023 = vmatpush2.bf16.msra.mxu0 0
    %2024 = vmatprep.subr.bf16.mxu0 0
    %2025 = vmatpush2.bf16.msra.mxu0 0
    %2026 = vmatprep.subr.bf16.mxu0 0
    %2027 = vmatpush2.bf16.msra.mxu0 0
    %2028 = vmatprep.subr.bf16.mxu0 0
    %2029 = vmatpush2.bf16.msra.mxu0 0
    %2030 = vmatprep.subr.bf16.mxu0 0
    %2031 = vmatpush2.bf16.msra.mxu0 0
    %2032 = vmatprep.subr.bf16.mxu0 0
    %2033 = vmatpush2.bf16.msra.mxu0 0
    %2034 = vmatprep.subr.bf16.mxu0 0
    %2035 = vmatpush2.bf16.msra.mxu0 0
    %2036 = vmatprep.mubr.bf16.mxu0 0
    %2037 = vmatmul.mubr.bf16.gmra.mxu0 %v2003
    %v2038 = vpop.f32.mrf.mxu0
    %v2039 = vadd.f32 0.0, %v2038
    %v2040 = vpop.f32.mrf.mxu0
    %v2041 = vadd.f32 0.0, %v2040
    %v2042 = vpop.f32.mrf.mxu0
    %v2043 = vpop.f32.mrf.mxu0
    %2044 = vdwg.mxu0
    %2045 = vmatprep.subr.bf16.mxu0 %v313
    %2046 = vmatpush1.bf16.msra.mxu0 %v312
    %2047 = vmatprep.subr.bf16.mxu0 %v309
    %2048 = vmatpush1.bf16.msra.mxu0 %v308
    %2049 = vmatprep.subr.bf16.mxu0 %v305
    %2050 = vmatpush1.bf16.msra.mxu0 %v304
    %2051 = vmatprep.subr.bf16.mxu0 %v301
    %2052 = vmatpush1.bf16.msra.mxu0 %v300
    %2053 = vmatprep.subr.bf16.mxu0 %v297
    %2054 = vmatpush1.bf16.msra.mxu0 %v296
    %2055 = vmatprep.subr.bf16.mxu0 %v293
    %2056 = vmatpush1.bf16.msra.mxu0 %v292
    %2057 = vmatprep.subr.bf16.mxu0 %v289
    %2058 = vmatpush1.bf16.msra.mxu0 %v288
    %2059 = vmatprep.subr.bf16.mxu0 %v285
    %2060 = vmatpush1.bf16.msra.mxu0 %v284
    %2061 = vmatprep.subr.bf16.mxu0 0
    %2062 = vmatpush2.bf16.msra.mxu0 0
    %2063 = vmatprep.subr.bf16.mxu0 0
    %2064 = vmatpush2.bf16.msra.mxu0 0
    %2065 = vmatprep.subr.bf16.mxu0 0
    %2066 = vmatpush2.bf16.msra.mxu0 0
    %2067 = vmatprep.subr.bf16.mxu0 0
    %2068 = vmatpush2.bf16.msra.mxu0 0
    %2069 = vmatprep.subr.bf16.mxu0 0
    %2070 = vmatpush2.bf16.msra.mxu0 0
    %2071 = vmatprep.subr.bf16.mxu0 0
    %2072 = vmatpush2.bf16.msra.mxu0 0
    %2073 = vmatprep.subr.bf16.mxu0 0
    %2074 = vmatpush2.bf16.msra.mxu0 0
    %2075 = vmatprep.subr.bf16.mxu0 0
    %2076 = vmatpush2.bf16.msra.mxu0 0
    %2077 = vmatprep.mubr.bf16.mxu0 0
    %2078 = vmatmul.mubr.bf16.gmra.mxu0 %v2003
    %v2079 = vpop.f32.mrf.mxu0
    %v2080 = vadd.f32 0.0, %v2079
    %v2081 = vpop.f32.mrf.mxu0
    %v2082 = vadd.f32 0.0, %v2081
    %v2083 = vpop.f32.mrf.mxu0
    %v2084 = vpop.f32.mrf.mxu0
    %2085 = vdwg.mxu0
    %v2086 = vadd.f32 %v1999, %v2039
    %v2087 = vadd.f32 %v2000, %v2041
    %v2088 = vadd.f32 %v2001, %v2080
    %v2089 = vadd.f32 %v2002, %v2082
    %v2090 = vxor.u32 %v2086, 2147483648
    %v2091 = vxor.u32 %v2087, 2147483648
    %v2092 = vmul.f32 %v2090, 1.442695
    %v2093 = vpow.pop %v2092
    %v2094 = vmul.f32 %v2091, 1.442695
    %v2095 = vpow.pop %v2094
    %v2096 = vadd.f32 %v2093, 1.0
    %v2097 = vadd.f32 %v2095, 1.0
    %v2098 = vrcp.pop %v2096
    %v2099 = vmul.f32 1.0, %v2098
    %v2100 = vrcp.pop %v2097
    %v2101 = vmul.f32 1.0, %v2100
    %v2102 = vtanh.pop %v2088
    %v2103 = vxor.u32 %v2089, 2147483648
    %v2104 = vmul.f32 %v2103, 1.442695
    %v2105 = vpow.pop %v2104
    %v2106 = vadd.f32 %v2105, 1.0
    %v2107 = vrcp.pop %v2106
    %v2108 = vmul.f32 1.0, %v2107
    %v2109 = vmul.f32 %v2101, %v1794
    %v2110 = vmul.f32 %v2099, %v2102
    %v2111 = vadd.f32 %v2109, %v2110
    %v2112 = vtanh.pop %v2111
    %v2113 = vmul.f32 %v2108, %v2112
    %v2114 = vmax.f32 %v2113, 0.0
    %v2115 = vpack.c.bf16 %v2114, %v2114
    %2116 = vmatprep.subr.bf16.mxu0 %v621
    %2117 = vmatpush1.bf16.msra.mxu0 %v620
    %2118 = vmatprep.subr.bf16.mxu0 %v617
    %2119 = vmatpush1.bf16.msra.mxu0 %v616
    %2120 = vmatprep.subr.bf16.mxu0 %v613
    %2121 = vmatpush1.bf16.msra.mxu0 %v612
    %2122 = vmatprep.subr.bf16.mxu0 %v609
    %2123 = vmatpush1.bf16.msra.mxu0 %v608
    %2124 = vmatprep.subr.bf16.mxu0 %v605
    %2125 = vmatpush1.bf16.msra.mxu0 %v604
    %2126 = vmatprep.subr.bf16.mxu0 %v601
    %2127 = vmatpush1.bf16.msra.mxu0 %v600
    %2128 = vmatprep.subr.bf16.mxu0 %v597
    %2129 = vmatpush1.bf16.msra.mxu0 %v596
    %2130 = vmatprep.subr.bf16.mxu0 %v593
    %2131 = vmatpush1.bf16.msra.mxu0 %v592
    %2132 = vmatprep.subr.bf16.mxu0 0
    %2133 = vmatpush2.bf16.msra.mxu0 0
    %2134 = vmatprep.subr.bf16.mxu0 0
    %2135 = vmatpush2.bf16.msra.mxu0 0
    %2136 = vmatprep.subr.bf16.mxu0 0
    %2137 = vmatpush2.bf16.msra.mxu0 0
    %2138 = vmatprep.subr.bf16.mxu0 0
    %2139 = vmatpush2.bf16.msra.mxu0 0
    %2140 = vmatprep.subr.bf16.mxu0 0
    %2141 = vmatpush2.bf16.msra.mxu0 0
    %2142 = vmatprep.subr.bf16.mxu0 0
    %2143 = vmatpush2.bf16.msra.mxu0 0
    %2144 = vmatprep.subr.bf16.mxu0 0
    %2145 = vmatpush2.bf16.msra.mxu0 0
    %2146 = vmatprep.subr.bf16.mxu0 0
    %2147 = vmatpush2.bf16.msra.mxu0 0
    %2148 = vmatprep.mubr.bf16.mxu0 0
    %2149 = vmatmul.mubr.bf16.gmra.mxu0 %v2115
    %v2150 = vpop.f32.mrf.mxu0
    %v2151 = vadd.f32 %v1941, %v2150
    %v2152 = vpop.f32.mrf.mxu0
    %v2153 = vadd.f32 %v1943, %v2152
    %v2154 = vpop.f32.mrf.mxu0
    %v2155 = vpop.f32.mrf.mxu0
    %2156 = vdwg.mxu0
    %2157 = vmatprep.subr.bf16.mxu0 %v623
    %2158 = vmatpush1.bf16.msra.mxu0 %v622
    %2159 = vmatprep.subr.bf16.mxu0 %v619
    %2160 = vmatpush1.bf16.msra.mxu0 %v618
    %2161 = vmatprep.subr.bf16.mxu0 %v615
    %2162 = vmatpush1.bf16.msra.mxu0 %v614
    %2163 = vmatprep.subr.bf16.mxu0 %v611
    %2164 = vmatpush1.bf16.msra.mxu0 %v610
    %2165 = vmatprep.subr.bf16.mxu0 %v607
    %2166 = vmatpush1.bf16.msra.mxu0 %v606
    %2167 = vmatprep.subr.bf16.mxu0 %v603
    %2168 = vmatpush1.bf16.msra.mxu0 %v602
    %2169 = vmatprep.subr.bf16.mxu0 %v599
    %2170 = vmatpush1.bf16.msra.mxu0 %v598
    %2171 = vmatprep.subr.bf16.mxu0 %v595
    %2172 = vmatpush1.bf16.msra.mxu0 %v594
    %2173 = vmatprep.subr.bf16.mxu0 0
    %2174 = vmatpush2.bf16.msra.mxu0 0
    %2175 = vmatprep.subr.bf16.mxu0 0
    %2176 = vmatpush2.bf16.msra.mxu0 0
    %2177 = vmatprep.subr.bf16.mxu0 0
    %2178 = vmatpush2.bf16.msra.mxu0 0
    %2179 = vmatprep.subr.bf16.mxu0 0
    %2180 = vmatpush2.bf16.msra.mxu0 0
    %2181 = vmatprep.subr.bf16.mxu0 0
    %2182 = vmatpush2.bf16.msra.mxu0 0
    %2183 = vmatprep.subr.bf16.mxu0 0
    %2184 = vmatpush2.bf16.msra.mxu0 0
    %2185 = vmatprep.subr.bf16.mxu0 0
    %2186 = vmatpush2.bf16.msra.mxu0 0
    %2187 = vmatprep.subr.bf16.mxu0 0
    %2188 = vmatpush2.bf16.msra.mxu0 0
    %2189 = vmatprep.mubr.bf16.mxu0 0
    %2190 = vmatmul.mubr.bf16.gmra.mxu0 %v2115
    %v2191 = vpop.f32.mrf.mxu0
    %v2192 = vadd.f32 %v1982, %v2191
    %v2193 = vpop.f32.mrf.mxu0
    %v2194 = vadd.f32 %v1984, %v2193
    %v2195 = vpop.f32.mrf.mxu0
    %v2196 = vpop.f32.mrf.mxu0
    %2197 = vdwg.mxu0
    %v2198 = vxor.u32 %v2151, 2147483648
    %v2199 = vxor.u32 %v2153, 2147483648
    %v2200 = vmul.f32 %v2198, 1.442695
    %v2201 = vpow.pop %v2200
    %v2202 = vmul.f32 %v2199, 1.442695
    %v2203 = vpow.pop %v2202
    %v2204 = vadd.f32 %v2201, 1.0
    %v2205 = vadd.f32 %v2203, 1.0
    %v2206 = vrcp.pop %v2204
    %v2207 = vmul.f32 1.0, %v2206
    %v2208 = vrcp.pop %v2205
    %v2209 = vmul.f32 1.0, %v2208
    %v2210 = vtanh.pop %v2192
    %v2211 = vxor.u32 %v2194, 2147483648
    %v2212 = vmul.f32 %v2211, 1.442695
    %v2213 = vpow.pop %v2212
    %v2214 = vadd.f32 %v2213, 1.0
    %v2215 = vrcp.pop %v2214
    %v2216 = vmul.f32 1.0, %v2215
    %v2217 = vmul.f32 %v2209, %v1902
    %v2218 = vmul.f32 %v2207, %v2210
    %v2219 = vadd.f32 %v2217, %v2218
    %v2220 = vtanh.pop %v2219
    %v2221 = vmul.f32 %v2216, %v2220
    %v2222 = vpack.c.bf16 %v2221, %v2221
    %2223 = vmatprep.subr.bf16.mxu0 %v920
    %2224 = vmatpush1.bf16.msra.mxu0 %v919
    %2225 = vmatprep.subr.bf16.mxu0 %v916
    %2226 = vmatpush1.bf16.msra.mxu0 %v915
    %2227 = vmatprep.subr.bf16.mxu0 %v912
    %2228 = vmatpush1.bf16.msra.mxu0 %v911
    %2229 = vmatprep.subr.bf16.mxu0 %v908
    %2230 = vmatpush1.bf16.msra.mxu0 %v907
    %2231 = vmatprep.subr.bf16.mxu0 %v904
    %2232 = vmatpush1.bf16.msra.mxu0 %v903
    %2233 = vmatprep.subr.bf16.mxu0 %v900
    %2234 = vmatpush1.bf16.msra.mxu0 %v899
    %2235 = vmatprep.subr.bf16.mxu0 %v896
    %2236 = vmatpush1.bf16.msra.mxu0 %v895
    %2237 = vmatprep.subr.bf16.mxu0 %v892
    %2238 = vmatpush1.bf16.msra.mxu0 %v891
    %2239 = vmatprep.subr.bf16.mxu0 0
    %2240 = vmatpush2.bf16.msra.mxu0 0
    %2241 = vmatprep.subr.bf16.mxu0 0
    %2242 = vmatpush2.bf16.msra.mxu0 0
    %2243 = vmatprep.subr.bf16.mxu0 0
    %2244 = vmatpush2.bf16.msra.mxu0 0
    %2245 = vmatprep.subr.bf16.mxu0 0
    %2246 = vmatpush2.bf16.msra.mxu0 0
    %2247 = vmatprep.subr.bf16.mxu0 0
    %2248 = vmatpush2.bf16.msra.mxu0 0
    %2249 = vmatprep.subr.bf16.mxu0 0
    %2250 = vmatpush2.bf16.msra.mxu0 0
    %2251 = vmatprep.subr.bf16.mxu0 0
    %2252 = vmatpush2.bf16.msra.mxu0 0
    %2253 = vmatprep.subr.bf16.mxu0 0
    %2254 = vmatpush2.bf16.msra.mxu0 0
    %2255 = vmatprep.mubr.bf16.mxu0 0
    %2256 = vmatmul.mubr.bf16.gmra.mxu0 %v2222
    %v2257 = vpop.f32.mrf.mxu0
    %v2258 = vadd.f32 %v123, %v2257
    %v2259 = vpop.f32.mrf.mxu0
    %v2260 = vadd.f32 %v127, %v2259
    %v2261 = vpop.f32.mrf.mxu0
    %v2262 = vpop.f32.mrf.mxu0
    %2263 = vdwg.mxu0
    %2264 = vmatprep.subr.bf16.mxu0 %v922
    %2265 = vmatpush1.bf16.msra.mxu0 %v921
    %2266 = vmatprep.subr.bf16.mxu0 %v918
    %2267 = vmatpush1.bf16.msra.mxu0 %v917
    %2268 = vmatprep.subr.bf16.mxu0 %v914
    %2269 = vmatpush1.bf16.msra.mxu0 %v913
    %2270 = vmatprep.subr.bf16.mxu0 %v910
    %2271 = vmatpush1.bf16.msra.mxu0 %v909
    %2272 = vmatprep.subr.bf16.mxu0 %v906
    %2273 = vmatpush1.bf16.msra.mxu0 %v905
    %2274 = vmatprep.subr.bf16.mxu0 %v902
    %2275 = vmatpush1.bf16.msra.mxu0 %v901
    %2276 = vmatprep.subr.bf16.mxu0 %v898
    %2277 = vmatpush1.bf16.msra.mxu0 %v897
    %2278 = vmatprep.subr.bf16.mxu0 %v894
    %2279 = vmatpush1.bf16.msra.mxu0 %v893
    %2280 = vmatprep.subr.bf16.mxu0 0
    %2281 = vmatpush2.bf16.msra.mxu0 0
    %2282 = vmatprep.subr.bf16.mxu0 0
    %2283 = vmatpush2.bf16.msra.mxu0 0
    %2284 = vmatprep.subr.bf16.mxu0 0
    %2285 = vmatpush2.bf16.msra.mxu0 0
    %2286 = vmatprep.subr.bf16.mxu0 0
    %2287 = vmatpush2.bf16.msra.mxu0 0
    %2288 = vmatprep.subr.bf16.mxu0 0
    %2289 = vmatpush2.bf16.msra.mxu0 0
    %2290 = vmatprep.subr.bf16.mxu0 0
    %2291 = vmatpush2.bf16.msra.mxu0 0
    %2292 = vmatprep.subr.bf16.mxu0 0
    %2293 = vmatpush2.bf16.msra.mxu0 0
    %2294 = vmatprep.subr.bf16.mxu0 0
    %2295 = vmatpush2.bf16.msra.mxu0 0
    %2296 = vmatprep.mubr.bf16.mxu0 0
    %2297 = vmatmul.mubr.bf16.gmra.mxu0 %v2222
    %v2298 = vpop.f32.mrf.mxu0
    %v2299 = vadd.f32 %v131, %v2298
    %v2300 = vpop.f32.mrf.mxu0
    %v2301 = vadd.f32 %v135, %v2300
    %v2302 = vpop.f32.mrf.mxu0
    %v2303 = vpop.f32.mrf.mxu0
    %2304 = vdwg.mxu0
    %s2305 = scalar_lea.vmem %s0, 10
    %v2306 = vld [vmem:[%s2305] sm:$0x3]
    %2308 = vset.pattern.permute.xlu0 0
    %2309 = vperm.xlu0 %2308, %v2306
    %v2310 = vpop.permute.xlu0 %2309
    %v2312 = vmul.f32 %v2310, %v79
    %v2313 = vmul.f32 %v2310, %v83
    %v2314 = vmul.f32 %v2310, %v87
    %v2315 = vmul.f32 %v2310, %v91
    %v2316 = vadd.f32 %v2312, %v101
    %v2317 = vadd.f32 %v2313, %v105
    %v2318 = vadd.f32 %v2314, %v109
    %v2319 = vadd.f32 %v2315, %v113
    %v2320 = vpack.c.bf16 %v2113, %v2113
    %2321 = vmatprep.subr.bf16.mxu0 %v311
    %2322 = vmatpush1.bf16.msra.mxu0 %v310
    %2323 = vmatprep.subr.bf16.mxu0 %v307
    %2324 = vmatpush1.bf16.msra.mxu0 %v306
    %2325 = vmatprep.subr.bf16.mxu0 %v303
    %2326 = vmatpush1.bf16.msra.mxu0 %v302
    %2327 = vmatprep.subr.bf16.mxu0 %v299
    %2328 = vmatpush1.bf16.msra.mxu0 %v298
    %2329 = vmatprep.subr.bf16.mxu0 %v295
    %2330 = vmatpush1.bf16.msra.mxu0 %v294
    %2331 = vmatprep.subr.bf16.mxu0 %v291
    %2332 = vmatpush1.bf16.msra.mxu0 %v290
    %2333 = vmatprep.subr.bf16.mxu0 %v287
    %2334 = vmatpush1.bf16.msra.mxu0 %v286
    %2335 = vmatprep.subr.bf16.mxu0 %v283
    %2336 = vmatpush1.bf16.msra.mxu0 %v282
    %2337 = vmatprep.subr.bf16.mxu0 0
    %2338 = vmatpush2.bf16.msra.mxu0 0
    %2339 = vmatprep.subr.bf16.mxu0 0
    %2340 = vmatpush2.bf16.msra.mxu0 0
    %2341 = vmatprep.subr.bf16.mxu0 0
    %2342 = vmatpush2.bf16.msra.mxu0 0
    %2343 = vmatprep.subr.bf16.mxu0 0
    %2344 = vmatpush2.bf16.msra.mxu0 0
    %2345 = vmatprep.subr.bf16.mxu0 0
    %2346 = vmatpush2.bf16.msra.mxu0 0
    %2347 = vmatprep.subr.bf16.mxu0 0
    %2348 = vmatpush2.bf16.msra.mxu0 0
    %2349 = vmatprep.subr.bf16.mxu0 0
    %2350 = vmatpush2.bf16.msra.mxu0 0
    %2351 = vmatprep.subr.bf16.mxu0 0
    %2352 = vmatpush2.bf16.msra.mxu0 0
    %2353 = vmatprep.mubr.bf16.mxu0 0
    %2354 = vmatmul.mubr.bf16.gmra.mxu0 %v2320
    %v2355 = vpop.f32.mrf.mxu0
    %v2356 = vadd.f32 0.0, %v2355
    %v2357 = vpop.f32.mrf.mxu0
    %v2358 = vadd.f32 0.0, %v2357
    %v2359 = vpop.f32.mrf.mxu0
    %v2360 = vpop.f32.mrf.mxu0
    %2361 = vdwg.mxu0
    %2362 = vmatprep.subr.bf16.mxu0 %v313
    %2363 = vmatpush1.bf16.msra.mxu0 %v312
    %2364 = vmatprep.subr.bf16.mxu0 %v309
    %2365 = vmatpush1.bf16.msra.mxu0 %v308
    %2366 = vmatprep.subr.bf16.mxu0 %v305
    %2367 = vmatpush1.bf16.msra.mxu0 %v304
    %2368 = vmatprep.subr.bf16.mxu0 %v301
    %2369 = vmatpush1.bf16.msra.mxu0 %v300
    %2370 = vmatprep.subr.bf16.mxu0 %v297
    %2371 = vmatpush1.bf16.msra.mxu0 %v296
    %2372 = vmatprep.subr.bf16.mxu0 %v293
    %2373 = vmatpush1.bf16.msra.mxu0 %v292
    %2374 = vmatprep.subr.bf16.mxu0 %v289
    %2375 = vmatpush1.bf16.msra.mxu0 %v288
    %2376 = vmatprep.subr.bf16.mxu0 %v285
    %2377 = vmatpush1.bf16.msra.mxu0 %v284
    %2378 = vmatprep.subr.bf16.mxu0 0
    %2379 = vmatpush2.bf16.msra.mxu0 0
    %2380 = vmatprep.subr.bf16.mxu0 0
    %2381 = vmatpush2.bf16.msra.mxu0 0
    %2382 = vmatprep.subr.bf16.mxu0 0
    %2383 = vmatpush2.bf16.msra.mxu0 0
    %2384 = vmatprep.subr.bf16.mxu0 0
    %2385 = vmatpush2.bf16.msra.mxu0 0
    %2386 = vmatprep.subr.bf16.mxu0 0
    %2387 = vmatpush2.bf16.msra.mxu0 0
    %2388 = vmatprep.subr.bf16.mxu0 0
    %2389 = vmatpush2.bf16.msra.mxu0 0
    %2390 = vmatprep.subr.bf16.mxu0 0
    %2391 = vmatpush2.bf16.msra.mxu0 0
    %2392 = vmatprep.subr.bf16.mxu0 0
    %2393 = vmatpush2.bf16.msra.mxu0 0
    %2394 = vmatprep.mubr.bf16.mxu0 0
    %2395 = vmatmul.mubr.bf16.gmra.mxu0 %v2320
    %v2396 = vpop.f32.mrf.mxu0
    %v2397 = vadd.f32 0.0, %v2396
    %v2398 = vpop.f32.mrf.mxu0
    %v2399 = vadd.f32 0.0, %v2398
    %v2400 = vpop.f32.mrf.mxu0
    %v2401 = vpop.f32.mrf.mxu0
    %2402 = vdwg.mxu0
    %v2403 = vadd.f32 %v2316, %v2356
    %v2404 = vadd.f32 %v2317, %v2358
    %v2405 = vadd.f32 %v2318, %v2397
    %v2406 = vadd.f32 %v2319, %v2399
    %v2407 = vxor.u32 %v2403, 2147483648
    %v2408 = vxor.u32 %v2404, 2147483648
    %v2409 = vmul.f32 %v2407, 1.442695
    %v2410 = vpow.pop %v2409
    %v2411 = vmul.f32 %v2408, 1.442695
    %v2412 = vpow.pop %v2411
    %v2413 = vadd.f32 %v2410, 1.0
    %v2414 = vadd.f32 %v2412, 1.0
    %v2415 = vrcp.pop %v2413
    %v2416 = vmul.f32 1.0, %v2415
    %v2417 = vrcp.pop %v2414
    %v2418 = vmul.f32 1.0, %v2417
    %v2419 = vtanh.pop %v2405
    %v2420 = vxor.u32 %v2406, 2147483648
    %v2421 = vmul.f32 %v2420, 1.442695
    %v2422 = vpow.pop %v2421
    %v2423 = vadd.f32 %v2422, 1.0
    %v2424 = vrcp.pop %v2423
    %v2425 = vmul.f32 1.0, %v2424
    %v2426 = vmul.f32 %v2418, %v2111
    %v2427 = vmul.f32 %v2416, %v2419
    %v2428 = vadd.f32 %v2426, %v2427
    %v2429 = vtanh.pop %v2428
    %v2430 = vmul.f32 %v2425, %v2429
    %v2431 = vmax.f32 %v2430, 0.0
    %v2432 = vpack.c.bf16 %v2431, %v2431
    %2433 = vmatprep.subr.bf16.mxu0 %v621
    %2434 = vmatpush1.bf16.msra.mxu0 %v620
    %2435 = vmatprep.subr.bf16.mxu0 %v617
    %2436 = vmatpush1.bf16.msra.mxu0 %v616
    %2437 = vmatprep.subr.bf16.mxu0 %v613
    %2438 = vmatpush1.bf16.msra.mxu0 %v612
    %2439 = vmatprep.subr.bf16.mxu0 %v609
    %2440 = vmatpush1.bf16.msra.mxu0 %v608
    %2441 = vmatprep.subr.bf16.mxu0 %v605
    %2442 = vmatpush1.bf16.msra.mxu0 %v604
    %2443 = vmatprep.subr.bf16.mxu0 %v601
    %2444 = vmatpush1.bf16.msra.mxu0 %v600
    %2445 = vmatprep.subr.bf16.mxu0 %v597
    %2446 = vmatpush1.bf16.msra.mxu0 %v596
    %2447 = vmatprep.subr.bf16.mxu0 %v593
    %2448 = vmatpush1.bf16.msra.mxu0 %v592
    %2449 = vmatprep.subr.bf16.mxu0 0
    %2450 = vmatpush2.bf16.msra.mxu0 0
    %2451 = vmatprep.subr.bf16.mxu0 0
    %2452 = vmatpush2.bf16.msra.mxu0 0
    %2453 = vmatprep.subr.bf16.mxu0 0
    %2454 = vmatpush2.bf16.msra.mxu0 0
    %2455 = vmatprep.subr.bf16.mxu0 0
    %2456 = vmatpush2.bf16.msra.mxu0 0
    %2457 = vmatprep.subr.bf16.mxu0 0
    %2458 = vmatpush2.bf16.msra.mxu0 0
    %2459 = vmatprep.subr.bf16.mxu0 0
    %2460 = vmatpush2.bf16.msra.mxu0 0
    %2461 = vmatprep.subr.bf16.mxu0 0
    %2462 = vmatpush2.bf16.msra.mxu0 0
    %2463 = vmatprep.subr.bf16.mxu0 0
    %2464 = vmatpush2.bf16.msra.mxu0 0
    %2465 = vmatprep.mubr.bf16.mxu0 0
    %2466 = vmatmul.mubr.bf16.gmra.mxu0 %v2432
    %v2467 = vpop.f32.mrf.mxu0
    %v2468 = vadd.f32 %v2258, %v2467
    %v2469 = vpop.f32.mrf.mxu0
    %v2470 = vadd.f32 %v2260, %v2469
    %v2471 = vpop.f32.mrf.mxu0
    %v2472 = vpop.f32.mrf.mxu0
    %2473 = vdwg.mxu0
    %2474 = vmatprep.subr.bf16.mxu0 %v623
    %2475 = vmatpush1.bf16.msra.mxu0 %v622
    %2476 = vmatprep.subr.bf16.mxu0 %v619
    %2477 = vmatpush1.bf16.msra.mxu0 %v618
    %2478 = vmatprep.subr.bf16.mxu0 %v615
    %2479 = vmatpush1.bf16.msra.mxu0 %v614
    %2480 = vmatprep.subr.bf16.mxu0 %v611
    %2481 = vmatpush1.bf16.msra.mxu0 %v610
    %2482 = vmatprep.subr.bf16.mxu0 %v607
    %2483 = vmatpush1.bf16.msra.mxu0 %v606
    %2484 = vmatprep.subr.bf16.mxu0 %v603
    %2485 = vmatpush1.bf16.msra.mxu0 %v602
    %2486 = vmatprep.subr.bf16.mxu0 %v599
    %2487 = vmatpush1.bf16.msra.mxu0 %v598
    %2488 = vmatprep.subr.bf16.mxu0 %v595
    %2489 = vmatpush1.bf16.msra.mxu0 %v594
    %2490 = vmatprep.subr.bf16.mxu0 0
    %2491 = vmatpush2.bf16.msra.mxu0 0
    %2492 = vmatprep.subr.bf16.mxu0 0
    %2493 = vmatpush2.bf16.msra.mxu0 0
    %2494 = vmatprep.subr.bf16.mxu0 0
    %2495 = vmatpush2.bf16.msra.mxu0 0
    %2496 = vmatprep.subr.bf16.mxu0 0
    %2497 = vmatpush2.bf16.msra.mxu0 0
    %2498 = vmatprep.subr.bf16.mxu0 0
    %2499 = vmatpush2.bf16.msra.mxu0 0
    %2500 = vmatprep.subr.bf16.mxu0 0
    %2501 = vmatpush2.bf16.msra.mxu0 0
    %2502 = vmatprep.subr.bf16.mxu0 0
    %2503 = vmatpush2.bf16.msra.mxu0 0
    %2504 = vmatprep.subr.bf16.mxu0 0
    %2505 = vmatpush2.bf16.msra.mxu0 0
    %2506 = vmatprep.mubr.bf16.mxu0 0
    %2507 = vmatmul.mubr.bf16.gmra.mxu0 %v2432
    %v2508 = vpop.f32.mrf.mxu0
    %v2509 = vadd.f32 %v2299, %v2508
    %v2510 = vpop.f32.mrf.mxu0
    %v2511 = vadd.f32 %v2301, %v2510
    %v2512 = vpop.f32.mrf.mxu0
    %v2513 = vpop.f32.mrf.mxu0
    %2514 = vdwg.mxu0
    %v2515 = vxor.u32 %v2468, 2147483648
    %v2516 = vxor.u32 %v2470, 2147483648
    %v2517 = vmul.f32 %v2515, 1.442695
    %v2518 = vpow.pop %v2517
    %v2519 = vmul.f32 %v2516, 1.442695
    %v2520 = vpow.pop %v2519
    %v2521 = vadd.f32 %v2518, 1.0
    %v2522 = vadd.f32 %v2520, 1.0
    %v2523 = vrcp.pop %v2521
    %v2524 = vmul.f32 1.0, %v2523
    %v2525 = vrcp.pop %v2522
    %v2526 = vmul.f32 1.0, %v2525
    %v2527 = vtanh.pop %v2509
    %v2528 = vxor.u32 %v2511, 2147483648
    %v2529 = vmul.f32 %v2528, 1.442695
    %v2530 = vpow.pop %v2529
    %v2531 = vadd.f32 %v2530, 1.0
    %v2532 = vrcp.pop %v2531
    %v2533 = vmul.f32 1.0, %v2532
    %v2534 = vmul.f32 %v2526, %v2219
    %v2535 = vmul.f32 %v2524, %v2527
    %v2536 = vadd.f32 %v2534, %v2535
    %v2537 = vtanh.pop %v2536
    %v2538 = vmul.f32 %v2533, %v2537
    %v2539 = vpack.c.bf16 %v2538, %v2538
    %2540 = vmatprep.subr.bf16.mxu0 %v920
    %2541 = vmatpush1.bf16.msra.mxu0 %v919
    %2542 = vmatprep.subr.bf16.mxu0 %v916
    %2543 = vmatpush1.bf16.msra.mxu0 %v915
    %2544 = vmatprep.subr.bf16.mxu0 %v912
    %2545 = vmatpush1.bf16.msra.mxu0 %v911
    %2546 = vmatprep.subr.bf16.mxu0 %v908
    %2547 = vmatpush1.bf16.msra.mxu0 %v907
    %2548 = vmatprep.subr.bf16.mxu0 %v904
    %2549 = vmatpush1.bf16.msra.mxu0 %v903
    %2550 = vmatprep.subr.bf16.mxu0 %v900
    %2551 = vmatpush1.bf16.msra.mxu0 %v899
    %2552 = vmatprep.subr.bf16.mxu0 %v896
    %2553 = vmatpush1.bf16.msra.mxu0 %v895
    %2554 = vmatprep.subr.bf16.mxu0 %v892
    %2555 = vmatpush1.bf16.msra.mxu0 %v891
    %2556 = vmatprep.subr.bf16.mxu0 0
    %2557 = vmatpush2.bf16.msra.mxu0 0
    %2558 = vmatprep.subr.bf16.mxu0 0
    %2559 = vmatpush2.bf16.msra.mxu0 0
    %2560 = vmatprep.subr.bf16.mxu0 0
    %2561 = vmatpush2.bf16.msra.mxu0 0
    %2562 = vmatprep.subr.bf16.mxu0 0
    %2563 = vmatpush2.bf16.msra.mxu0 0
    %2564 = vmatprep.subr.bf16.mxu0 0
    %2565 = vmatpush2.bf16.msra.mxu0 0
    %2566 = vmatprep.subr.bf16.mxu0 0
    %2567 = vmatpush2.bf16.msra.mxu0 0
    %2568 = vmatprep.subr.bf16.mxu0 0
    %2569 = vmatpush2.bf16.msra.mxu0 0
    %2570 = vmatprep.subr.bf16.mxu0 0
    %2571 = vmatpush2.bf16.msra.mxu0 0
    %2572 = vmatprep.mubr.bf16.mxu0 0
    %2573 = vmatmul.mubr.bf16.gmra.mxu0 %v2539
    %v2574 = vpop.f32.mrf.mxu0
    %v2575 = vadd.f32 %v123, %v2574
    %v2576 = vpop.f32.mrf.mxu0
    %v2577 = vadd.f32 %v127, %v2576
    %v2578 = vpop.f32.mrf.mxu0
    %v2579 = vpop.f32.mrf.mxu0
    %2580 = vdwg.mxu0
    %2581 = vmatprep.subr.bf16.mxu0 %v922
    %2582 = vmatpush1.bf16.msra.mxu0 %v921
    %2583 = vmatprep.subr.bf16.mxu0 %v918
    %2584 = vmatpush1.bf16.msra.mxu0 %v917
    %2585 = vmatprep.subr.bf16.mxu0 %v914
    %2586 = vmatpush1.bf16.msra.mxu0 %v913
    %2587 = vmatprep.subr.bf16.mxu0 %v910
    %2588 = vmatpush1.bf16.msra.mxu0 %v909
    %2589 = vmatprep.subr.bf16.mxu0 %v906
    %2590 = vmatpush1.bf16.msra.mxu0 %v905
    %2591 = vmatprep.subr.bf16.mxu0 %v902
    %2592 = vmatpush1.bf16.msra.mxu0 %v901
    %2593 = vmatprep.subr.bf16.mxu0 %v898
    %2594 = vmatpush1.bf16.msra.mxu0 %v897
    %2595 = vmatprep.subr.bf16.mxu0 %v894
    %2596 = vmatpush1.bf16.msra.mxu0 %v893
    %2597 = vmatprep.subr.bf16.mxu0 0
    %2598 = vmatpush2.bf16.msra.mxu0 0
    %2599 = vmatprep.subr.bf16.mxu0 0
    %2600 = vmatpush2.bf16.msra.mxu0 0
    %2601 = vmatprep.subr.bf16.mxu0 0
    %2602 = vmatpush2.bf16.msra.mxu0 0
    %2603 = vmatprep.subr.bf16.mxu0 0
    %2604 = vmatpush2.bf16.msra.mxu0 0
    %2605 = vmatprep.subr.bf16.mxu0 0
    %2606 = vmatpush2.bf16.msra.mxu0 0
    %2607 = vmatprep.subr.bf16.mxu0 0
    %2608 = vmatpush2.bf16.msra.mxu0 0
    %2609 = vmatprep.subr.bf16.mxu0 0
    %2610 = vmatpush2.bf16.msra.mxu0 0
    %2611 = vmatprep.subr.bf16.mxu0 0
    %2612 = vmatpush2.bf16.msra.mxu0 0
    %2613 = vmatprep.mubr.bf16.mxu0 0
    %2614 = vmatmul.mubr.bf16.gmra.mxu0 %v2539
    %v2615 = vpop.f32.mrf.mxu0
    %v2616 = vadd.f32 %v131, %v2615
    %v2617 = vpop.f32.mrf.mxu0
    %v2618 = vadd.f32 %v135, %v2617
    %v2619 = vpop.f32.mrf.mxu0
    %v2620 = vpop.f32.mrf.mxu0
    %2621 = vdwg.mxu0
    %s2622 = scalar_lea.vmem %s0, 12
    %v2623 = vld [vmem:[%s2622] sm:$0x3]
    %2625 = vset.pattern.permute.xlu0 0
    %2626 = vperm.xlu0 %2625, %v2623
    %v2627 = vpop.permute.xlu0 %2626
    %v2629 = vmul.f32 %v2627, %v79
    %v2630 = vmul.f32 %v2627, %v83
    %v2631 = vmul.f32 %v2627, %v87
    %v2632 = vmul.f32 %v2627, %v91
    %v2633 = vadd.f32 %v2629, %v101
    %v2634 = vadd.f32 %v2630, %v105
    %v2635 = vadd.f32 %v2631, %v109
    %v2636 = vadd.f32 %v2632, %v113
    %v2637 = vpack.c.bf16 %v2430, %v2430
    %2638 = vmatprep.subr.bf16.mxu0 %v311
    %2639 = vmatpush1.bf16.msra.mxu0 %v310
    %2640 = vmatprep.subr.bf16.mxu0 %v307
    %2641 = vmatpush1.bf16.msra.mxu0 %v306
    %2642 = vmatprep.subr.bf16.mxu0 %v303
    %2643 = vmatpush1.bf16.msra.mxu0 %v302
    %2644 = vmatprep.subr.bf16.mxu0 %v299
    %2645 = vmatpush1.bf16.msra.mxu0 %v298
    %2646 = vmatprep.subr.bf16.mxu0 %v295
    %2647 = vmatpush1.bf16.msra.mxu0 %v294
    %2648 = vmatprep.subr.bf16.mxu0 %v291
    %2649 = vmatpush1.bf16.msra.mxu0 %v290
    %2650 = vmatprep.subr.bf16.mxu0 %v287
    %2651 = vmatpush1.bf16.msra.mxu0 %v286
    %2652 = vmatprep.subr.bf16.mxu0 %v283
    %2653 = vmatpush1.bf16.msra.mxu0 %v282
    %2654 = vmatprep.subr.bf16.mxu0 0
    %2655 = vmatpush2.bf16.msra.mxu0 0
    %2656 = vmatprep.subr.bf16.mxu0 0
    %2657 = vmatpush2.bf16.msra.mxu0 0
    %2658 = vmatprep.subr.bf16.mxu0 0
    %2659 = vmatpush2.bf16.msra.mxu0 0
    %2660 = vmatprep.subr.bf16.mxu0 0
    %2661 = vmatpush2.bf16.msra.mxu0 0
    %2662 = vmatprep.subr.bf16.mxu0 0
    %2663 = vmatpush2.bf16.msra.mxu0 0
    %2664 = vmatprep.subr.bf16.mxu0 0
    %2665 = vmatpush2.bf16.msra.mxu0 0
    %2666 = vmatprep.subr.bf16.mxu0 0
    %2667 = vmatpush2.bf16.msra.mxu0 0
    %2668 = vmatprep.subr.bf16.mxu0 0
    %2669 = vmatpush2.bf16.msra.mxu0 0
    %2670 = vmatprep.mubr.bf16.mxu0 0
    %2671 = vmatmul.mubr.bf16.gmra.mxu0 %v2637
    %v2672 = vpop.f32.mrf.mxu0
    %v2673 = vadd.f32 0.0, %v2672
    %v2674 = vpop.f32.mrf.mxu0
    %v2675 = vadd.f32 0.0, %v2674
    %v2676 = vpop.f32.mrf.mxu0
    %v2677 = vpop.f32.mrf.mxu0
    %2678 = vdwg.mxu0
    %2679 = vmatprep.subr.bf16.mxu0 %v313
    %2680 = vmatpush1.bf16.msra.mxu0 %v312
    %2681 = vmatprep.subr.bf16.mxu0 %v309
    %2682 = vmatpush1.bf16.msra.mxu0 %v308
    %2683 = vmatprep.subr.bf16.mxu0 %v305
    %2684 = vmatpush1.bf16.msra.mxu0 %v304
    %2685 = vmatprep.subr.bf16.mxu0 %v301
    %2686 = vmatpush1.bf16.msra.mxu0 %v300
    %2687 = vmatprep.subr.bf16.mxu0 %v297
    %2688 = vmatpush1.bf16.msra.mxu0 %v296
    %2689 = vmatprep.subr.bf16.mxu0 %v293
    %2690 = vmatpush1.bf16.msra.mxu0 %v292
    %2691 = vmatprep.subr.bf16.mxu0 %v289
    %2692 = vmatpush1.bf16.msra.mxu0 %v288
    %2693 = vmatprep.subr.bf16.mxu0 %v285
    %2694 = vmatpush1.bf16.msra.mxu0 %v284
    %2695 = vmatprep.subr.bf16.mxu0 0
    %2696 = vmatpush2.bf16.msra.mxu0 0
    %2697 = vmatprep.subr.bf16.mxu0 0
    %2698 = vmatpush2.bf16.msra.mxu0 0
    %2699 = vmatprep.subr.bf16.mxu0 0
    %2700 = vmatpush2.bf16.msra.mxu0 0
    %2701 = vmatprep.subr.bf16.mxu0 0
    %2702 = vmatpush2.bf16.msra.mxu0 0
    %2703 = vmatprep.subr.bf16.mxu0 0
    %2704 = vmatpush2.bf16.msra.mxu0 0
    %2705 = vmatprep.subr.bf16.mxu0 0
    %2706 = vmatpush2.bf16.msra.mxu0 0
    %2707 = vmatprep.subr.bf16.mxu0 0
    %2708 = vmatpush2.bf16.msra.mxu0 0
    %2709 = vmatprep.subr.bf16.mxu0 0
    %2710 = vmatpush2.bf16.msra.mxu0 0
    %2711 = vmatprep.mubr.bf16.mxu0 0
    %2712 = vmatmul.mubr.bf16.gmra.mxu0 %v2637
    %v2713 = vpop.f32.mrf.mxu0
    %v2714 = vadd.f32 0.0, %v2713
    %v2715 = vpop.f32.mrf.mxu0
    %v2716 = vadd.f32 0.0, %v2715
    %v2717 = vpop.f32.mrf.mxu0
    %v2718 = vpop.f32.mrf.mxu0
    %2719 = vdwg.mxu0
    %v2720 = vadd.f32 %v2633, %v2673
    %v2721 = vadd.f32 %v2634, %v2675
    %v2722 = vadd.f32 %v2635, %v2714
    %v2723 = vadd.f32 %v2636, %v2716
    %v2724 = vxor.u32 %v2720, 2147483648
    %v2725 = vxor.u32 %v2721, 2147483648
    %v2726 = vmul.f32 %v2724, 1.442695
    %v2727 = vpow.pop %v2726
    %v2728 = vmul.f32 %v2725, 1.442695
    %v2729 = vpow.pop %v2728
    %v2730 = vadd.f32 %v2727, 1.0
    %v2731 = vadd.f32 %v2729, 1.0
    %v2732 = vrcp.pop %v2730
    %v2733 = vmul.f32 1.0, %v2732
    %v2734 = vrcp.pop %v2731
    %v2735 = vmul.f32 1.0, %v2734
    %v2736 = vtanh.pop %v2722
    %v2737 = vxor.u32 %v2723, 2147483648
    %v2738 = vmul.f32 %v2737, 1.442695
    %v2739 = vpow.pop %v2738
    %v2740 = vadd.f32 %v2739, 1.0
    %v2741 = vrcp.pop %v2740
    %v2742 = vmul.f32 1.0, %v2741
    %v2743 = vmul.f32 %v2735, %v2428
    %v2744 = vmul.f32 %v2733, %v2736
    %v2745 = vadd.f32 %v2743, %v2744
    %v2746 = vtanh.pop %v2745
    %v2747 = vmul.f32 %v2742, %v2746
    %v2748 = vmax.f32 %v2747, 0.0
    %v2749 = vpack.c.bf16 %v2748, %v2748
    %2750 = vmatprep.subr.bf16.mxu0 %v621
    %2751 = vmatpush1.bf16.msra.mxu0 %v620
    %2752 = vmatprep.subr.bf16.mxu0 %v617
    %2753 = vmatpush1.bf16.msra.mxu0 %v616
    %2754 = vmatprep.subr.bf16.mxu0 %v613
    %2755 = vmatpush1.bf16.msra.mxu0 %v612
    %2756 = vmatprep.subr.bf16.mxu0 %v609
    %2757 = vmatpush1.bf16.msra.mxu0 %v608
    %2758 = vmatprep.subr.bf16.mxu0 %v605
    %2759 = vmatpush1.bf16.msra.mxu0 %v604
    %2760 = vmatprep.subr.bf16.mxu0 %v601
    %2761 = vmatpush1.bf16.msra.mxu0 %v600
    %2762 = vmatprep.subr.bf16.mxu0 %v597
    %2763 = vmatpush1.bf16.msra.mxu0 %v596
    %2764 = vmatprep.subr.bf16.mxu0 %v593
    %2765 = vmatpush1.bf16.msra.mxu0 %v592
    %2766 = vmatprep.subr.bf16.mxu0 0
    %2767 = vmatpush2.bf16.msra.mxu0 0
    %2768 = vmatprep.subr.bf16.mxu0 0
    %2769 = vmatpush2.bf16.msra.mxu0 0
    %2770 = vmatprep.subr.bf16.mxu0 0
    %2771 = vmatpush2.bf16.msra.mxu0 0
    %2772 = vmatprep.subr.bf16.mxu0 0
    %2773 = vmatpush2.bf16.msra.mxu0 0
    %2774 = vmatprep.subr.bf16.mxu0 0
    %2775 = vmatpush2.bf16.msra.mxu0 0
    %2776 = vmatprep.subr.bf16.mxu0 0
    %2777 = vmatpush2.bf16.msra.mxu0 0
    %2778 = vmatprep.subr.bf16.mxu0 0
    %2779 = vmatpush2.bf16.msra.mxu0 0
    %2780 = vmatprep.subr.bf16.mxu0 0
    %2781 = vmatpush2.bf16.msra.mxu0 0
    %2782 = vmatprep.mubr.bf16.mxu0 0
    %2783 = vmatmul.mubr.bf16.gmra.mxu0 %v2749
    %v2784 = vpop.f32.mrf.mxu0
    %v2785 = vadd.f32 %v2575, %v2784
    %v2786 = vpop.f32.mrf.mxu0
    %v2787 = vadd.f32 %v2577, %v2786
    %v2788 = vpop.f32.mrf.mxu0
    %v2789 = vpop.f32.mrf.mxu0
    %2790 = vdwg.mxu0
    %2791 = vmatprep.subr.bf16.mxu0 %v623
    %2792 = vmatpush1.bf16.msra.mxu0 %v622
    %2793 = vmatprep.subr.bf16.mxu0 %v619
    %2794 = vmatpush1.bf16.msra.mxu0 %v618
    %2795 = vmatprep.subr.bf16.mxu0 %v615
    %2796 = vmatpush1.bf16.msra.mxu0 %v614
    %2797 = vmatprep.subr.bf16.mxu0 %v611
    %2798 = vmatpush1.bf16.msra.mxu0 %v610
    %2799 = vmatprep.subr.bf16.mxu0 %v607
    %2800 = vmatpush1.bf16.msra.mxu0 %v606
    %2801 = vmatprep.subr.bf16.mxu0 %v603
    %2802 = vmatpush1.bf16.msra.mxu0 %v602
    %2803 = vmatprep.subr.bf16.mxu0 %v599
    %2804 = vmatpush1.bf16.msra.mxu0 %v598
    %2805 = vmatprep.subr.bf16.mxu0 %v595
    %2806 = vmatpush1.bf16.msra.mxu0 %v594
    %2807 = vmatprep.subr.bf16.mxu0 0
    %2808 = vmatpush2.bf16.msra.mxu0 0
    %2809 = vmatprep.subr.bf16.mxu0 0
    %2810 = vmatpush2.bf16.msra.mxu0 0
    %2811 = vmatprep.subr.bf16.mxu0 0
    %2812 = vmatpush2.bf16.msra.mxu0 0
    %2813 = vmatprep.subr.bf16.mxu0 0
    %2814 = vmatpush2.bf16.msra.mxu0 0
    %2815 = vmatprep.subr.bf16.mxu0 0
    %2816 = vmatpush2.bf16.msra.mxu0 0
    %2817 = vmatprep.subr.bf16.mxu0 0
    %2818 = vmatpush2.bf16.msra.mxu0 0
    %2819 = vmatprep.subr.bf16.mxu0 0
    %2820 = vmatpush2.bf16.msra.mxu0 0
    %2821 = vmatprep.subr.bf16.mxu0 0
    %2822 = vmatpush2.bf16.msra.mxu0 0
    %2823 = vmatprep.mubr.bf16.mxu0 0
    %2824 = vmatmul.mubr.bf16.gmra.mxu0 %v2749
    %v2825 = vpop.f32.mrf.mxu0
    %v2826 = vadd.f32 %v2616, %v2825
    %v2827 = vpop.f32.mrf.mxu0
    %v2828 = vadd.f32 %v2618, %v2827
    %v2829 = vpop.f32.mrf.mxu0
    %v2830 = vpop.f32.mrf.mxu0
    %2831 = vdwg.mxu0
    %v2832 = vxor.u32 %v2785, 2147483648
    %v2833 = vxor.u32 %v2787, 2147483648
    %v2834 = vmul.f32 %v2832, 1.442695
    %v2835 = vpow.pop %v2834
    %v2836 = vmul.f32 %v2833, 1.442695
    %v2837 = vpow.pop %v2836
    %v2838 = vadd.f32 %v2835, 1.0
    %v2839 = vadd.f32 %v2837, 1.0
    %v2840 = vrcp.pop %v2838
    %v2841 = vmul.f32 1.0, %v2840
    %v2842 = vrcp.pop %v2839
    %v2843 = vmul.f32 1.0, %v2842
    %v2844 = vtanh.pop %v2826
    %v2845 = vxor.u32 %v2828, 2147483648
    %v2846 = vmul.f32 %v2845, 1.442695
    %v2847 = vpow.pop %v2846
    %v2848 = vadd.f32 %v2847, 1.0
    %v2849 = vrcp.pop %v2848
    %v2850 = vmul.f32 1.0, %v2849
    %v2851 = vmul.f32 %v2843, %v2536
    %v2852 = vmul.f32 %v2841, %v2844
    %v2853 = vadd.f32 %v2851, %v2852
    %v2854 = vtanh.pop %v2853
    %v2855 = vmul.f32 %v2850, %v2854
    %v2856 = vpack.c.bf16 %v2855, %v2855
    %2857 = vmatprep.subr.bf16.mxu0 %v920
    %2858 = vmatpush1.bf16.msra.mxu0 %v919
    %2859 = vmatprep.subr.bf16.mxu0 %v916
    %2860 = vmatpush1.bf16.msra.mxu0 %v915
    %2861 = vmatprep.subr.bf16.mxu0 %v912
    %2862 = vmatpush1.bf16.msra.mxu0 %v911
    %2863 = vmatprep.subr.bf16.mxu0 %v908
    %2864 = vmatpush1.bf16.msra.mxu0 %v907
    %2865 = vmatprep.subr.bf16.mxu0 %v904
    %2866 = vmatpush1.bf16.msra.mxu0 %v903
    %2867 = vmatprep.subr.bf16.mxu0 %v900
    %2868 = vmatpush1.bf16.msra.mxu0 %v899
    %2869 = vmatprep.subr.bf16.mxu0 %v896
    %2870 = vmatpush1.bf16.msra.mxu0 %v895
    %2871 = vmatprep.subr.bf16.mxu0 %v892
    %2872 = vmatpush1.bf16.msra.mxu0 %v891
    %2873 = vmatprep.subr.bf16.mxu0 0
    %2874 = vmatpush2.bf16.msra.mxu0 0
    %2875 = vmatprep.subr.bf16.mxu0 0
    %2876 = vmatpush2.bf16.msra.mxu0 0
    %2877 = vmatprep.subr.bf16.mxu0 0
    %2878 = vmatpush2.bf16.msra.mxu0 0
    %2879 = vmatprep.subr.bf16.mxu0 0
    %2880 = vmatpush2.bf16.msra.mxu0 0
    %2881 = vmatprep.subr.bf16.mxu0 0
    %2882 = vmatpush2.bf16.msra.mxu0 0
    %2883 = vmatprep.subr.bf16.mxu0 0
    %2884 = vmatpush2.bf16.msra.mxu0 0
    %2885 = vmatprep.subr.bf16.mxu0 0
    %2886 = vmatpush2.bf16.msra.mxu0 0
    %2887 = vmatprep.subr.bf16.mxu0 0
    %2888 = vmatpush2.bf16.msra.mxu0 0
    %2889 = vmatprep.mubr.bf16.mxu0 0
    %2890 = vmatmul.mubr.bf16.gmra.mxu0 %v2856
    %v2891 = vpop.f32.mrf.mxu0
    %v2892 = vadd.f32 %v123, %v2891
    %v2893 = vpop.f32.mrf.mxu0
    %v2894 = vadd.f32 %v127, %v2893
    %v2895 = vpop.f32.mrf.mxu0
    %v2896 = vpop.f32.mrf.mxu0
    %2897 = vdwg.mxu0
    %2898 = vmatprep.subr.bf16.mxu0 %v922
    %2899 = vmatpush1.bf16.msra.mxu0 %v921
    %2900 = vmatprep.subr.bf16.mxu0 %v918
    %2901 = vmatpush1.bf16.msra.mxu0 %v917
    %2902 = vmatprep.subr.bf16.mxu0 %v914
    %2903 = vmatpush1.bf16.msra.mxu0 %v913
    %2904 = vmatprep.subr.bf16.mxu0 %v910
    %2905 = vmatpush1.bf16.msra.mxu0 %v909
    %2906 = vmatprep.subr.bf16.mxu0 %v906
    %2907 = vmatpush1.bf16.msra.mxu0 %v905
    %2908 = vmatprep.subr.bf16.mxu0 %v902
    %2909 = vmatpush1.bf16.msra.mxu0 %v901
    %2910 = vmatprep.subr.bf16.mxu0 %v898
    %2911 = vmatpush1.bf16.msra.mxu0 %v897
    %2912 = vmatprep.subr.bf16.mxu0 %v894
    %2913 = vmatpush1.bf16.msra.mxu0 %v893
    %2914 = vmatprep.subr.bf16.mxu0 0
    %2915 = vmatpush2.bf16.msra.mxu0 0
    %2916 = vmatprep.subr.bf16.mxu0 0
    %2917 = vmatpush2.bf16.msra.mxu0 0
    %2918 = vmatprep.subr.bf16.mxu0 0
    %2919 = vmatpush2.bf16.msra.mxu0 0
    %2920 = vmatprep.subr.bf16.mxu0 0
    %2921 = vmatpush2.bf16.msra.mxu0 0
    %2922 = vmatprep.subr.bf16.mxu0 0
    %2923 = vmatpush2.bf16.msra.mxu0 0
    %2924 = vmatprep.subr.bf16.mxu0 0
    %2925 = vmatpush2.bf16.msra.mxu0 0
    %2926 = vmatprep.subr.bf16.mxu0 0
    %2927 = vmatpush2.bf16.msra.mxu0 0
    %2928 = vmatprep.subr.bf16.mxu0 0
    %2929 = vmatpush2.bf16.msra.mxu0 0
    %2930 = vmatprep.mubr.bf16.mxu0 0
    %2931 = vmatmul.mubr.bf16.gmra.mxu0 %v2856
    %v2932 = vpop.f32.mrf.mxu0
    %v2933 = vadd.f32 %v131, %v2932
    %v2934 = vpop.f32.mrf.mxu0
    %v2935 = vadd.f32 %v135, %v2934
    %v2936 = vpop.f32.mrf.mxu0
    %v2937 = vpop.f32.mrf.mxu0
    %2938 = vdwg.mxu0
    %s2939 = scalar_lea.vmem %s0, 14
    %v2940 = vld [vmem:[%s2939] sm:$0x3]
    %2942 = vset.pattern.permute.xlu0 0
    %2943 = vperm.xlu0 %2942, %v2940
    %v2944 = vpop.permute.xlu0 %2943
    %v2946 = vmul.f32 %v2944, %v79
    %v2947 = vmul.f32 %v2944, %v83
    %v2948 = vmul.f32 %v2944, %v87
    %v2949 = vmul.f32 %v2944, %v91
    %v2950 = vadd.f32 %v2946, %v101
    %v2951 = vadd.f32 %v2947, %v105
    %v2952 = vadd.f32 %v2948, %v109
    %v2953 = vadd.f32 %v2949, %v113
    %v2954 = vpack.c.bf16 %v2747, %v2747
    %2955 = vmatprep.subr.bf16.mxu0 %v311
    %2956 = vmatpush1.bf16.msra.mxu0 %v310
    %2957 = vmatprep.subr.bf16.mxu0 %v307
    %2958 = vmatpush1.bf16.msra.mxu0 %v306
    %2959 = vmatprep.subr.bf16.mxu0 %v303
    %2960 = vmatpush1.bf16.msra.mxu0 %v302
    %2961 = vmatprep.subr.bf16.mxu0 %v299
    %2962 = vmatpush1.bf16.msra.mxu0 %v298
    %2963 = vmatprep.subr.bf16.mxu0 %v295
    %2964 = vmatpush1.bf16.msra.mxu0 %v294
    %2965 = vmatprep.subr.bf16.mxu0 %v291
    %2966 = vmatpush1.bf16.msra.mxu0 %v290
    %2967 = vmatprep.subr.bf16.mxu0 %v287
    %2968 = vmatpush1.bf16.msra.mxu0 %v286
    %2969 = vmatprep.subr.bf16.mxu0 %v283
    %2970 = vmatpush1.bf16.msra.mxu0 %v282
    %2971 = vmatprep.subr.bf16.mxu0 0
    %2972 = vmatpush2.bf16.msra.mxu0 0
    %2973 = vmatprep.subr.bf16.mxu0 0
    %2974 = vmatpush2.bf16.msra.mxu0 0
    %2975 = vmatprep.subr.bf16.mxu0 0
    %2976 = vmatpush2.bf16.msra.mxu0 0
    %2977 = vmatprep.subr.bf16.mxu0 0
    %2978 = vmatpush2.bf16.msra.mxu0 0
    %2979 = vmatprep.subr.bf16.mxu0 0
    %2980 = vmatpush2.bf16.msra.mxu0 0
    %2981 = vmatprep.subr.bf16.mxu0 0
    %2982 = vmatpush2.bf16.msra.mxu0 0
    %2983 = vmatprep.subr.bf16.mxu0 0
    %2984 = vmatpush2.bf16.msra.mxu0 0
    %2985 = vmatprep.subr.bf16.mxu0 0
    %2986 = vmatpush2.bf16.msra.mxu0 0
    %2987 = vmatprep.mubr.bf16.mxu0 0
    %2988 = vmatmul.mubr.bf16.gmra.mxu0 %v2954
    %v2989 = vpop.f32.mrf.mxu0
    %v2990 = vadd.f32 0.0, %v2989
    %v2991 = vpop.f32.mrf.mxu0
    %v2992 = vadd.f32 0.0, %v2991
    %v2993 = vpop.f32.mrf.mxu0
    %v2994 = vpop.f32.mrf.mxu0
    %2995 = vdwg.mxu0
    %2996 = vmatprep.subr.bf16.mxu0 %v313
    %2997 = vmatpush1.bf16.msra.mxu0 %v312
    %2998 = vmatprep.subr.bf16.mxu0 %v309
    %2999 = vmatpush1.bf16.msra.mxu0 %v308
    %3000 = vmatprep.subr.bf16.mxu0 %v305
    %3001 = vmatpush1.bf16.msra.mxu0 %v304
    %3002 = vmatprep.subr.bf16.mxu0 %v301
    %3003 = vmatpush1.bf16.msra.mxu0 %v300
    %3004 = vmatprep.subr.bf16.mxu0 %v297
    %3005 = vmatpush1.bf16.msra.mxu0 %v296
    %3006 = vmatprep.subr.bf16.mxu0 %v293
    %3007 = vmatpush1.bf16.msra.mxu0 %v292
    %3008 = vmatprep.subr.bf16.mxu0 %v289
    %3009 = vmatpush1.bf16.msra.mxu0 %v288
    %3010 = vmatprep.subr.bf16.mxu0 %v285
    %3011 = vmatpush1.bf16.msra.mxu0 %v284
    %3012 = vmatprep.subr.bf16.mxu0 0
    %3013 = vmatpush2.bf16.msra.mxu0 0
    %3014 = vmatprep.subr.bf16.mxu0 0
    %3015 = vmatpush2.bf16.msra.mxu0 0
    %3016 = vmatprep.subr.bf16.mxu0 0
    %3017 = vmatpush2.bf16.msra.mxu0 0
    %3018 = vmatprep.subr.bf16.mxu0 0
    %3019 = vmatpush2.bf16.msra.mxu0 0
    %3020 = vmatprep.subr.bf16.mxu0 0
    %3021 = vmatpush2.bf16.msra.mxu0 0
    %3022 = vmatprep.subr.bf16.mxu0 0
    %3023 = vmatpush2.bf16.msra.mxu0 0
    %3024 = vmatprep.subr.bf16.mxu0 0
    %3025 = vmatpush2.bf16.msra.mxu0 0
    %3026 = vmatprep.subr.bf16.mxu0 0
    %3027 = vmatpush2.bf16.msra.mxu0 0
    %3028 = vmatprep.mubr.bf16.mxu0 0
    %3029 = vmatmul.mubr.bf16.gmra.mxu0 %v2954
    %v3030 = vpop.f32.mrf.mxu0
    %v3031 = vadd.f32 0.0, %v3030
    %v3032 = vpop.f32.mrf.mxu0
    %v3033 = vadd.f32 0.0, %v3032
    %v3034 = vpop.f32.mrf.mxu0
    %v3035 = vpop.f32.mrf.mxu0
    %3036 = vdwg.mxu0
    %v3037 = vadd.f32 %v2950, %v2990
    %v3038 = vadd.f32 %v2951, %v2992
    %v3039 = vadd.f32 %v2952, %v3031
    %v3040 = vadd.f32 %v2953, %v3033
    %v3041 = vxor.u32 %v3037, 2147483648
    %v3042 = vxor.u32 %v3038, 2147483648
    %v3043 = vmul.f32 %v3041, 1.442695
    %v3044 = vpow.pop %v3043
    %v3045 = vmul.f32 %v3042, 1.442695
    %v3046 = vpow.pop %v3045
    %v3047 = vadd.f32 %v3044, 1.0
    %v3048 = vadd.f32 %v3046, 1.0
    %v3049 = vrcp.pop %v3047
    %v3050 = vmul.f32 1.0, %v3049
    %v3051 = vrcp.pop %v3048
    %v3052 = vmul.f32 1.0, %v3051
    %v3053 = vtanh.pop %v3039
    %v3054 = vxor.u32 %v3040, 2147483648
    %v3055 = vmul.f32 %v3054, 1.442695
    %v3056 = vpow.pop %v3055
    %v3057 = vadd.f32 %v3056, 1.0
    %v3058 = vrcp.pop %v3057
    %v3059 = vmul.f32 1.0, %v3058
    %v3060 = vmul.f32 %v3052, %v2745
    %v3061 = vmul.f32 %v3050, %v3053
    %v3062 = vadd.f32 %v3060, %v3061
    %v3063 = vtanh.pop %v3062
    %v3064 = vmul.f32 %v3059, %v3063
    %v3065 = vmax.f32 %v3064, 0.0
    %v3066 = vpack.c.bf16 %v3065, %v3065
    %3067 = vmatprep.subr.bf16.mxu0 %v621
    %3068 = vmatpush1.bf16.msra.mxu0 %v620
    %3069 = vmatprep.subr.bf16.mxu0 %v617
    %3070 = vmatpush1.bf16.msra.mxu0 %v616
    %3071 = vmatprep.subr.bf16.mxu0 %v613
    %3072 = vmatpush1.bf16.msra.mxu0 %v612
    %3073 = vmatprep.subr.bf16.mxu0 %v609
    %3074 = vmatpush1.bf16.msra.mxu0 %v608
    %3075 = vmatprep.subr.bf16.mxu0 %v605
    %3076 = vmatpush1.bf16.msra.mxu0 %v604
    %3077 = vmatprep.subr.bf16.mxu0 %v601
    %3078 = vmatpush1.bf16.msra.mxu0 %v600
    %3079 = vmatprep.subr.bf16.mxu0 %v597
    %3080 = vmatpush1.bf16.msra.mxu0 %v596
    %3081 = vmatprep.subr.bf16.mxu0 %v593
    %3082 = vmatpush1.bf16.msra.mxu0 %v592
    %3083 = vmatprep.subr.bf16.mxu0 0
    %3084 = vmatpush2.bf16.msra.mxu0 0
    %3085 = vmatprep.subr.bf16.mxu0 0
    %3086 = vmatpush2.bf16.msra.mxu0 0
    %3087 = vmatprep.subr.bf16.mxu0 0
    %3088 = vmatpush2.bf16.msra.mxu0 0
    %3089 = vmatprep.subr.bf16.mxu0 0
    %3090 = vmatpush2.bf16.msra.mxu0 0
    %3091 = vmatprep.subr.bf16.mxu0 0
    %3092 = vmatpush2.bf16.msra.mxu0 0
    %3093 = vmatprep.subr.bf16.mxu0 0
    %3094 = vmatpush2.bf16.msra.mxu0 0
    %3095 = vmatprep.subr.bf16.mxu0 0
    %3096 = vmatpush2.bf16.msra.mxu0 0
    %3097 = vmatprep.subr.bf16.mxu0 0
    %3098 = vmatpush2.bf16.msra.mxu0 0
    %3099 = vmatprep.mubr.bf16.mxu0 0
    %3100 = vmatmul.mubr.bf16.gmra.mxu0 %v3066
    %v3101 = vpop.f32.mrf.mxu0
    %v3102 = vadd.f32 %v2892, %v3101
    %v3103 = vpop.f32.mrf.mxu0
    %v3104 = vadd.f32 %v2894, %v3103
    %v3105 = vpop.f32.mrf.mxu0
    %v3106 = vpop.f32.mrf.mxu0
    %3107 = vdwg.mxu0
    %3108 = vmatprep.subr.bf16.mxu0 %v623
    %3109 = vmatpush1.bf16.msra.mxu0 %v622
    %3110 = vmatprep.subr.bf16.mxu0 %v619
    %3111 = vmatpush1.bf16.msra.mxu0 %v618
    %3112 = vmatprep.subr.bf16.mxu0 %v615
    %3113 = vmatpush1.bf16.msra.mxu0 %v614
    %3114 = vmatprep.subr.bf16.mxu0 %v611
    %3115 = vmatpush1.bf16.msra.mxu0 %v610
    %3116 = vmatprep.subr.bf16.mxu0 %v607
    %3117 = vmatpush1.bf16.msra.mxu0 %v606
    %3118 = vmatprep.subr.bf16.mxu0 %v603
    %3119 = vmatpush1.bf16.msra.mxu0 %v602
    %3120 = vmatprep.subr.bf16.mxu0 %v599
    %3121 = vmatpush1.bf16.msra.mxu0 %v598
    %3122 = vmatprep.subr.bf16.mxu0 %v595
    %3123 = vmatpush1.bf16.msra.mxu0 %v594
    %3124 = vmatprep.subr.bf16.mxu0 0
    %3125 = vmatpush2.bf16.msra.mxu0 0
    %3126 = vmatprep.subr.bf16.mxu0 0
    %3127 = vmatpush2.bf16.msra.mxu0 0
    %3128 = vmatprep.subr.bf16.mxu0 0
    %3129 = vmatpush2.bf16.msra.mxu0 0
    %3130 = vmatprep.subr.bf16.mxu0 0
    %3131 = vmatpush2.bf16.msra.mxu0 0
    %3132 = vmatprep.subr.bf16.mxu0 0
    %3133 = vmatpush2.bf16.msra.mxu0 0
    %3134 = vmatprep.subr.bf16.mxu0 0
    %3135 = vmatpush2.bf16.msra.mxu0 0
    %3136 = vmatprep.subr.bf16.mxu0 0
    %3137 = vmatpush2.bf16.msra.mxu0 0
    %3138 = vmatprep.subr.bf16.mxu0 0
    %3139 = vmatpush2.bf16.msra.mxu0 0
    %3140 = vmatprep.mubr.bf16.mxu0 0
    %3141 = vmatmul.mubr.bf16.gmra.mxu0 %v3066
    %v3142 = vpop.f32.mrf.mxu0
    %v3143 = vadd.f32 %v2933, %v3142
    %v3144 = vpop.f32.mrf.mxu0
    %v3145 = vadd.f32 %v2935, %v3144
    %v3146 = vpop.f32.mrf.mxu0
    %v3147 = vpop.f32.mrf.mxu0
    %3148 = vdwg.mxu0
    %v3149 = vxor.u32 %v3102, 2147483648
    %v3150 = vxor.u32 %v3104, 2147483648
    %v3151 = vmul.f32 %v3149, 1.442695
    %v3152 = vpow.pop %v3151
    %v3153 = vmul.f32 %v3150, 1.442695
    %v3154 = vpow.pop %v3153
    %v3155 = vadd.f32 %v3152, 1.0
    %v3156 = vadd.f32 %v3154, 1.0
    %v3157 = vrcp.pop %v3155
    %v3158 = vmul.f32 1.0, %v3157
    %v3159 = vrcp.pop %v3156
    %v3160 = vmul.f32 1.0, %v3159
    %v3161 = vtanh.pop %v3143
    %v3162 = vxor.u32 %v3145, 2147483648
    %v3163 = vmul.f32 %v3162, 1.442695
    %v3164 = vpow.pop %v3163
    %v3165 = vadd.f32 %v3164, 1.0
    %v3166 = vrcp.pop %v3165
    %v3167 = vmul.f32 1.0, %v3166
    %v3168 = vmul.f32 %v3160, %v2853
    %v3169 = vmul.f32 %v3158, %v3161
    %v3170 = vadd.f32 %v3168, %v3169
    %v3171 = vtanh.pop %v3170
    %v3172 = vmul.f32 %v3167, %v3171
    %v3173 = vmax.f32 %v3172, 0.0
    %v3174 = vld [vmem:[%s7] sm:$0xff]
    %v3175 = vld [vmem:[%s7 + $0x8] sm:$0xff]
    %v3176 = vld [vmem:[%s7 + $0x10] sm:$0xff]
    %v3177 = vld [vmem:[%s7 + $0x18] sm:$0xff]
    %v3178 = vld [vmem:[%s7 + $0x20] sm:$0xff]
    %v3179 = vld [vmem:[%s7 + $0x28] sm:$0xff]
    %v3180 = vld [vmem:[%s7 + $0x30] sm:$0xff]
    %v3181 = vld [vmem:[%s7 + $0x38] sm:$0xff]
    %v3182 = vld [vmem:[%s7 + $0x40] sm:$0xff]
    %v3183 = vld [vmem:[%s7 + $0x48] sm:$0xff]
    %v3184 = vld [vmem:[%s7 + $0x50] sm:$0xff]
    %v3185 = vld [vmem:[%s7 + $0x58] sm:$0xff]
    %v3186 = vld [vmem:[%s7 + $0x60] sm:$0xff]
    %v3187 = vld [vmem:[%s7 + $0x68] sm:$0xff]
    %v3188 = vld [vmem:[%s7 + $0x70] sm:$0xff]
    %v3189 = vld [vmem:[%s7 + $0x78] sm:$0xff]
    %v3190 = vld [vmem:[%s8] sm:$0x1]
    %v3192 = vlaneseq
    %v3193 = vshrl.u32 %v3192, 7
    %v3194 = vsub.s32 0, %v3193
    %v3195 = vrot.slane %v3190, %v3194
    %3197 = vmatprep.subr.mxu0 0.0
    %3198 = vmatpush1.msra.mxu0 %v3189
    %3199 = vmatprep.subr.mxu0 0.0
    %3200 = vmatpush1.msra.mxu0 %v3188
    %3201 = vmatprep.subr.mxu0 0.0
    %3202 = vmatpush1.msra.mxu0 %v3187
    %3203 = vmatprep.subr.mxu0 0.0
    %3204 = vmatpush1.msra.mxu0 %v3186
    %3205 = vmatprep.subr.mxu0 0.0
    %3206 = vmatpush1.msra.mxu0 %v3185
    %3207 = vmatprep.subr.mxu0 0.0
    %3208 = vmatpush1.msra.mxu0 %v3184
    %3209 = vmatprep.subr.mxu0 0.0
    %3210 = vmatpush1.msra.mxu0 %v3183
    %3211 = vmatprep.subr.mxu0 0.0
    %3212 = vmatpush1.msra.mxu0 %v3182
    %3213 = vmatprep.subr.mxu0 0.0
    %3214 = vmatpush1.msra.mxu0 %v3181
    %3215 = vmatprep.subr.mxu0 0.0
    %3216 = vmatpush1.msra.mxu0 %v3180
    %3217 = vmatprep.subr.mxu0 0.0
    %3218 = vmatpush1.msra.mxu0 %v3179
    %3219 = vmatprep.subr.mxu0 0.0
    %3220 = vmatpush1.msra.mxu0 %v3178
    %3221 = vmatprep.subr.mxu0 0.0
    %3222 = vmatpush1.msra.mxu0 %v3177
    %3223 = vmatprep.subr.mxu0 0.0
    %3224 = vmatpush1.msra.mxu0 %v3176
    %3225 = vmatprep.subr.mxu0 0.0
    %3226 = vmatpush1.msra.mxu0 %v3175
    %3227 = vmatprep.subr.mxu0 0.0
    %3228 = vmatpush1.msra.mxu0 %v3174
    %3229 = vmatprep.subr.mxu0 0.0
    %3230 = vmatpush2.msra.mxu0 0.0
    %3231 = vmatprep.subr.mxu0 0.0
    %3232 = vmatpush2.msra.mxu0 0.0
    %3233 = vmatprep.subr.mxu0 0.0
    %3234 = vmatpush2.msra.mxu0 0.0
    %3235 = vmatprep.subr.mxu0 0.0
    %3236 = vmatpush2.msra.mxu0 0.0
    %3237 = vmatprep.subr.mxu0 0.0
    %3238 = vmatpush2.msra.mxu0 0.0
    %3239 = vmatprep.subr.mxu0 0.0
    %3240 = vmatpush2.msra.mxu0 0.0
    %3241 = vmatprep.subr.mxu0 0.0
    %3242 = vmatpush2.msra.mxu0 0.0
    %3243 = vmatprep.subr.mxu0 0.0
    %3244 = vmatpush2.msra.mxu0 0.0
    %3245 = vmatprep.subr.mxu0 0.0
    %3246 = vmatpush2.msra.mxu0 0.0
    %3247 = vmatprep.subr.mxu0 0.0
    %3248 = vmatpush2.msra.mxu0 0.0
    %3249 = vmatprep.subr.mxu0 0.0
    %3250 = vmatpush2.msra.mxu0 0.0
    %3251 = vmatprep.subr.mxu0 0.0
    %3252 = vmatpush2.msra.mxu0 0.0
    %3253 = vmatprep.subr.mxu0 0.0
    %3254 = vmatpush2.msra.mxu0 0.0
    %3255 = vmatprep.subr.mxu0 0.0
    %3256 = vmatpush2.msra.mxu0 0.0
    %3257 = vmatprep.subr.mxu0 0.0
    %3258 = vmatpush2.msra.mxu0 0.0
    %3259 = vmatprep.subr.mxu0 0.0
    %3260 = vmatpush2.msra.mxu0 0.0
    %3261 = vmatprep.mubr.f32.mxu0 0.0
    %3262 = vmatmul.mubr.f32.gmra.mxu0 %v3173
    %v3263 = vpop.f32.mrf.mxu0
    %v3264 = vadd.f32 %v3195, %v3263
    %v3265 = vpop.f32.mrf.mxu0
    %3266 = vdwg.mxu0
    %v3267 = vmax.f32 %v3264, 0.0
    %v3268 = vld [vmem:[%s9] sm:$0xff]
    %v3269 = vld [vmem:[%s9 + $0x8] sm:$0x3]
    %v3270 = vld [vmem:[#allocation5] sm:$0x1]
    %v3272 = vlaneseq
    %v3273 = vshrl.u32 %v3272, 7
    %v3274 = vsub.s32 0, %v3273
    %v3275 = vrot.slane %v3270, %v3274
    %vm3277 = vcmask 80896
    %v3279 = vsel %vm3277, %v3267, 0
    %vm3281 = vcmask 1041408
    %v3283 = vsel %vm3281, %v3269, 0
    %3285 = vmatprep.subr.mxu0 0.0
    %3286 = vmatpush1.msra.mxu0 0.0
    %3287 = vmatprep.subr.mxu0 0.0
    %3288 = vmatpush1.msra.mxu0 0.0
    %3289 = vmatprep.subr.mxu0 0.0
    %3290 = vmatpush1.msra.mxu0 0.0
    %3291 = vmatprep.subr.mxu0 0.0
    %3292 = vmatpush1.msra.mxu0 0.0
    %3293 = vmatprep.subr.mxu0 0.0
    %3294 = vmatpush1.msra.mxu0 0.0
    %3295 = vmatprep.subr.mxu0 0.0
    %3296 = vmatpush1.msra.mxu0 0.0
    %3297 = vmatprep.subr.mxu0 0.0
    %3298 = vmatpush1.msra.mxu0 0.0
    %3299 = vmatprep.subr.mxu0 0.0
    %3300 = vmatpush1.msra.mxu0 0.0
    %3301 = vmatprep.subr.mxu0 0.0
    %3302 = vmatpush1.msra.mxu0 0.0
    %3303 = vmatprep.subr.mxu0 0.0
    %3304 = vmatpush1.msra.mxu0 0.0
    %3305 = vmatprep.subr.mxu0 0.0
    %3306 = vmatpush1.msra.mxu0 0.0
    %3307 = vmatprep.subr.mxu0 0.0
    %3308 = vmatpush1.msra.mxu0 0.0
    %3309 = vmatprep.subr.mxu0 0.0
    %3310 = vmatpush1.msra.mxu0 0.0
    %3311 = vmatprep.subr.mxu0 0.0
    %3312 = vmatpush1.msra.mxu0 0.0
    %3313 = vmatprep.subr.mxu0 0.0
    %3314 = vmatpush1.msra.mxu0 %v3283
    %3315 = vmatprep.subr.mxu0 0.0
    %3316 = vmatpush1.msra.mxu0 %v3268
    %3317 = vmatprep.subr.mxu0 0.0
    %3318 = vmatpush2.msra.mxu0 0.0
    %3319 = vmatprep.subr.mxu0 0.0
    %3320 = vmatpush2.msra.mxu0 0.0
    %3321 = vmatprep.subr.mxu0 0.0
    %3322 = vmatpush2.msra.mxu0 0.0
    %3323 = vmatprep.subr.mxu0 0.0
    %3324 = vmatpush2.msra.mxu0 0.0
    %3325 = vmatprep.subr.mxu0 0.0
    %3326 = vmatpush2.msra.mxu0 0.0
    %3327 = vmatprep.subr.mxu0 0.0
    %3328 = vmatpush2.msra.mxu0 0.0
    %3329 = vmatprep.subr.mxu0 0.0
    %3330 = vmatpush2.msra.mxu0 0.0
    %3331 = vmatprep.subr.mxu0 0.0
    %3332 = vmatpush2.msra.mxu0 0.0
    %3333 = vmatprep.subr.mxu0 0.0
    %3334 = vmatpush2.msra.mxu0 0.0
    %3335 = vmatprep.subr.mxu0 0.0
    %3336 = vmatpush2.msra.mxu0 0.0
    %3337 = vmatprep.subr.mxu0 0.0
    %3338 = vmatpush2.msra.mxu0 0.0
    %3339 = vmatprep.subr.mxu0 0.0
    %3340 = vmatpush2.msra.mxu0 0.0
    %3341 = vmatprep.subr.mxu0 0.0
    %3342 = vmatpush2.msra.mxu0 0.0
    %3343 = vmatprep.subr.mxu0 0.0
    %3344 = vmatpush2.msra.mxu0 0.0
    %3345 = vmatprep.subr.mxu0 0.0
    %3346 = vmatpush2.msra.mxu0 0.0
    %3347 = vmatprep.subr.mxu0 0.0
    %3348 = vmatpush2.msra.mxu0 0.0
    %3349 = vmatprep.mubr.f32.mxu0 0.0
    %3350 = vmatmul.mubr.f32.gmra.mxu0 %v3279
    %v3351 = vpop.f32.mrf.mxu0
    %v3352 = vadd.f32 %v3275, %v3351
    %v3353 = vpop.f32.mrf.mxu0
    %3354 = vdwg.mxu0
    %vm3355 = vcmask 1024
    %3356 = vst.msk [vmem:[%s11] sm:$0x3] %vm3355, %v3352
    // Predicated region
    $region50: #{tpu_custom_call.1} parent=1 // pred_check
      _
    $region51: #{tpu_custom_call.1} parent=1 // pred_check_branch
      %3358 = sbr.rel (0) target = $region53
    $region52: #{tpu_custom_call.1} parent=1 // pred_region
      _
    $region53: #{tpu_custom_call.1} parent=1 // pred_fallthru
      _
    // Predicated region
    $region54: #{tpu_custom_call.1} parent=1 // pred_check
      _
    $region55: #{tpu_custom_call.1} parent=1 // pred_check_branch
      %3360 = sbr.rel (0) target = $region57
    $region56: #{tpu_custom_call.1} parent=1 // pred_region
      _
    $region57: #{tpu_custom_call.1} parent=1 // pred_fallthru
      _
    %3361 = vsyncpa [#allocation7], 1
  %3362 = vsyncmov [#allocation4]
  %s3363 = vpop.sfrf %3362
  %p3364 = scmp.eq.s32.totalorder %s3363, 0
  %p3365 = pneg %p3364
  %3367 = shalt.err (%p3365)
  %s3368 = scalar_lea.sflag [#allocation4], 1
  %3369 = vsyncmov %s3368
  %s3370 = vpop.sfrf %3369
  %p3371 = scmp.eq.s32.totalorder %s3370, 0
  %p3372 = pneg %p3371
  %3374 = shalt.err (%p3372)

</llo_original>
